<compile_context>
chip_gen: v5e
topology: v5e:2x2
jax: 0.10.0
libtpu: 0.0.40
codegen_flags: <defaults>
</compile_context>

<pallas_src>
import functools
import math

import jax
import jax.numpy as jnp
from jax import lax
from jax.experimental import pallas as pl
from jax.experimental.pallas import tpu as pltpu


def _round_up(x, m):
    return ((x + m - 1) // m) * m


def _bytes(shape, dtype):
    return int(math.prod(shape)) * jnp.dtype(dtype).itemsize


def _vmem_limit(est_bytes):
    cap = 128 << 20
    try:
        cap = int(pltpu.get_tpu_info().vmem_capacity_bytes)
    except Exception:
        pass
    limit = int(min(max(int(est_bytes * 1.3), 8 << 20), int(cap * 0.75)))
    limit = min(max(limit, int(est_bytes)), cap)   # never clamp below estimate
    return limit


# ----------------------------------------------------------------------------
# Fused stacked-RNN wavefront kernel (all layers, one chunk of time / grid step)
# ----------------------------------------------------------------------------
def _make_stacked_rnn_kernel(L, Ts, S_tail, needs_mask):
    """Wavefront over (layer, time): wave w runs layer l's step t = w - l."""

    def body(pre0_ref, wcat_ref, whh0_ref, b_ref, out_ref, hid_ref, h_scr):
        # pre0_ref : (Ts, Bp, Hp) bf16  layer-0 pre-activation chunk (x@Wih0^T + b0)
        # wcat_ref : (L-1, 2*Hp, Hp) bf16  vstack(Wih^T, Whh^T) for layers 1..L-1
        # whh0_ref : (Hp, Hp) bf16      Whh^T for layer 0
        # b_ref    : (L-1, 1, Hp) f32   (b_ih + b_hh) for layers 1..L-1
        # out_ref  : (Ts, Bp, Hp) f32   last-layer output chunk
        # hid_ref  : (L, Bp, Hp) f32    final hidden states (resident block)
        # h_scr    : (L, Bp, Hp) f32    per-layer hidden state carried across chunks
        @pl.when(pl.program_id(0) == 0)
        def _():
            h_scr[...] = jnp.zeros_like(h_scr)

        if needs_mask:
            is_last = pl.program_id(0) == pl.num_programs(0) - 1
            n_valid = jnp.where(is_last, S_tail, Ts).astype(jnp.int32)
        else:
            n_valid = None

        def wave(w, active):
            # Snapshot previous-wave hidden states (all reads before any write),
            # so the per-layer matmuls in this wave are independent.
            hp = [h_scr[l] for l in range(L)]
            new = {}
            for l in active:
                t = w - l
                if l == 0:
                    acc = pre0_ref[t].astype(jnp.float32) + jnp.dot(
                        hp[0].astype(jnp.bfloat16), whh0_ref[...],
                        preferred_element_type=jnp.float32)
                else:
                    # Fused input+recurrent projection: K = 2*Hp fills the MXU.
                    xcat = jnp.concatenate([hp[l - 1], hp[l]],
                                           axis=-1).astype(jnp.bfloat16)
                    acc = jnp.dot(xcat, wcat_ref[l - 1],
                                  preferred_element_type=jnp.float32) + b_ref[l - 1]
                h_new = jnp.tanh(acc)
                if needs_mask:
                    h_new = jnp.where(t < n_valid, h_new, hp[l])
                new[l] = h_new
            for l in active:
                h_scr[l] = new[l]
            if (L - 1) in active:
                out_ref[w - (L - 1)] = new[L - 1].astype(out_ref.dtype)

        # Ramp-up: waves 0 .. L-2 (statically unrolled).
        for w in range(L - 1):
            wave(w, list(range(w + 1)))

        # Steady state: waves L-1 .. Ts-1, all layers active.
        steady_len = Ts - (L - 1)
        unroll = True if steady_len <= 8 else 8

        def steady(w, carry):
            wave(w, list(range(L)))
            return carry

        lax.fori_loop(L - 1, Ts, steady, 0, unroll=unroll)

        # Ramp-down: waves Ts .. Ts+L-2 (statically unrolled).
        for w in range(Ts, Ts + L - 1):
            wave(w, list(range(w - Ts + 1, L)))

        # Final hidden states: write only on the last grid step.
        @pl.when(pl.program_id(0) == pl.num_programs(0) - 1)
        def _():
            hid_ref[...] = h_scr[...]

    if L == 1:
        def kernel(pre0_ref, whh0_ref, out_ref, hid_ref, h_scr):
            body(pre0_ref, None, whh0_ref, None, out_ref, hid_ref, h_scr)
        return kernel

    def kernel(pre0_ref, wcat_ref, whh0_ref, b_ref, out_ref, hid_ref, h_scr):
        body(pre0_ref, wcat_ref, whh0_ref, b_ref, out_ref, hid_ref, h_scr)
    return kernel


# ----------------------------------------------------------------------------
# Encoder forward: embedding/table fusion glue + the fused Pallas kernel
# ----------------------------------------------------------------------------
def encoder_forward(params, x_tokens, num_layers, single_buffer_weights=True):
    S, B = x_tokens.shape
    H = params["w_hh_0"].shape[0]
    L = num_layers
    L1 = L - 1

    Bp = _round_up(B, 8)        # sublane-dense batch
    Hp = _round_up(H, 128)      # lane-dense hidden

    # Time chunking: pad S up to a multiple of a fixed chunk; mask the tail.
    n_chunks = pl.cdiv(S, 128)
    Ts = _round_up(pl.cdiv(S, n_chunks), 8)
    Ts = max(Ts, _round_up(L, 8))          # wavefront needs Ts >= L
    S_pad = _round_up(S, Ts)
    G = S_pad // Ts
    S_tail = S - (G - 1) * Ts
    needs_mask = (S_tail != Ts)

    # --- layer-0 fused table: T = E @ Wih0^T + (b_ih0 + b_hh0)  (f32 matmul,
    #     bf16 table -> gather directly produces padded bf16 pre-activations) ---
    w0t = jnp.pad(params["w_ih_0"].T.astype(jnp.float32), ((0, 0), (0, Hp - H)))
    b0 = jnp.pad((params["b_ih_0"] + params["b_hh_0"]).astype(jnp.float32),
                 (0, Hp - H))
    table = (jnp.dot(params["embedding"].astype(jnp.float32), w0t,
                     preferred_element_type=jnp.float32) + b0
             ).astype(jnp.bfloat16)                                    # (V, Hp)
    tok_p = jnp.pad(x_tokens, ((0, S_pad - S), (0, Bp - B)))           # (S_pad, Bp)
    pre0 = jnp.take(table, tok_p, axis=0)                              # (S_pad, Bp, Hp) bf16

    # --- weights: layer-0 Whh^T; layers>=1 fused [Wih^T ; Whh^T] (K = 2*Hp) ---
    whh0 = jnp.zeros((Hp, Hp), jnp.bfloat16).at[:H, :H].set(
        params["w_hh_0"].T.astype(jnp.bfloat16))

    if L > 1:
        wcat_list, b_list = [], []
        for l in range(1, L):
            wcat = jnp.zeros((2 * Hp, Hp), jnp.bfloat16)
            wcat = wcat.at[:H, :H].set(params[f"w_ih_{l}"].T.astype(jnp.bfloat16))
            wcat = wcat.at[Hp:Hp + H, :H].set(
                params[f"w_hh_{l}"].T.astype(jnp.bfloat16))
            wcat_list.append(wcat)
            b_list.append(jnp.zeros((1, Hp), jnp.float32).at[0, :H].set(
                (params[f"b_ih_{l}"] + params[f"b_hh_{l}"]).astype(jnp.float32)))
        wcat_stack = jnp.stack(wcat_list)                              # (L-1, 2*Hp, Hp)
        b_stack = jnp.stack(b_list)                                    # (L-1, 1, Hp)

    # --- VMEM budget (generation-aware limit, never below the estimate) ---
    wbuf = 1 if single_buffer_weights else 2
    est = (
        2 * _bytes((Ts, Bp, Hp), jnp.bfloat16)     # pre0 stream (double-buffered)
        + 2 * _bytes((Ts, Bp, Hp), jnp.float32)    # out stream (double-buffered)
        + wbuf * _bytes((Hp, Hp), jnp.bfloat16)    # whh0
        + 2 * _bytes((L, Bp, Hp), jnp.float32)     # hid (resident) + h_scr
    )
    if L > 1:
        est += wbuf * (_bytes((L1, 2 * Hp, Hp), jnp.bfloat16)
                       + _bytes((L1, 1, Hp), jnp.float32))
    vmem_limit = _vmem_limit(est)

    def const_spec(shape):
        idx = lambda s: (0,) * len(shape)
        if single_buffer_weights:
            return pl.BlockSpec(shape, idx, pipeline_mode=pl.Buffered(1))
        return pl.BlockSpec(shape, idx)

    in_specs = [pl.BlockSpec((Ts, Bp, Hp), lambda s: (s, 0, 0))]
    inputs = [pre0]
    if L > 1:
        in_specs.append(const_spec((L1, 2 * Hp, Hp)))
        inputs.append(wcat_stack)
    in_specs.append(const_spec((Hp, Hp)))
    inputs.append(whh0)
    if L > 1:
        in_specs.append(const_spec((L1, 1, Hp)))
        inputs.append(b_stack)

    grid_spec = pltpu.PrefetchScalarGridSpec(
        num_scalar_prefetch=0,
        grid=(G,),
        in_specs=in_specs,
        out_specs=(
            pl.BlockSpec((Ts, Bp, Hp), lambda s: (s, 0, 0)),
            pl.BlockSpec((L, Bp, Hp), lambda s: (0, 0, 0)),
        ),
        scratch_shapes=[pltpu.VMEM((L, Bp, Hp), jnp.float32)],          # h_scr
    )

    kernel = _make_stacked_rnn_kernel(L, Ts, S_tail, needs_mask)

    out_p, hid_p = pl.pallas_call(
        kernel,
        out_shape=(
            jax.ShapeDtypeStruct((S_pad, Bp, Hp), jnp.float32),
            jax.ShapeDtypeStruct((L, Bp, Hp), jnp.float32),
        ),
        grid_spec=grid_spec,
        compiler_params=pltpu.CompilerParams(
            dimension_semantics=("arbitrary",),   # serial recurrence over time chunks
            vmem_limit_bytes=vmem_limit,
        ),
    )(*inputs)

    output = out_p[:S, :B, :H]          # (S, B, H)
    hidden = hid_p[:, :B, :H]           # (L, B, H)
    return output, hidden


# ----------------------------------------------------------------------------
# Pure-JAX f32 reference (for correctness check only)
# ----------------------------------------------------------------------------
def encoder_reference(params, x_tokens, num_layers):
    embedded = jnp.take(params["embedding"], x_tokens, axis=0)
    layer_in = embedded
    finals = []
    for l in range(num_layers):
        w_ih = params[f"w_ih_{l}"]
        w_hh = params[f"w_hh_{l}"]
        b = params[f"b_ih_{l}"] + params[f"b_hh_{l}"]
        B = layer_in.shape[1]
        H = w_ih.shape[0]

        def step(h_prev, x_t, w_ih=w_ih, w_hh=w_hh, b=b):
            h_t = jnp.tanh(x_t @ w_ih.T + h_prev @ w_hh.T + b)
            return h_t, h_t

        h0 = jnp.zeros((B, H), jnp.float32)
        h_n, out = lax.scan(step, h0, layer_in)
        layer_in = out
        finals.append(h_n)
    return layer_in, jnp.stack(finals, axis=0)


# ----------------------------------------------------------------------------
# Deterministic parameter init (mirrors nn.Embedding N(0,1) and nn.RNN U(-k, k))
# ----------------------------------------------------------------------------
def init_params(key, input_size, embd_size, hidden_size, num_layers):
    params = {}
    key, ke = jax.random.split(key)
    params["embedding"] = jax.random.normal(ke, (input_size, embd_size), jnp.float32)
    k = 1.0 / jnp.sqrt(hidden_size)
    for l in range(num_layers):
        din = embd_size if l == 0 else hidden_size
        key, k1, k2, k3, k4 = jax.random.split(key, 5)
        params[f"w_ih_{l}"] = jax.random.uniform(k1, (hidden_size, din), jnp.float32, -k, k)
        params[f"w_hh_{l}"] = jax.random.uniform(k2, (hidden_size, hidden_size), jnp.float32, -k, k)
        params[f"b_ih_{l}"] = jax.random.uniform(k3, (hidden_size,), jnp.float32, -k, k)
        params[f"b_hh_{l}"] = jax.random.uniform(k4, (hidden_size,), jnp.float32, -k, k)
    return params


if __name__ == "__main__":
    # small shapes consistent with the module's forward
    input_size = 20   # vocab
    embd_size = 16
    hidden_size = 32
    num_layers = 2
    seq_len = 8
    batch = 2

    key = jax.random.PRNGKey(0)
    kp, kx = jax.random.split(key)
    params = init_params(kp, input_size, embd_size, hidden_size, num_layers)
    x = jax.random.randint(kx, (seq_len, batch), 0, input_size, dtype=jnp.int32)

    def run(single_buffer):
        fwd = jax.jit(functools.partial(encoder_forward, num_layers=num_layers,
                                        single_buffer_weights=single_buffer))
        out = fwd(params, x)
        jax.block_until_ready(out)
        return out

    try:
        output, hidden = run(True)
    except Exception:
        # Fallback: default (double-buffered) weight specs.
        output, hidden = run(False)

    ref_out, ref_hid = encoder_reference(params, x, num_layers)
    assert output.shape == (seq_len, batch, hidden_size)
    assert hidden.shape == (num_layers, batch, hidden_size)
    # bf16 streamed pre-activations + bf16 MXU operands -> looser tolerance
    assert jnp.allclose(output, ref_out, atol=5e-2, rtol=5e-2), float(
        jnp.max(jnp.abs(output - ref_out)))
    assert jnp.allclose(hidden, ref_hid, atol=5e-2, rtol=5e-2), float(
        jnp.max(jnp.abs(hidden - ref_hid)))

    print("KERNEL_OK")
</pallas_src>

<mosaic_0001>
module attributes {stable_mosaic.version = 11 : i64} {
  func.func @kernel(%arg0: i32, %arg1: memref<8x8x128xbf16, #tpu.memory_space<vmem>>, %arg2: memref<1x256x128xbf16, #tpu.memory_space<vmem>>, %arg3: memref<128x128xbf16, #tpu.memory_space<vmem>>, %arg4: memref<1x1x128xf32, #tpu.memory_space<vmem>>, %arg5: memref<8x8x128xf32, #tpu.memory_space<vmem>>, %arg6: memref<2x8x128xf32, #tpu.memory_space<vmem>>, %arg7: memref<2x8x128xf32, #tpu.memory_space<vmem>>) attributes {dimension_semantics = [#tpu.dimension_semantics<arbitrary>], iteration_bounds = array<i64: 1>, scalar_prefetch = 0 : i64, scratch_operands = 1 : i64, tpu.core_type = #tpu.core_type<tc>, window_params = [{transform_indices = @transform_0, window_bounds = array<i64: 8, 8, 128>}, {pipeline_mode = #tpu.pipeline_mode<synchronous>, transform_indices = @transform_1, window_bounds = array<i64: 1, 256, 128>}, {pipeline_mode = #tpu.pipeline_mode<synchronous>, transform_indices = @transform_2, window_bounds = array<i64: 128, 128>}, {pipeline_mode = #tpu.pipeline_mode<synchronous>, transform_indices = @transform_3, window_bounds = array<i64: 1, 1, 128>}, {transform_indices = @transform_4, window_bounds = array<i64: 8, 8, 128>}, {pipeline_mode = #tpu.pipeline_mode<synchronous>, transform_indices = @transform_5, window_bounds = array<i64: 2, 8, 128>}]} {
    %c0_i32 = arith.constant 0 : i32
    %0 = arith.cmpi eq, %arg0, %c0_i32 : i32
    %1 = arith.extui %0 : i1 to i32
    %c0_i32_0 = arith.constant 0 : i32
    %2 = arith.cmpi ne, %1, %c0_i32_0 : i32
    scf.if %2 {
      %cst_227 = arith.constant 0.000000e+00 : f32
      %284 = vector.broadcast %cst_227 : f32 to vector<2x8x128xf32>
      %c0_228 = arith.constant 0 : index
      %c0_229 = arith.constant 0 : index
      %c0_230 = arith.constant 0 : index
      %285 = vector.load %arg7[%c0_228, %c0_229, %c0_230] : memref<2x8x128xf32, #tpu.memory_space<vmem>>, vector<2x8x128xf32>
      tpu.vector_store %arg7[%c0_228, %c0_229, %c0_230], %284 {strides = array<i32>} : memref<2x8x128xf32, #tpu.memory_space<vmem>>, vector<2x8x128xf32>,
    } else {
    }
    %c0 = arith.constant 0 : index
    %c0_1 = arith.constant 0 : index
    %c0_2 = arith.constant 0 : index
    %3 = vector.load %arg7[%c0, %c0_1, %c0_2] : memref<2x8x128xf32, #tpu.memory_space<vmem>>, vector<1x8x128xf32>
    %4 = vector.shape_cast %3 : vector<1x8x128xf32> to vector<8x128xf32>
    %c0_3 = arith.constant 0 : index
    %c0_4 = arith.constant 0 : index
    %c0_5 = arith.constant 0 : index
    %5 = vector.load %arg1[%c0_3, %c0_4, %c0_5] : memref<8x8x128xbf16, #tpu.memory_space<vmem>>, vector<1x8x128xbf16>
    %6 = vector.shape_cast %5 : vector<1x8x128xbf16> to vector<8x128xbf16>
    %7 = arith.extf %6 : vector<8x128xbf16> to vector<8x128xf32>
    %8 = arith.truncf %4 : vector<8x128xf32> to vector<8x128xbf16>
    %c0_6 = arith.constant 0 : index
    %c0_7 = arith.constant 0 : index
    %9 = vector.load %arg3[%c0_6, %c0_7] : memref<128x128xbf16, #tpu.memory_space<vmem>>, vector<128x128xbf16>
    %cst = arith.constant dense<0.000000e+00> : vector<8x128xf32>
    %10 = tpu.matmul %8, %9, %cst {dimension_numbers = #tpu.dot_dimension_numbers<[1], [0], [0], [1], [0, 0, 1, 1], [], []>} : vector<8x128xbf16>, vector<128x128xbf16>, vector<8x128xf32> -> vector<8x128xf32>
    %11 = arith.addf %7, %10 : vector<8x128xf32>
    %12 = math.tanh %11 : vector<8x128xf32>
    %c0_8 = arith.constant 0 : index
    %c0_9 = arith.constant 0 : index
    %c0_10 = arith.constant 0 : index
    %13 = vector.load %arg7[%c0_8, %c0_9, %c0_10] : memref<2x8x128xf32, #tpu.memory_space<vmem>>, vector<1x8x128xf32>
    %14 = vector.shape_cast %13 : vector<1x8x128xf32> to vector<8x128xf32>
    %15 = vector.shape_cast %12 : vector<8x128xf32> to vector<1x8x128xf32>
    tpu.vector_store %arg7[%c0_8, %c0_9, %c0_10], %15 {strides = array<i32>} : memref<2x8x128xf32, #tpu.memory_space<vmem>>, vector<1x8x128xf32>,
    %c1_i32 = arith.constant 1 : i32
    %c0_11 = arith.constant 0 : index
    %c0_12 = arith.constant 0 : index
    %c0_13 = arith.constant 0 : index
    %16 = vector.load %arg7[%c0_11, %c0_12, %c0_13] : memref<2x8x128xf32, #tpu.memory_space<vmem>>, vector<1x8x128xf32>
    %17 = vector.shape_cast %16 : vector<1x8x128xf32> to vector<8x128xf32>
    %c1 = arith.constant 1 : index
    %c0_14 = arith.constant 0 : index
    %c0_15 = arith.constant 0 : index
    %18 = vector.load %arg7[%c1, %c0_14, %c0_15] : memref<2x8x128xf32, #tpu.memory_space<vmem>>, vector<1x8x128xf32>
    %19 = vector.shape_cast %18 : vector<1x8x128xf32> to vector<8x128xf32>
    %c0_i32_16 = arith.constant 0 : i32
    %20 = arith.subi %c1_i32, %c0_i32_16 : i32
    %21 = arith.index_cast %20 : i32 to index
    %c0_17 = arith.constant 0 : index
    %c0_18 = arith.constant 0 : index
    %22 = vector.load %arg1[%21, %c0_17, %c0_18] : memref<8x8x128xbf16, #tpu.memory_space<vmem>>, vector<1x8x128xbf16>
    %23 = vector.shape_cast %22 : vector<1x8x128xbf16> to vector<8x128xbf16>
    %24 = arith.extf %23 : vector<8x128xbf16> to vector<8x128xf32>
    %25 = arith.truncf %17 : vector<8x128xf32> to vector<8x128xbf16>
    %c0_19 = arith.constant 0 : index
    %c0_20 = arith.constant 0 : index
    %26 = vector.load %arg3[%c0_19, %c0_20] : memref<128x128xbf16, #tpu.memory_space<vmem>>, vector<128x128xbf16>
    %cst_21 = arith.constant dense<0.000000e+00> : vector<8x128xf32>
    %27 = tpu.matmul %25, %26, %cst_21 {dimension_numbers = #tpu.dot_dimension_numbers<[1], [0], [0], [1], [0, 0, 1, 1], [], []>} : vector<8x128xbf16>, vector<128x128xbf16>, vector<8x128xf32> -> vector<8x128xf32>
    %28 = arith.addf %24, %27 : vector<8x128xf32>
    %29 = math.tanh %28 : vector<8x128xf32>
    %30 = tpu.concatenate %17, %19 in 1 : vector<8x128xf32>, vector<8x128xf32> -> vector<8x256xf32>
    %31 = arith.truncf %30 : vector<8x256xf32> to vector<8x256xbf16>
    %c0_22 = arith.constant 0 : index
    %c0_23 = arith.constant 0 : index
    %c0_24 = arith.constant 0 : index
    %32 = vector.load %arg2[%c0_22, %c0_23, %c0_24] : memref<1x256x128xbf16, #tpu.memory_space<vmem>>, vector<1x256x128xbf16>
    %33 = vector.shape_cast %32 : vector<1x256x128xbf16> to vector<256x128xbf16>
    %cst_25 = arith.constant dense<0.000000e+00> : vector<8x128xf32>
    %34 = tpu.matmul %31, %33, %cst_25 {dimension_numbers = #tpu.dot_dimension_numbers<[1], [0], [0], [1], [0, 0, 1, 1], [], []>} : vector<8x256xbf16>, vector<256x128xbf16>, vector<8x128xf32> -> vector<8x128xf32>
    %c0_26 = arith.constant 0 : index
    %c0_27 = arith.constant 0 : index
    %c0_28 = arith.constant 0 : index
    %35 = vector.load %arg4[%c0_26, %c0_27, %c0_28] : memref<1x1x128xf32, #tpu.memory_space<vmem>>, vector<1x1x128xf32>
    %36 = vector.shape_cast %35 : vector<1x1x128xf32> to vector<1x128xf32>
    %37 = vector.broadcast %36 : vector<1x128xf32> to vector<8x128xf32>
    %38 = arith.addf %34, %37 : vector<8x128xf32>
    %39 = math.tanh %38 : vector<8x128xf32>
    %c0_29 = arith.constant 0 : index
    %c0_30 = arith.constant 0 : index
    %c0_31 = arith.constant 0 : index
    %40 = vector.load %arg7[%c0_29, %c0_30, %c0_31] : memref<2x8x128xf32, #tpu.memory_space<vmem>>, vector<1x8x128xf32>
    %41 = vector.shape_cast %40 : vector<1x8x128xf32> to vector<8x128xf32>
    %42 = vector.shape_cast %29 : vector<8x128xf32> to vector<1x8x128xf32>
    tpu.vector_store %arg7[%c0_29, %c0_30, %c0_31], %42 {strides = array<i32>} : memref<2x8x128xf32, #tpu.memory_space<vmem>>, vector<1x8x128xf32>,
    %c1_32 = arith.constant 1 : index
    %c0_33 = arith.constant 0 : index
    %c0_34 = arith.constant 0 : index
    %43 = vector.load %arg7[%c1_32, %c0_33, %c0_34] : memref<2x8x128xf32, #tpu.memory_space<vmem>>, vector<1x8x128xf32>
    %44 = vector.shape_cast %43 : vector<1x8x128xf32> to vector<8x128xf32>
    %45 = vector.shape_cast %39 : vector<8x128xf32> to vector<1x8x128xf32>
    tpu.vector_store %arg7[%c1_32, %c0_33, %c0_34], %45 {strides = array<i32>} : memref<2x8x128xf32, #tpu.memory_space<vmem>>, vector<1x8x128xf32>,
    %c1_i32_35 = arith.constant 1 : i32
    %46 = arith.subi %c1_i32, %c1_i32_35 : i32
    %47 = arith.index_cast %46 : i32 to index
    %c0_36 = arith.constant 0 : index
    %c0_37 = arith.constant 0 : index
    %48 = vector.load %arg5[%47, %c0_36, %c0_37] : memref<8x8x128xf32, #tpu.memory_space<vmem>>, vector<1x8x128xf32>
    %49 = vector.shape_cast %48 : vector<1x8x128xf32> to vector<8x128xf32>
    %50 = vector.shape_cast %39 : vector<8x128xf32> to vector<1x8x128xf32>
    tpu.vector_store %arg5[%47, %c0_36, %c0_37], %50 {strides = array<i32>} : memref<8x8x128xf32, #tpu.memory_space<vmem>>, vector<1x8x128xf32>,
    %c2_i32 = arith.constant 2 : i32
    %c0_38 = arith.constant 0 : index
    %c0_39 = arith.constant 0 : index
    %c0_40 = arith.constant 0 : index
    %51 = vector.load %arg7[%c0_38, %c0_39, %c0_40] : memref<2x8x128xf32, #tpu.memory_space<vmem>>, vector<1x8x128xf32>
    %52 = vector.shape_cast %51 : vector<1x8x128xf32> to vector<8x128xf32>
    %c1_41 = arith.constant 1 : index
    %c0_42 = arith.constant 0 : index
    %c0_43 = arith.constant 0 : index
    %53 = vector.load %arg7[%c1_41, %c0_42, %c0_43] : memref<2x8x128xf32, #tpu.memory_space<vmem>>, vector<1x8x128xf32>
    %54 = vector.shape_cast %53 : vector<1x8x128xf32> to vector<8x128xf32>
    %c0_i32_44 = arith.constant 0 : i32
    %55 = arith.subi %c2_i32, %c0_i32_44 : i32
    %56 = arith.index_cast %55 : i32 to index
    %c0_45 = arith.constant 0 : index
    %c0_46 = arith.constant 0 : index
    %57 = vector.load %arg1[%56, %c0_45, %c0_46] : memref<8x8x128xbf16, #tpu.memory_space<vmem>>, vector<1x8x128xbf16>
    %58 = vector.shape_cast %57 : vector<1x8x128xbf16> to vector<8x128xbf16>
    %59 = arith.extf %58 : vector<8x128xbf16> to vector<8x128xf32>
    %60 = arith.truncf %52 : vector<8x128xf32> to vector<8x128xbf16>
    %c0_47 = arith.constant 0 : index
    %c0_48 = arith.constant 0 : index
    %61 = vector.load %arg3[%c0_47, %c0_48] : memref<128x128xbf16, #tpu.memory_space<vmem>>, vector<128x128xbf16>
    %cst_49 = arith.constant dense<0.000000e+00> : vector<8x128xf32>
    %62 = tpu.matmul %60, %61, %cst_49 {dimension_numbers = #tpu.dot_dimension_numbers<[1], [0], [0], [1], [0, 0, 1, 1], [], []>} : vector<8x128xbf16>, vector<128x128xbf16>, vector<8x128xf32> -> vector<8x128xf32>
    %63 = arith.addf %59, %62 : vector<8x128xf32>
    %64 = math.tanh %63 : vector<8x128xf32>
    %65 = tpu.concatenate %52, %54 in 1 : vector<8x128xf32>, vector<8x128xf32> -> vector<8x256xf32>
    %66 = arith.truncf %65 : vector<8x256xf32> to vector<8x256xbf16>
    %c0_50 = arith.constant 0 : index
    %c0_51 = arith.constant 0 : index
    %c0_52 = arith.constant 0 : index
    %67 = vector.load %arg2[%c0_50, %c0_51, %c0_52] : memref<1x256x128xbf16, #tpu.memory_space<vmem>>, vector<1x256x128xbf16>
    %68 = vector.shape_cast %67 : vector<1x256x128xbf16> to vector<256x128xbf16>
    %cst_53 = arith.constant dense<0.000000e+00> : vector<8x128xf32>
    %69 = tpu.matmul %66, %68, %cst_53 {dimension_numbers = #tpu.dot_dimension_numbers<[1], [0], [0], [1], [0, 0, 1, 1], [], []>} : vector<8x256xbf16>, vector<256x128xbf16>, vector<8x128xf32> -> vector<8x128xf32>
    %c0_54 = arith.constant 0 : index
    %c0_55 = arith.constant 0 : index
    %c0_56 = arith.constant 0 : index
    %70 = vector.load %arg4[%c0_54, %c0_55, %c0_56] : memref<1x1x128xf32, #tpu.memory_space<vmem>>, vector<1x1x128xf32>
    %71 = vector.shape_cast %70 : vector<1x1x128xf32> to vector<1x128xf32>
    %72 = vector.broadcast %71 : vector<1x128xf32> to vector<8x128xf32>
    %73 = arith.addf %69, %72 : vector<8x128xf32>
    %74 = math.tanh %73 : vector<8x128xf32>
    %c0_57 = arith.constant 0 : index
    %c0_58 = arith.constant 0 : index
    %c0_59 = arith.constant 0 : index
    %75 = vector.load %arg7[%c0_57, %c0_58, %c0_59] : memref<2x8x128xf32, #tpu.memory_space<vmem>>, vector<1x8x128xf32>
    %76 = vector.shape_cast %75 : vector<1x8x128xf32> to vector<8x128xf32>
    %77 = vector.shape_cast %64 : vector<8x128xf32> to vector<1x8x128xf32>
    tpu.vector_store %arg7[%c0_57, %c0_58, %c0_59], %77 {strides = array<i32>} : memref<2x8x128xf32, #tpu.memory_space<vmem>>, vector<1x8x128xf32>,
    %c1_60 = arith.constant 1 : index
    %c0_61 = arith.constant 0 : index
    %c0_62 = arith.constant 0 : index
    %78 = vector.load %arg7[%c1_60, %c0_61, %c0_62] : memref<2x8x128xf32, #tpu.memory_space<vmem>>, vector<1x8x128xf32>
    %79 = vector.shape_cast %78 : vector<1x8x128xf32> to vector<8x128xf32>
    %80 = vector.shape_cast %74 : vector<8x128xf32> to vector<1x8x128xf32>
    tpu.vector_store %arg7[%c1_60, %c0_61, %c0_62], %80 {strides = array<i32>} : memref<2x8x128xf32, #tpu.memory_space<vmem>>, vector<1x8x128xf32>,
    %c1_i32_63 = arith.constant 1 : i32
    %81 = arith.subi %c2_i32, %c1_i32_63 : i32
    %82 = arith.index_cast %81 : i32 to index
    %c0_64 = arith.constant 0 : index
    %c0_65 = arith.constant 0 : index
    %83 = vector.load %arg5[%82, %c0_64, %c0_65] : memref<8x8x128xf32, #tpu.memory_space<vmem>>, vector<1x8x128xf32>
    %84 = vector.shape_cast %83 : vector<1x8x128xf32> to vector<8x128xf32>
    %85 = vector.shape_cast %74 : vector<8x128xf32> to vector<1x8x128xf32>
    tpu.vector_store %arg5[%82, %c0_64, %c0_65], %85 {strides = array<i32>} : memref<8x8x128xf32, #tpu.memory_space<vmem>>, vector<1x8x128xf32>,
    %c3_i32 = arith.constant 3 : i32
    %c0_66 = arith.constant 0 : index
    %c0_67 = arith.constant 0 : index
    %c0_68 = arith.constant 0 : index
    %86 = vector.load %arg7[%c0_66, %c0_67, %c0_68] : memref<2x8x128xf32, #tpu.memory_space<vmem>>, vector<1x8x128xf32>
    %87 = vector.shape_cast %86 : vector<1x8x128xf32> to vector<8x128xf32>
    %c1_69 = arith.constant 1 : index
    %c0_70 = arith.constant 0 : index
    %c0_71 = arith.constant 0 : index
    %88 = vector.load %arg7[%c1_69, %c0_70, %c0_71] : memref<2x8x128xf32, #tpu.memory_space<vmem>>, vector<1x8x128xf32>
    %89 = vector.shape_cast %88 : vector<1x8x128xf32> to vector<8x128xf32>
    %c0_i32_72 = arith.constant 0 : i32
    %90 = arith.subi %c3_i32, %c0_i32_72 : i32
    %91 = arith.index_cast %90 : i32 to index
    %c0_73 = arith.constant 0 : index
    %c0_74 = arith.constant 0 : index
    %92 = vector.load %arg1[%91, %c0_73, %c0_74] : memref<8x8x128xbf16, #tpu.memory_space<vmem>>, vector<1x8x128xbf16>
    %93 = vector.shape_cast %92 : vector<1x8x128xbf16> to vector<8x128xbf16>
    %94 = arith.extf %93 : vector<8x128xbf16> to vector<8x128xf32>
    %95 = arith.truncf %87 : vector<8x128xf32> to vector<8x128xbf16>
    %c0_75 = arith.constant 0 : index
    %c0_76 = arith.constant 0 : index
    %96 = vector.load %arg3[%c0_75, %c0_76] : memref<128x128xbf16, #tpu.memory_space<vmem>>, vector<128x128xbf16>
    %cst_77 = arith.constant dense<0.000000e+00> : vector<8x128xf32>
    %97 = tpu.matmul %95, %96, %cst_77 {dimension_numbers = #tpu.dot_dimension_numbers<[1], [0], [0], [1], [0, 0, 1, 1], [], []>} : vector<8x128xbf16>, vector<128x128xbf16>, vector<8x128xf32> -> vector<8x128xf32>
    %98 = arith.addf %94, %97 : vector<8x128xf32>
    %99 = math.tanh %98 : vector<8x128xf32>
    %100 = tpu.concatenate %87, %89 in 1 : vector<8x128xf32>, vector<8x128xf32> -> vector<8x256xf32>
    %101 = arith.truncf %100 : vector<8x256xf32> to vector<8x256xbf16>
    %c0_78 = arith.constant 0 : index
    %c0_79 = arith.constant 0 : index
    %c0_80 = arith.constant 0 : index
    %102 = vector.load %arg2[%c0_78, %c0_79, %c0_80] : memref<1x256x128xbf16, #tpu.memory_space<vmem>>, vector<1x256x128xbf16>
    %103 = vector.shape_cast %102 : vector<1x256x128xbf16> to vector<256x128xbf16>
    %cst_81 = arith.constant dense<0.000000e+00> : vector<8x128xf32>
    %104 = tpu.matmul %101, %103, %cst_81 {dimension_numbers = #tpu.dot_dimension_numbers<[1], [0], [0], [1], [0, 0, 1, 1], [], []>} : vector<8x256xbf16>, vector<256x128xbf16>, vector<8x128xf32> -> vector<8x128xf32>
    %c0_82 = arith.constant 0 : index
    %c0_83 = arith.constant 0 : index
    %c0_84 = arith.constant 0 : index
    %105 = vector.load %arg4[%c0_82, %c0_83, %c0_84] : memref<1x1x128xf32, #tpu.memory_space<vmem>>, vector<1x1x128xf32>
    %106 = vector.shape_cast %105 : vector<1x1x128xf32> to vector<1x128xf32>
    %107 = vector.broadcast %106 : vector<1x128xf32> to vector<8x128xf32>
    %108 = arith.addf %104, %107 : vector<8x128xf32>
    %109 = math.tanh %108 : vector<8x128xf32>
    %c0_85 = arith.constant 0 : index
    %c0_86 = arith.constant 0 : index
    %c0_87 = arith.constant 0 : index
    %110 = vector.load %arg7[%c0_85, %c0_86, %c0_87] : memref<2x8x128xf32, #tpu.memory_space<vmem>>, vector<1x8x128xf32>
    %111 = vector.shape_cast %110 : vector<1x8x128xf32> to vector<8x128xf32>
    %112 = vector.shape_cast %99 : vector<8x128xf32> to vector<1x8x128xf32>
    tpu.vector_store %arg7[%c0_85, %c0_86, %c0_87], %112 {strides = array<i32>} : memref<2x8x128xf32, #tpu.memory_space<vmem>>, vector<1x8x128xf32>,
    %c1_88 = arith.constant 1 : index
    %c0_89 = arith.constant 0 : index
    %c0_90 = arith.constant 0 : index
    %113 = vector.load %arg7[%c1_88, %c0_89, %c0_90] : memref<2x8x128xf32, #tpu.memory_space<vmem>>, vector<1x8x128xf32>
    %114 = vector.shape_cast %113 : vector<1x8x128xf32> to vector<8x128xf32>
    %115 = vector.shape_cast %109 : vector<8x128xf32> to vector<1x8x128xf32>
    tpu.vector_store %arg7[%c1_88, %c0_89, %c0_90], %115 {strides = array<i32>} : memref<2x8x128xf32, #tpu.memory_space<vmem>>, vector<1x8x128xf32>,
    %c1_i32_91 = arith.constant 1 : i32
    %116 = arith.subi %c3_i32, %c1_i32_91 : i32
    %117 = arith.index_cast %116 : i32 to index
    %c0_92 = arith.constant 0 : index
    %c0_93 = arith.constant 0 : index
    %118 = vector.load %arg5[%117, %c0_92, %c0_93] : memref<8x8x128xf32, #tpu.memory_space<vmem>>, vector<1x8x128xf32>
    %119 = vector.shape_cast %118 : vector<1x8x128xf32> to vector<8x128xf32>
    %120 = vector.shape_cast %109 : vector<8x128xf32> to vector<1x8x128xf32>
    tpu.vector_store %arg5[%117, %c0_92, %c0_93], %120 {strides = array<i32>} : memref<8x8x128xf32, #tpu.memory_space<vmem>>, vector<1x8x128xf32>,
    %c4_i32 = arith.constant 4 : i32
    %c0_94 = arith.constant 0 : index
    %c0_95 = arith.constant 0 : index
    %c0_96 = arith.constant 0 : index
    %121 = vector.load %arg7[%c0_94, %c0_95, %c0_96] : memref<2x8x128xf32, #tpu.memory_space<vmem>>, vector<1x8x128xf32>
    %122 = vector.shape_cast %121 : vector<1x8x128xf32> to vector<8x128xf32>
    %c1_97 = arith.constant 1 : index
    %c0_98 = arith.constant 0 : index
    %c0_99 = arith.constant 0 : index
    %123 = vector.load %arg7[%c1_97, %c0_98, %c0_99] : memref<2x8x128xf32, #tpu.memory_space<vmem>>, vector<1x8x128xf32>
    %124 = vector.shape_cast %123 : vector<1x8x128xf32> to vector<8x128xf32>
    %c0_i32_100 = arith.constant 0 : i32
    %125 = arith.subi %c4_i32, %c0_i32_100 : i32
    %126 = arith.index_cast %125 : i32 to index
    %c0_101 = arith.constant 0 : index
    %c0_102 = arith.constant 0 : index
    %127 = vector.load %arg1[%126, %c0_101, %c0_102] : memref<8x8x128xbf16, #tpu.memory_space<vmem>>, vector<1x8x128xbf16>
    %128 = vector.shape_cast %127 : vector<1x8x128xbf16> to vector<8x128xbf16>
    %129 = arith.extf %128 : vector<8x128xbf16> to vector<8x128xf32>
    %130 = arith.truncf %122 : vector<8x128xf32> to vector<8x128xbf16>
    %c0_103 = arith.constant 0 : index
    %c0_104 = arith.constant 0 : index
    %131 = vector.load %arg3[%c0_103, %c0_104] : memref<128x128xbf16, #tpu.memory_space<vmem>>, vector<128x128xbf16>
    %cst_105 = arith.constant dense<0.000000e+00> : vector<8x128xf32>
    %132 = tpu.matmul %130, %131, %cst_105 {dimension_numbers = #tpu.dot_dimension_numbers<[1], [0], [0], [1], [0, 0, 1, 1], [], []>} : vector<8x128xbf16>, vector<128x128xbf16>, vector<8x128xf32> -> vector<8x128xf32>
    %133 = arith.addf %129, %132 : vector<8x128xf32>
    %134 = math.tanh %133 : vector<8x128xf32>
    %135 = tpu.concatenate %122, %124 in 1 : vector<8x128xf32>, vector<8x128xf32> -> vector<8x256xf32>
    %136 = arith.truncf %135 : vector<8x256xf32> to vector<8x256xbf16>
    %c0_106 = arith.constant 0 : index
    %c0_107 = arith.constant 0 : index
    %c0_108 = arith.constant 0 : index
    %137 = vector.load %arg2[%c0_106, %c0_107, %c0_108] : memref<1x256x128xbf16, #tpu.memory_space<vmem>>, vector<1x256x128xbf16>
    %138 = vector.shape_cast %137 : vector<1x256x128xbf16> to vector<256x128xbf16>
    %cst_109 = arith.constant dense<0.000000e+00> : vector<8x128xf32>
    %139 = tpu.matmul %136, %138, %cst_109 {dimension_numbers = #tpu.dot_dimension_numbers<[1], [0], [0], [1], [0, 0, 1, 1], [], []>} : vector<8x256xbf16>, vector<256x128xbf16>, vector<8x128xf32> -> vector<8x128xf32>
    %c0_110 = arith.constant 0 : index
    %c0_111 = arith.constant 0 : index
    %c0_112 = arith.constant 0 : index
    %140 = vector.load %arg4[%c0_110, %c0_111, %c0_112] : memref<1x1x128xf32, #tpu.memory_space<vmem>>, vector<1x1x128xf32>
    %141 = vector.shape_cast %140 : vector<1x1x128xf32> to vector<1x128xf32>
    %142 = vector.broadcast %141 : vector<1x128xf32> to vector<8x128xf32>
    %143 = arith.addf %139, %142 : vector<8x128xf32>
    %144 = math.tanh %143 : vector<8x128xf32>
    %c0_113 = arith.constant 0 : index
    %c0_114 = arith.constant 0 : index
    %c0_115 = arith.constant 0 : index
    %145 = vector.load %arg7[%c0_113, %c0_114, %c0_115] : memref<2x8x128xf32, #tpu.memory_space<vmem>>, vector<1x8x128xf32>
    %146 = vector.shape_cast %145 : vector<1x8x128xf32> to vector<8x128xf32>
    %147 = vector.shape_cast %134 : vector<8x128xf32> to vector<1x8x128xf32>
    tpu.vector_store %arg7[%c0_113, %c0_114, %c0_115], %147 {strides = array<i32>} : memref<2x8x128xf32, #tpu.memory_space<vmem>>, vector<1x8x128xf32>,
    %c1_116 = arith.constant 1 : index
    %c0_117 = arith.constant 0 : index
    %c0_118 = arith.constant 0 : index
    %148 = vector.load %arg7[%c1_116, %c0_117, %c0_118] : memref<2x8x128xf32, #tpu.memory_space<vmem>>, vector<1x8x128xf32>
    %149 = vector.shape_cast %148 : vector<1x8x128xf32> to vector<8x128xf32>
    %150 = vector.shape_cast %144 : vector<8x128xf32> to vector<1x8x128xf32>
    tpu.vector_store %arg7[%c1_116, %c0_117, %c0_118], %150 {strides = array<i32>} : memref<2x8x128xf32, #tpu.memory_space<vmem>>, vector<1x8x128xf32>,
    %c1_i32_119 = arith.constant 1 : i32
    %151 = arith.subi %c4_i32, %c1_i32_119 : i32
    %152 = arith.index_cast %151 : i32 to index
    %c0_120 = arith.constant 0 : index
    %c0_121 = arith.constant 0 : index
    %153 = vector.load %arg5[%152, %c0_120, %c0_121] : memref<8x8x128xf32, #tpu.memory_space<vmem>>, vector<1x8x128xf32>
    %154 = vector.shape_cast %153 : vector<1x8x128xf32> to vector<8x128xf32>
    %155 = vector.shape_cast %144 : vector<8x128xf32> to vector<1x8x128xf32>
    tpu.vector_store %arg5[%152, %c0_120, %c0_121], %155 {strides = array<i32>} : memref<8x8x128xf32, #tpu.memory_space<vmem>>, vector<1x8x128xf32>,
    %c5_i32 = arith.constant 5 : i32
    %c0_122 = arith.constant 0 : index
    %c0_123 = arith.constant 0 : index
    %c0_124 = arith.constant 0 : index
    %156 = vector.load %arg7[%c0_122, %c0_123, %c0_124] : memref<2x8x128xf32, #tpu.memory_space<vmem>>, vector<1x8x128xf32>
    %157 = vector.shape_cast %156 : vector<1x8x128xf32> to vector<8x128xf32>
    %c1_125 = arith.constant 1 : index
    %c0_126 = arith.constant 0 : index
    %c0_127 = arith.constant 0 : index
    %158 = vector.load %arg7[%c1_125, %c0_126, %c0_127] : memref<2x8x128xf32, #tpu.memory_space<vmem>>, vector<1x8x128xf32>
    %159 = vector.shape_cast %158 : vector<1x8x128xf32> to vector<8x128xf32>
    %c0_i32_128 = arith.constant 0 : i32
    %160 = arith.subi %c5_i32, %c0_i32_128 : i32
    %161 = arith.index_cast %160 : i32 to index
    %c0_129 = arith.constant 0 : index
    %c0_130 = arith.constant 0 : index
    %162 = vector.load %arg1[%161, %c0_129, %c0_130] : memref<8x8x128xbf16, #tpu.memory_space<vmem>>, vector<1x8x128xbf16>
    %163 = vector.shape_cast %162 : vector<1x8x128xbf16> to vector<8x128xbf16>
    %164 = arith.extf %163 : vector<8x128xbf16> to vector<8x128xf32>
    %165 = arith.truncf %157 : vector<8x128xf32> to vector<8x128xbf16>
    %c0_131 = arith.constant 0 : index
    %c0_132 = arith.constant 0 : index
    %166 = vector.load %arg3[%c0_131, %c0_132] : memref<128x128xbf16, #tpu.memory_space<vmem>>, vector<128x128xbf16>
    %cst_133 = arith.constant dense<0.000000e+00> : vector<8x128xf32>
    %167 = tpu.matmul %165, %166, %cst_133 {dimension_numbers = #tpu.dot_dimension_numbers<[1], [0], [0], [1], [0, 0, 1, 1], [], []>} : vector<8x128xbf16>, vector<128x128xbf16>, vector<8x128xf32> -> vector<8x128xf32>
    %168 = arith.addf %164, %167 : vector<8x128xf32>
    %169 = math.tanh %168 : vector<8x128xf32>
    %170 = tpu.concatenate %157, %159 in 1 : vector<8x128xf32>, vector<8x128xf32> -> vector<8x256xf32>
    %171 = arith.truncf %170 : vector<8x256xf32> to vector<8x256xbf16>
    %c0_134 = arith.constant 0 : index
    %c0_135 = arith.constant 0 : index
    %c0_136 = arith.constant 0 : index
    %172 = vector.load %arg2[%c0_134, %c0_135, %c0_136] : memref<1x256x128xbf16, #tpu.memory_space<vmem>>, vector<1x256x128xbf16>
    %173 = vector.shape_cast %172 : vector<1x256x128xbf16> to vector<256x128xbf16>
    %cst_137 = arith.constant dense<0.000000e+00> : vector<8x128xf32>
    %174 = tpu.matmul %171, %173, %cst_137 {dimension_numbers = #tpu.dot_dimension_numbers<[1], [0], [0], [1], [0, 0, 1, 1], [], []>} : vector<8x256xbf16>, vector<256x128xbf16>, vector<8x128xf32> -> vector<8x128xf32>
    %c0_138 = arith.constant 0 : index
    %c0_139 = arith.constant 0 : index
    %c0_140 = arith.constant 0 : index
    %175 = vector.load %arg4[%c0_138, %c0_139, %c0_140] : memref<1x1x128xf32, #tpu.memory_space<vmem>>, vector<1x1x128xf32>
    %176 = vector.shape_cast %175 : vector<1x1x128xf32> to vector<1x128xf32>
    %177 = vector.broadcast %176 : vector<1x128xf32> to vector<8x128xf32>
    %178 = arith.addf %174, %177 : vector<8x128xf32>
    %179 = math.tanh %178 : vector<8x128xf32>
    %c0_141 = arith.constant 0 : index
    %c0_142 = arith.constant 0 : index
    %c0_143 = arith.constant 0 : index
    %180 = vector.load %arg7[%c0_141, %c0_142, %c0_143] : memref<2x8x128xf32, #tpu.memory_space<vmem>>, vector<1x8x128xf32>
    %181 = vector.shape_cast %180 : vector<1x8x128xf32> to vector<8x128xf32>
    %182 = vector.shape_cast %169 : vector<8x128xf32> to vector<1x8x128xf32>
    tpu.vector_store %arg7[%c0_141, %c0_142, %c0_143], %182 {strides = array<i32>} : memref<2x8x128xf32, #tpu.memory_space<vmem>>, vector<1x8x128xf32>,
    %c1_144 = arith.constant 1 : index
    %c0_145 = arith.constant 0 : index
    %c0_146 = arith.constant 0 : index
    %183 = vector.load %arg7[%c1_144, %c0_145, %c0_146] : memref<2x8x128xf32, #tpu.memory_space<vmem>>, vector<1x8x128xf32>
    %184 = vector.shape_cast %183 : vector<1x8x128xf32> to vector<8x128xf32>
    %185 = vector.shape_cast %179 : vector<8x128xf32> to vector<1x8x128xf32>
    tpu.vector_store %arg7[%c1_144, %c0_145, %c0_146], %185 {strides = array<i32>} : memref<2x8x128xf32, #tpu.memory_space<vmem>>, vector<1x8x128xf32>,
    %c1_i32_147 = arith.constant 1 : i32
    %186 = arith.subi %c5_i32, %c1_i32_147 : i32
    %187 = arith.index_cast %186 : i32 to index
    %c0_148 = arith.constant 0 : index
    %c0_149 = arith.constant 0 : index
    %188 = vector.load %arg5[%187, %c0_148, %c0_149] : memref<8x8x128xf32, #tpu.memory_space<vmem>>, vector<1x8x128xf32>
    %189 = vector.shape_cast %188 : vector<1x8x128xf32> to vector<8x128xf32>
    %190 = vector.shape_cast %179 : vector<8x128xf32> to vector<1x8x128xf32>
    tpu.vector_store %arg5[%187, %c0_148, %c0_149], %190 {strides = array<i32>} : memref<8x8x128xf32, #tpu.memory_space<vmem>>, vector<1x8x128xf32>,
    %c6_i32 = arith.constant 6 : i32
    %c0_150 = arith.constant 0 : index
    %c0_151 = arith.constant 0 : index
    %c0_152 = arith.constant 0 : index
    %191 = vector.load %arg7[%c0_150, %c0_151, %c0_152] : memref<2x8x128xf32, #tpu.memory_space<vmem>>, vector<1x8x128xf32>
    %192 = vector.shape_cast %191 : vector<1x8x128xf32> to vector<8x128xf32>
    %c1_153 = arith.constant 1 : index
    %c0_154 = arith.constant 0 : index
    %c0_155 = arith.constant 0 : index
    %193 = vector.load %arg7[%c1_153, %c0_154, %c0_155] : memref<2x8x128xf32, #tpu.memory_space<vmem>>, vector<1x8x128xf32>
    %194 = vector.shape_cast %193 : vector<1x8x128xf32> to vector<8x128xf32>
    %c0_i32_156 = arith.constant 0 : i32
    %195 = arith.subi %c6_i32, %c0_i32_156 : i32
    %196 = arith.index_cast %195 : i32 to index
    %c0_157 = arith.constant 0 : index
    %c0_158 = arith.constant 0 : index
    %197 = vector.load %arg1[%196, %c0_157, %c0_158] : memref<8x8x128xbf16, #tpu.memory_space<vmem>>, vector<1x8x128xbf16>
    %198 = vector.shape_cast %197 : vector<1x8x128xbf16> to vector<8x128xbf16>
    %199 = arith.extf %198 : vector<8x128xbf16> to vector<8x128xf32>
    %200 = arith.truncf %192 : vector<8x128xf32> to vector<8x128xbf16>
    %c0_159 = arith.constant 0 : index
    %c0_160 = arith.constant 0 : index
    %201 = vector.load %arg3[%c0_159, %c0_160] : memref<128x128xbf16, #tpu.memory_space<vmem>>, vector<128x128xbf16>
    %cst_161 = arith.constant dense<0.000000e+00> : vector<8x128xf32>
    %202 = tpu.matmul %200, %201, %cst_161 {dimension_numbers = #tpu.dot_dimension_numbers<[1], [0], [0], [1], [0, 0, 1, 1], [], []>} : vector<8x128xbf16>, vector<128x128xbf16>, vector<8x128xf32> -> vector<8x128xf32>
    %203 = arith.addf %199, %202 : vector<8x128xf32>
    %204 = math.tanh %203 : vector<8x128xf32>
    %205 = tpu.concatenate %192, %194 in 1 : vector<8x128xf32>, vector<8x128xf32> -> vector<8x256xf32>
    %206 = arith.truncf %205 : vector<8x256xf32> to vector<8x256xbf16>
    %c0_162 = arith.constant 0 : index
    %c0_163 = arith.constant 0 : index
    %c0_164 = arith.constant 0 : index
    %207 = vector.load %arg2[%c0_162, %c0_163, %c0_164] : memref<1x256x128xbf16, #tpu.memory_space<vmem>>, vector<1x256x128xbf16>
    %208 = vector.shape_cast %207 : vector<1x256x128xbf16> to vector<256x128xbf16>
    %cst_165 = arith.constant dense<0.000000e+00> : vector<8x128xf32>
    %209 = tpu.matmul %206, %208, %cst_165 {dimension_numbers = #tpu.dot_dimension_numbers<[1], [0], [0], [1], [0, 0, 1, 1], [], []>} : vector<8x256xbf16>, vector<256x128xbf16>, vector<8x128xf32> -> vector<8x128xf32>
    %c0_166 = arith.constant 0 : index
    %c0_167 = arith.constant 0 : index
    %c0_168 = arith.constant 0 : index
    %210 = vector.load %arg4[%c0_166, %c0_167, %c0_168] : memref<1x1x128xf32, #tpu.memory_space<vmem>>, vector<1x1x128xf32>
    %211 = vector.shape_cast %210 : vector<1x1x128xf32> to vector<1x128xf32>
    %212 = vector.broadcast %211 : vector<1x128xf32> to vector<8x128xf32>
    %213 = arith.addf %209, %212 : vector<8x128xf32>
    %214 = math.tanh %213 : vector<8x128xf32>
    %c0_169 = arith.constant 0 : index
    %c0_170 = arith.constant 0 : index
    %c0_171 = arith.constant 0 : index
    %215 = vector.load %arg7[%c0_169, %c0_170, %c0_171] : memref<2x8x128xf32, #tpu.memory_space<vmem>>, vector<1x8x128xf32>
    %216 = vector.shape_cast %215 : vector<1x8x128xf32> to vector<8x128xf32>
    %217 = vector.shape_cast %204 : vector<8x128xf32> to vector<1x8x128xf32>
    tpu.vector_store %arg7[%c0_169, %c0_170, %c0_171], %217 {strides = array<i32>} : memref<2x8x128xf32, #tpu.memory_space<vmem>>, vector<1x8x128xf32>,
    %c1_172 = arith.constant 1 : index
    %c0_173 = arith.constant 0 : index
    %c0_174 = arith.constant 0 : index
    %218 = vector.load %arg7[%c1_172, %c0_173, %c0_174] : memref<2x8x128xf32, #tpu.memory_space<vmem>>, vector<1x8x128xf32>
    %219 = vector.shape_cast %218 : vector<1x8x128xf32> to vector<8x128xf32>
    %220 = vector.shape_cast %214 : vector<8x128xf32> to vector<1x8x128xf32>
    tpu.vector_store %arg7[%c1_172, %c0_173, %c0_174], %220 {strides = array<i32>} : memref<2x8x128xf32, #tpu.memory_space<vmem>>, vector<1x8x128xf32>,
    %c1_i32_175 = arith.constant 1 : i32
    %221 = arith.subi %c6_i32, %c1_i32_175 : i32
    %222 = arith.index_cast %221 : i32 to index
    %c0_176 = arith.constant 0 : index
    %c0_177 = arith.constant 0 : index
    %223 = vector.load %arg5[%222, %c0_176, %c0_177] : memref<8x8x128xf32, #tpu.memory_space<vmem>>, vector<1x8x128xf32>
    %224 = vector.shape_cast %223 : vector<1x8x128xf32> to vector<8x128xf32>
    %225 = vector.shape_cast %214 : vector<8x128xf32> to vector<1x8x128xf32>
    tpu.vector_store %arg5[%222, %c0_176, %c0_177], %225 {strides = array<i32>} : memref<8x8x128xf32, #tpu.memory_space<vmem>>, vector<1x8x128xf32>,
    %c7_i32 = arith.constant 7 : i32
    %c0_178 = arith.constant 0 : index
    %c0_179 = arith.constant 0 : index
    %c0_180 = arith.constant 0 : index
    %226 = vector.load %arg7[%c0_178, %c0_179, %c0_180] : memref<2x8x128xf32, #tpu.memory_space<vmem>>, vector<1x8x128xf32>
    %227 = vector.shape_cast %226 : vector<1x8x128xf32> to vector<8x128xf32>
    %c1_181 = arith.constant 1 : index
    %c0_182 = arith.constant 0 : index
    %c0_183 = arith.constant 0 : index
    %228 = vector.load %arg7[%c1_181, %c0_182, %c0_183] : memref<2x8x128xf32, #tpu.memory_space<vmem>>, vector<1x8x128xf32>
    %229 = vector.shape_cast %228 : vector<1x8x128xf32> to vector<8x128xf32>
    %c0_i32_184 = arith.constant 0 : i32
    %230 = arith.subi %c7_i32, %c0_i32_184 : i32
    %231 = arith.index_cast %230 : i32 to index
    %c0_185 = arith.constant 0 : index
    %c0_186 = arith.constant 0 : index
    %232 = vector.load %arg1[%231, %c0_185, %c0_186] : memref<8x8x128xbf16, #tpu.memory_space<vmem>>, vector<1x8x128xbf16>
    %233 = vector.shape_cast %232 : vector<1x8x128xbf16> to vector<8x128xbf16>
    %234 = arith.extf %233 : vector<8x128xbf16> to vector<8x128xf32>
    %235 = arith.truncf %227 : vector<8x128xf32> to vector<8x128xbf16>
    %c0_187 = arith.constant 0 : index
    %c0_188 = arith.constant 0 : index
    %236 = vector.load %arg3[%c0_187, %c0_188] : memref<128x128xbf16, #tpu.memory_space<vmem>>, vector<128x128xbf16>
    %cst_189 = arith.constant dense<0.000000e+00> : vector<8x128xf32>
    %237 = tpu.matmul %235, %236, %cst_189 {dimension_numbers = #tpu.dot_dimension_numbers<[1], [0], [0], [1], [0, 0, 1, 1], [], []>} : vector<8x128xbf16>, vector<128x128xbf16>, vector<8x128xf32> -> vector<8x128xf32>
    %238 = arith.addf %234, %237 : vector<8x128xf32>
    %239 = math.tanh %238 : vector<8x128xf32>
    %240 = tpu.concatenate %227, %229 in 1 : vector<8x128xf32>, vector<8x128xf32> -> vector<8x256xf32>
    %241 = arith.truncf %240 : vector<8x256xf32> to vector<8x256xbf16>
    %c0_190 = arith.constant 0 : index
    %c0_191 = arith.constant 0 : index
    %c0_192 = arith.constant 0 : index
    %242 = vector.load %arg2[%c0_190, %c0_191, %c0_192] : memref<1x256x128xbf16, #tpu.memory_space<vmem>>, vector<1x256x128xbf16>
    %243 = vector.shape_cast %242 : vector<1x256x128xbf16> to vector<256x128xbf16>
    %cst_193 = arith.constant dense<0.000000e+00> : vector<8x128xf32>
    %244 = tpu.matmul %241, %243, %cst_193 {dimension_numbers = #tpu.dot_dimension_numbers<[1], [0], [0], [1], [0, 0, 1, 1], [], []>} : vector<8x256xbf16>, vector<256x128xbf16>, vector<8x128xf32> -> vector<8x128xf32>
    %c0_194 = arith.constant 0 : index
    %c0_195 = arith.constant 0 : index
    %c0_196 = arith.constant 0 : index
    %245 = vector.load %arg4[%c0_194, %c0_195, %c0_196] : memref<1x1x128xf32, #tpu.memory_space<vmem>>, vector<1x1x128xf32>
    %246 = vector.shape_cast %245 : vector<1x1x128xf32> to vector<1x128xf32>
    %247 = vector.broadcast %246 : vector<1x128xf32> to vector<8x128xf32>
    %248 = arith.addf %244, %247 : vector<8x128xf32>
    %249 = math.tanh %248 : vector<8x128xf32>
    %c0_197 = arith.constant 0 : index
    %c0_198 = arith.constant 0 : index
    %c0_199 = arith.constant 0 : index
    %250 = vector.load %arg7[%c0_197, %c0_198, %c0_199] : memref<2x8x128xf32, #tpu.memory_space<vmem>>, vector<1x8x128xf32>
    %251 = vector.shape_cast %250 : vector<1x8x128xf32> to vector<8x128xf32>
    %252 = vector.shape_cast %239 : vector<8x128xf32> to vector<1x8x128xf32>
    tpu.vector_store %arg7[%c0_197, %c0_198, %c0_199], %252 {strides = array<i32>} : memref<2x8x128xf32, #tpu.memory_space<vmem>>, vector<1x8x128xf32>,
    %c1_200 = arith.constant 1 : index
    %c0_201 = arith.constant 0 : index
    %c0_202 = arith.constant 0 : index
    %253 = vector.load %arg7[%c1_200, %c0_201, %c0_202] : memref<2x8x128xf32, #tpu.memory_space<vmem>>, vector<1x8x128xf32>
    %254 = vector.shape_cast %253 : vector<1x8x128xf32> to vector<8x128xf32>
    %255 = vector.shape_cast %249 : vector<8x128xf32> to vector<1x8x128xf32>
    tpu.vector_store %arg7[%c1_200, %c0_201, %c0_202], %255 {strides = array<i32>} : memref<2x8x128xf32, #tpu.memory_space<vmem>>, vector<1x8x128xf32>,
    %c1_i32_203 = arith.constant 1 : i32
    %256 = arith.subi %c7_i32, %c1_i32_203 : i32
    %257 = arith.index_cast %256 : i32 to index
    %c0_204 = arith.constant 0 : index
    %c0_205 = arith.constant 0 : index
    %258 = vector.load %arg5[%257, %c0_204, %c0_205] : memref<8x8x128xf32, #tpu.memory_space<vmem>>, vector<1x8x128xf32>
    %259 = vector.shape_cast %258 : vector<1x8x128xf32> to vector<8x128xf32>
    %260 = vector.shape_cast %249 : vector<8x128xf32> to vector<1x8x128xf32>
    tpu.vector_store %arg5[%257, %c0_204, %c0_205], %260 {strides = array<i32>} : memref<8x8x128xf32, #tpu.memory_space<vmem>>, vector<1x8x128xf32>,
    %c7_i32_206 = arith.constant 7 : i32
    %c0_207 = arith.constant 0 : index
    %c0_208 = arith.constant 0 : index
    %c0_209 = arith.constant 0 : index
    %261 = vector.load %arg7[%c0_207, %c0_208, %c0_209] : memref<2x8x128xf32, #tpu.memory_space<vmem>>, vector<1x8x128xf32>
    %262 = vector.shape_cast %261 : vector<1x8x128xf32> to vector<8x128xf32>
    %c1_210 = arith.constant 1 : index
    %c0_211 = arith.constant 0 : index
    %c0_212 = arith.constant 0 : index
    %263 = vector.load %arg7[%c1_210, %c0_211, %c0_212] : memref<2x8x128xf32, #tpu.memory_space<vmem>>, vector<1x8x128xf32>
    %264 = vector.shape_cast %263 : vector<1x8x128xf32> to vector<8x128xf32>
    %265 = tpu.concatenate %262, %264 in 1 : vector<8x128xf32>, vector<8x128xf32> -> vector<8x256xf32>
    %266 = arith.truncf %265 : vector<8x256xf32> to vector<8x256xbf16>
    %c0_213 = arith.constant 0 : index
    %c0_214 = arith.constant 0 : index
    %c0_215 = arith.constant 0 : index
    %267 = vector.load %arg2[%c0_213, %c0_214, %c0_215] : memref<1x256x128xbf16, #tpu.memory_space<vmem>>, vector<1x256x128xbf16>
    %268 = vector.shape_cast %267 : vector<1x256x128xbf16> to vector<256x128xbf16>
    %cst_216 = arith.constant dense<0.000000e+00> : vector<8x128xf32>
    %269 = tpu.matmul %266, %268, %cst_216 {dimension_numbers = #tpu.dot_dimension_numbers<[1], [0], [0], [1], [0, 0, 1, 1], [], []>} : vector<8x256xbf16>, vector<256x128xbf16>, vector<8x128xf32> -> vector<8x128xf32>
    %c0_217 = arith.constant 0 : index
    %c0_218 = arith.constant 0 : index
    %c0_219 = arith.constant 0 : index
    %270 = vector.load %arg4[%c0_217, %c0_218, %c0_219] : memref<1x1x128xf32, #tpu.memory_space<vmem>>, vector<1x1x128xf32>
    %271 = vector.shape_cast %270 : vector<1x1x128xf32> to vector<1x128xf32>
    %272 = vector.broadcast %271 : vector<1x128xf32> to vector<8x128xf32>
    %273 = arith.addf %269, %272 : vector<8x128xf32>
    %274 = math.tanh %273 : vector<8x128xf32>
    %c1_220 = arith.constant 1 : index
    %c0_221 = arith.constant 0 : index
    %c0_222 = arith.constant 0 : index
    %275 = vector.load %arg7[%c1_220, %c0_221, %c0_222] : memref<2x8x128xf32, #tpu.memory_space<vmem>>, vector<1x8x128xf32>
    %276 = vector.shape_cast %275 : vector<1x8x128xf32> to vector<8x128xf32>
    %277 = vector.shape_cast %274 : vector<8x128xf32> to vector<1x8x128xf32>
    tpu.vector_store %arg7[%c1_220, %c0_221, %c0_222], %277 {strides = array<i32>} : memref<2x8x128xf32, #tpu.memory_space<vmem>>, vector<1x8x128xf32>,
    %c7 = arith.constant 7 : index
    %c0_223 = arith.constant 0 : index
    %c0_224 = arith.constant 0 : index
    %278 = vector.load %arg5[%c7, %c0_223, %c0_224] : memref<8x8x128xf32, #tpu.memory_space<vmem>>, vector<1x8x128xf32>
    %279 = vector.shape_cast %278 : vector<1x8x128xf32> to vector<8x128xf32>
    %280 = vector.shape_cast %274 : vector<8x128xf32> to vector<1x8x128xf32>
    tpu.vector_store %arg5[%c7, %c0_223, %c0_224], %280 {strides = array<i32>} : memref<8x8x128xf32, #tpu.memory_space<vmem>>, vector<1x8x128xf32>,
    %c0_i32_225 = arith.constant 0 : i32
    %281 = arith.cmpi eq, %arg0, %c0_i32_225 : i32
    %282 = arith.extui %281 : i1 to i32
    %c0_i32_226 = arith.constant 0 : i32
    %283 = arith.cmpi ne, %282, %c0_i32_226 : i32
    scf.if %283 {
      %c0_227 = arith.constant 0 : index
      %c0_228 = arith.constant 0 : index
      %c0_229 = arith.constant 0 : index
      %284 = vector.load %arg7[%c0_227, %c0_228, %c0_229] : memref<2x8x128xf32, #tpu.memory_space<vmem>>, vector<2x8x128xf32>
      %c0_230 = arith.constant 0 : index
      %c0_231 = arith.constant 0 : index
      %c0_232 = arith.constant 0 : index
      %285 = vector.load %arg6[%c0_230, %c0_231, %c0_232] : memref<2x8x128xf32, #tpu.memory_space<vmem>>, vector<2x8x128xf32>
      tpu.vector_store %arg6[%c0_230, %c0_231, %c0_232], %284 {strides = array<i32>} : memref<2x8x128xf32, #tpu.memory_space<vmem>>, vector<2x8x128xf32>,
    } else {
    }
    return
  }
  func.func @transform_0(%arg0: i32) -> (i32, i32, i32) {
    %c0_i32 = arith.constant 0 : i32
    %c0_i32_0 = arith.constant 0 : i32
    %c0_i32_1 = arith.constant 0 : i32
    return %arg0, %c0_i32, %c0_i32_0 : i32, i32, i32
  }
  func.func @transform_1(%arg0: i32) -> (i32, i32, i32) {
    %c0_i32 = arith.constant 0 : i32
    %c0_i32_0 = arith.constant 0 : i32
    %c0_i32_1 = arith.constant 0 : i32
    %c0_i32_2 = arith.constant 0 : i32
    return %c0_i32, %c0_i32_0, %c0_i32_1 : i32, i32, i32
  }
  func.func @transform_2(%arg0: i32) -> (i32, i32) {
    %c0_i32 = arith.constant 0 : i32
    %c0_i32_0 = arith.constant 0 : i32
    %c0_i32_1 = arith.constant 0 : i32
    return %c0_i32, %c0_i32_0 : i32, i32
  }
  func.func @transform_3(%arg0: i32) -> (i32, i32, i32) {
    %c0_i32 = arith.constant 0 : i32
    %c0_i32_0 = arith.constant 0 : i32
    %c0_i32_1 = arith.constant 0 : i32
    %c0_i32_2 = arith.constant 0 : i32
    return %c0_i32, %c0_i32_0, %c0_i32_1 : i32, i32, i32
  }
  func.func @transform_4(%arg0: i32) -> (i32, i32, i32) {
    %c0_i32 = arith.constant 0 : i32
    %c0_i32_0 = arith.constant 0 : i32
    %c0_i32_1 = arith.constant 0 : i32
    return %arg0, %c0_i32, %c0_i32_0 : i32, i32, i32
  }
  func.func @transform_5(%arg0: i32) -> (i32, i32, i32) {
    %c0_i32 = arith.constant 0 : i32
    %c0_i32_0 = arith.constant 0 : i32
    %c0_i32_1 = arith.constant 0 : i32
    %c0_i32_2 = arith.constant 0 : i32
    return %c0_i32, %c0_i32_0, %c0_i32_1 : i32, i32, i32
  }
}

module attributes {stable_mosaic.version = 11 : i64} {
  func.func @kernel(%arg0: i32, %arg1: memref<8x8x128xbf16, #tpu.memory_space<vmem>>, %arg2: memref<1x256x128xbf16, #tpu.memory_space<vmem>>, %arg3: memref<128x128xbf16, #tpu.memory_space<vmem>>, %arg4: memref<1x1x128xf32, #tpu.memory_space<vmem>>, %arg5: memref<8x8x128xf32, #tpu.memory_space<vmem>>, %arg6: memref<2x8x128xf32, #tpu.memory_space<vmem>>, %arg7: memref<2x8x128xf32, #tpu.memory_space<vmem>>) attributes {dimension_semantics = [#tpu.dimension_semantics<arbitrary>], iteration_bounds = array<i64: 1>, scalar_prefetch = 0 : i64, scratch_operands = 1 : i64, tpu.core_type = #tpu.core_type<tc>, window_params = [{transform_indices = @transform_0, window_bounds = array<i64: 8, 8, 128>}, {pipeline_mode = #tpu.pipeline_mode<synchronous>, transform_indices = @transform_1, window_bounds = array<i64: 1, 256, 128>}, {pipeline_mode = #tpu.pipeline_mode<synchronous>, transform_indices = @transform_2, window_bounds = array<i64: 128, 128>}, {pipeline_mode = #tpu.pipeline_mode<synchronous>, transform_indices = @transform_3, window_bounds = array<i64: 1, 1, 128>}, {transform_indices = @transform_4, window_bounds = array<i64: 8, 8, 128>}, {pipeline_mode = #tpu.pipeline_mode<synchronous>, transform_indices = @transform_5, window_bounds = array<i64: 2, 8, 128>}]} {
    %c0_i32 = arith.constant 0 : i32
    %0 = arith.cmpi eq, %arg0, %c0_i32 : i32
    %1 = arith.extui %0 : i1 to i32
    %c0_i32_0 = arith.constant 0 : i32
    %2 = arith.cmpi ne, %1, %c0_i32_0 : i32
    scf.if %2 {
      %cst_227 = arith.constant 0.000000e+00 : f32
      %284 = vector.broadcast %cst_227 : f32 to vector<2x8x128xf32>
      %c0_228 = arith.constant 0 : index
      %c0_229 = arith.constant 0 : index
      %c0_230 = arith.constant 0 : index
      %285 = vector.load %arg7[%c0_228, %c0_229, %c0_230] : memref<2x8x128xf32, #tpu.memory_space<vmem>>, vector<2x8x128xf32>
      tpu.vector_store %arg7[%c0_228, %c0_229, %c0_230], %284 {strides = array<i32>} : memref<2x8x128xf32, #tpu.memory_space<vmem>>, vector<2x8x128xf32>,
    } else {
    }
    %c0 = arith.constant 0 : index
    %c0_1 = arith.constant 0 : index
    %c0_2 = arith.constant 0 : index
    %3 = vector.load %arg7[%c0, %c0_1, %c0_2] : memref<2x8x128xf32, #tpu.memory_space<vmem>>, vector<1x8x128xf32>
    %4 = vector.shape_cast %3 : vector<1x8x128xf32> to vector<8x128xf32>
    %c0_3 = arith.constant 0 : index
    %c0_4 = arith.constant 0 : index
    %c0_5 = arith.constant 0 : index
    %5 = vector.load %arg1[%c0_3, %c0_4, %c0_5] : memref<8x8x128xbf16, #tpu.memory_space<vmem>>, vector<1x8x128xbf16>
    %6 = vector.shape_cast %5 : vector<1x8x128xbf16> to vector<8x128xbf16>
    %7 = arith.extf %6 : vector<8x128xbf16> to vector<8x128xf32>
    %8 = arith.truncf %4 : vector<8x128xf32> to vector<8x128xbf16>
    %c0_6 = arith.constant 0 : index
    %c0_7 = arith.constant 0 : index
    %9 = vector.load %arg3[%c0_6, %c0_7] : memref<128x128xbf16, #tpu.memory_space<vmem>>, vector<128x128xbf16>
    %cst = arith.constant dense<0.000000e+00> : vector<8x128xf32>
    %10 = tpu.matmul %8, %9, %cst {dimension_numbers = #tpu.dot_dimension_numbers<[1], [0], [0], [1], [0, 0, 1, 1], [], []>} : vector<8x128xbf16>, vector<128x128xbf16>, vector<8x128xf32> -> vector<8x128xf32>
    %11 = arith.addf %7, %10 : vector<8x128xf32>
    %12 = math.tanh %11 : vector<8x128xf32>
    %c0_8 = arith.constant 0 : index
    %c0_9 = arith.constant 0 : index
    %c0_10 = arith.constant 0 : index
    %13 = vector.load %arg7[%c0_8, %c0_9, %c0_10] : memref<2x8x128xf32, #tpu.memory_space<vmem>>, vector<1x8x128xf32>
    %14 = vector.shape_cast %13 : vector<1x8x128xf32> to vector<8x128xf32>
    %15 = vector.shape_cast %12 : vector<8x128xf32> to vector<1x8x128xf32>
    tpu.vector_store %arg7[%c0_8, %c0_9, %c0_10], %15 {strides = array<i32>} : memref<2x8x128xf32, #tpu.memory_space<vmem>>, vector<1x8x128xf32>,
    %c1_i32 = arith.constant 1 : i32
    %c0_11 = arith.constant 0 : index
    %c0_12 = arith.constant 0 : index
    %c0_13 = arith.constant 0 : index
    %16 = vector.load %arg7[%c0_11, %c0_12, %c0_13] : memref<2x8x128xf32, #tpu.memory_space<vmem>>, vector<1x8x128xf32>
    %17 = vector.shape_cast %16 : vector<1x8x128xf32> to vector<8x128xf32>
    %c1 = arith.constant 1 : index
    %c0_14 = arith.constant 0 : index
    %c0_15 = arith.constant 0 : index
    %18 = vector.load %arg7[%c1, %c0_14, %c0_15] : memref<2x8x128xf32, #tpu.memory_space<vmem>>, vector<1x8x128xf32>
    %19 = vector.shape_cast %18 : vector<1x8x128xf32> to vector<8x128xf32>
    %c0_i32_16 = arith.constant 0 : i32
    %20 = arith.subi %c1_i32, %c0_i32_16 : i32
    %21 = arith.index_cast %20 : i32 to index
    %c0_17 = arith.constant 0 : index
    %c0_18 = arith.constant 0 : index
    %22 = vector.load %arg1[%21, %c0_17, %c0_18] : memref<8x8x128xbf16, #tpu.memory_space<vmem>>, vector<1x8x128xbf16>
    %23 = vector.shape_cast %22 : vector<1x8x128xbf16> to vector<8x128xbf16>
    %24 = arith.extf %23 : vector<8x128xbf16> to vector<8x128xf32>
    %25 = arith.truncf %17 : vector<8x128xf32> to vector<8x128xbf16>
    %c0_19 = arith.constant 0 : index
    %c0_20 = arith.constant 0 : index
    %26 = vector.load %arg3[%c0_19, %c0_20] : memref<128x128xbf16, #tpu.memory_space<vmem>>, vector<128x128xbf16>
    %cst_21 = arith.constant dense<0.000000e+00> : vector<8x128xf32>
    %27 = tpu.matmul %25, %26, %cst_21 {dimension_numbers = #tpu.dot_dimension_numbers<[1], [0], [0], [1], [0, 0, 1, 1], [], []>} : vector<8x128xbf16>, vector<128x128xbf16>, vector<8x128xf32> -> vector<8x128xf32>
    %28 = arith.addf %24, %27 : vector<8x128xf32>
    %29 = math.tanh %28 : vector<8x128xf32>
    %30 = tpu.concatenate %17, %19 in 1 : vector<8x128xf32>, vector<8x128xf32> -> vector<8x256xf32>
    %31 = arith.truncf %30 : vector<8x256xf32> to vector<8x256xbf16>
    %c0_22 = arith.constant 0 : index
    %c0_23 = arith.constant 0 : index
    %c0_24 = arith.constant 0 : index
    %32 = vector.load %arg2[%c0_22, %c0_23, %c0_24] : memref<1x256x128xbf16, #tpu.memory_space<vmem>>, vector<1x256x128xbf16>
    %33 = vector.shape_cast %32 : vector<1x256x128xbf16> to vector<256x128xbf16>
    %cst_25 = arith.constant dense<0.000000e+00> : vector<8x128xf32>
    %34 = tpu.matmul %31, %33, %cst_25 {dimension_numbers = #tpu.dot_dimension_numbers<[1], [0], [0], [1], [0, 0, 1, 1], [], []>} : vector<8x256xbf16>, vector<256x128xbf16>, vector<8x128xf32> -> vector<8x128xf32>
    %c0_26 = arith.constant 0 : index
    %c0_27 = arith.constant 0 : index
    %c0_28 = arith.constant 0 : index
    %35 = vector.load %arg4[%c0_26, %c0_27, %c0_28] : memref<1x1x128xf32, #tpu.memory_space<vmem>>, vector<1x1x128xf32>
    %36 = vector.shape_cast %35 : vector<1x1x128xf32> to vector<1x128xf32>
    %37 = vector.broadcast %36 : vector<1x128xf32> to vector<8x128xf32>
    %38 = arith.addf %34, %37 : vector<8x128xf32>
    %39 = math.tanh %38 : vector<8x128xf32>
    %c0_29 = arith.constant 0 : index
    %c0_30 = arith.constant 0 : index
    %c0_31 = arith.constant 0 : index
    %40 = vector.load %arg7[%c0_29, %c0_30, %c0_31] : memref<2x8x128xf32, #tpu.memory_space<vmem>>, vector<1x8x128xf32>
    %41 = vector.shape_cast %40 : vector<1x8x128xf32> to vector<8x128xf32>
    %42 = vector.shape_cast %29 : vector<8x128xf32> to vector<1x8x128xf32>
    tpu.vector_store %arg7[%c0_29, %c0_30, %c0_31], %42 {strides = array<i32>} : memref<2x8x128xf32, #tpu.memory_space<vmem>>, vector<1x8x128xf32>,
    %c1_32 = arith.constant 1 : index
    %c0_33 = arith.constant 0 : index
    %c0_34 = arith.constant 0 : index
    %43 = vector.load %arg7[%c1_32, %c0_33, %c0_34] : memref<2x8x128xf32, #tpu.memory_space<vmem>>, vector<1x8x128xf32>
    %44 = vector.shape_cast %43 : vector<1x8x128xf32> to vector<8x128xf32>
    %45 = vector.shape_cast %39 : vector<8x128xf32> to vector<1x8x128xf32>
    tpu.vector_store %arg7[%c1_32, %c0_33, %c0_34], %45 {strides = array<i32>} : memref<2x8x128xf32, #tpu.memory_space<vmem>>, vector<1x8x128xf32>,
    %c1_i32_35 = arith.constant 1 : i32
    %46 = arith.subi %c1_i32, %c1_i32_35 : i32
    %47 = arith.index_cast %46 : i32 to index
    %c0_36 = arith.constant 0 : index
    %c0_37 = arith.constant 0 : index
    %48 = vector.load %arg5[%47, %c0_36, %c0_37] : memref<8x8x128xf32, #tpu.memory_space<vmem>>, vector<1x8x128xf32>
    %49 = vector.shape_cast %48 : vector<1x8x128xf32> to vector<8x128xf32>
    %50 = vector.shape_cast %39 : vector<8x128xf32> to vector<1x8x128xf32>
    tpu.vector_store %arg5[%47, %c0_36, %c0_37], %50 {strides = array<i32>} : memref<8x8x128xf32, #tpu.memory_space<vmem>>, vector<1x8x128xf32>,
    %c2_i32 = arith.constant 2 : i32
    %c0_38 = arith.constant 0 : index
    %c0_39 = arith.constant 0 : index
    %c0_40 = arith.constant 0 : index
    %51 = vector.load %arg7[%c0_38, %c0_39, %c0_40] : memref<2x8x128xf32, #tpu.memory_space<vmem>>, vector<1x8x128xf32>
    %52 = vector.shape_cast %51 : vector<1x8x128xf32> to vector<8x128xf32>
    %c1_41 = arith.constant 1 : index
    %c0_42 = arith.constant 0 : index
    %c0_43 = arith.constant 0 : index
    %53 = vector.load %arg7[%c1_41, %c0_42, %c0_43] : memref<2x8x128xf32, #tpu.memory_space<vmem>>, vector<1x8x128xf32>
    %54 = vector.shape_cast %53 : vector<1x8x128xf32> to vector<8x128xf32>
    %c0_i32_44 = arith.constant 0 : i32
    %55 = arith.subi %c2_i32, %c0_i32_44 : i32
    %56 = arith.index_cast %55 : i32 to index
    %c0_45 = arith.constant 0 : index
    %c0_46 = arith.constant 0 : index
    %57 = vector.load %arg1[%56, %c0_45, %c0_46] : memref<8x8x128xbf16, #tpu.memory_space<vmem>>, vector<1x8x128xbf16>
    %58 = vector.shape_cast %57 : vector<1x8x128xbf16> to vector<8x128xbf16>
    %59 = arith.extf %58 : vector<8x128xbf16> to vector<8x128xf32>
    %60 = arith.truncf %52 : vector<8x128xf32> to vector<8x128xbf16>
    %c0_47 = arith.constant 0 : index
    %c0_48 = arith.constant 0 : index
    %61 = vector.load %arg3[%c0_47, %c0_48] : memref<128x128xbf16, #tpu.memory_space<vmem>>, vector<128x128xbf16>
    %cst_49 = arith.constant dense<0.000000e+00> : vector<8x128xf32>
    %62 = tpu.matmul %60, %61, %cst_49 {dimension_numbers = #tpu.dot_dimension_numbers<[1], [0], [0], [1], [0, 0, 1, 1], [], []>} : vector<8x128xbf16>, vector<128x128xbf16>, vector<8x128xf32> -> vector<8x128xf32>
    %63 = arith.addf %59, %62 : vector<8x128xf32>
    %64 = math.tanh %63 : vector<8x128xf32>
    %65 = tpu.concatenate %52, %54 in 1 : vector<8x128xf32>, vector<8x128xf32> -> vector<8x256xf32>
    %66 = arith.truncf %65 : vector<8x256xf32> to vector<8x256xbf16>
    %c0_50 = arith.constant 0 : index
    %c0_51 = arith.constant 0 : index
    %c0_52 = arith.constant 0 : index
    %67 = vector.load %arg2[%c0_50, %c0_51, %c0_52] : memref<1x256x128xbf16, #tpu.memory_space<vmem>>, vector<1x256x128xbf16>
    %68 = vector.shape_cast %67 : vector<1x256x128xbf16> to vector<256x128xbf16>
    %cst_53 = arith.constant dense<0.000000e+00> : vector<8x128xf32>
    %69 = tpu.matmul %66, %68, %cst_53 {dimension_numbers = #tpu.dot_dimension_numbers<[1], [0], [0], [1], [0, 0, 1, 1], [], []>} : vector<8x256xbf16>, vector<256x128xbf16>, vector<8x128xf32> -> vector<8x128xf32>
    %c0_54 = arith.constant 0 : index
    %c0_55 = arith.constant 0 : index
    %c0_56 = arith.constant 0 : index
    %70 = vector.load %arg4[%c0_54, %c0_55, %c0_56] : memref<1x1x128xf32, #tpu.memory_space<vmem>>, vector<1x1x128xf32>
    %71 = vector.shape_cast %70 : vector<1x1x128xf32> to vector<1x128xf32>
    %72 = vector.broadcast %71 : vector<1x128xf32> to vector<8x128xf32>
    %73 = arith.addf %69, %72 : vector<8x128xf32>
    %74 = math.tanh %73 : vector<8x128xf32>
    %c0_57 = arith.constant 0 : index
    %c0_58 = arith.constant 0 : index
    %c0_59 = arith.constant 0 : index
    %75 = vector.load %arg7[%c0_57, %c0_58, %c0_59] : memref<2x8x128xf32, #tpu.memory_space<vmem>>, vector<1x8x128xf32>
    %76 = vector.shape_cast %75 : vector<1x8x128xf32> to vector<8x128xf32>
    %77 = vector.shape_cast %64 : vector<8x128xf32> to vector<1x8x128xf32>
    tpu.vector_store %arg7[%c0_57, %c0_58, %c0_59], %77 {strides = array<i32>} : memref<2x8x128xf32, #tpu.memory_space<vmem>>, vector<1x8x128xf32>,
    %c1_60 = arith.constant 1 : index
    %c0_61 = arith.constant 0 : index
    %c0_62 = arith.constant 0 : index
    %78 = vector.load %arg7[%c1_60, %c0_61, %c0_62] : memref<2x8x128xf32, #tpu.memory_space<vmem>>, vector<1x8x128xf32>
    %79 = vector.shape_cast %78 : vector<1x8x128xf32> to vector<8x128xf32>
    %80 = vector.shape_cast %74 : vector<8x128xf32> to vector<1x8x128xf32>
    tpu.vector_store %arg7[%c1_60, %c0_61, %c0_62], %80 {strides = array<i32>} : memref<2x8x128xf32, #tpu.memory_space<vmem>>, vector<1x8x128xf32>,
    %c1_i32_63 = arith.constant 1 : i32
    %81 = arith.subi %c2_i32, %c1_i32_63 : i32
    %82 = arith.index_cast %81 : i32 to index
    %c0_64 = arith.constant 0 : index
    %c0_65 = arith.constant 0 : index
    %83 = vector.load %arg5[%82, %c0_64, %c0_65] : memref<8x8x128xf32, #tpu.memory_space<vmem>>, vector<1x8x128xf32>
    %84 = vector.shape_cast %83 : vector<1x8x128xf32> to vector<8x128xf32>
    %85 = vector.shape_cast %74 : vector<8x128xf32> to vector<1x8x128xf32>
    tpu.vector_store %arg5[%82, %c0_64, %c0_65], %85 {strides = array<i32>} : memref<8x8x128xf32, #tpu.memory_space<vmem>>, vector<1x8x128xf32>,
    %c3_i32 = arith.constant 3 : i32
    %c0_66 = arith.constant 0 : index
    %c0_67 = arith.constant 0 : index
    %c0_68 = arith.constant 0 : index
    %86 = vector.load %arg7[%c0_66, %c0_67, %c0_68] : memref<2x8x128xf32, #tpu.memory_space<vmem>>, vector<1x8x128xf32>
    %87 = vector.shape_cast %86 : vector<1x8x128xf32> to vector<8x128xf32>
    %c1_69 = arith.constant 1 : index
    %c0_70 = arith.constant 0 : index
    %c0_71 = arith.constant 0 : index
    %88 = vector.load %arg7[%c1_69, %c0_70, %c0_71] : memref<2x8x128xf32, #tpu.memory_space<vmem>>, vector<1x8x128xf32>
    %89 = vector.shape_cast %88 : vector<1x8x128xf32> to vector<8x128xf32>
    %c0_i32_72 = arith.constant 0 : i32
    %90 = arith.subi %c3_i32, %c0_i32_72 : i32
    %91 = arith.index_cast %90 : i32 to index
    %c0_73 = arith.constant 0 : index
    %c0_74 = arith.constant 0 : index
    %92 = vector.load %arg1[%91, %c0_73, %c0_74] : memref<8x8x128xbf16, #tpu.memory_space<vmem>>, vector<1x8x128xbf16>
    %93 = vector.shape_cast %92 : vector<1x8x128xbf16> to vector<8x128xbf16>
    %94 = arith.extf %93 : vector<8x128xbf16> to vector<8x128xf32>
    %95 = arith.truncf %87 : vector<8x128xf32> to vector<8x128xbf16>
    %c0_75 = arith.constant 0 : index
    %c0_76 = arith.constant 0 : index
    %96 = vector.load %arg3[%c0_75, %c0_76] : memref<128x128xbf16, #tpu.memory_space<vmem>>, vector<128x128xbf16>
    %cst_77 = arith.constant dense<0.000000e+00> : vector<8x128xf32>
    %97 = tpu.matmul %95, %96, %cst_77 {dimension_numbers = #tpu.dot_dimension_numbers<[1], [0], [0], [1], [0, 0, 1, 1], [], []>} : vector<8x128xbf16>, vector<128x128xbf16>, vector<8x128xf32> -> vector<8x128xf32>
    %98 = arith.addf %94, %97 : vector<8x128xf32>
    %99 = math.tanh %98 : vector<8x128xf32>
    %100 = tpu.concatenate %87, %89 in 1 : vector<8x128xf32>, vector<8x128xf32> -> vector<8x256xf32>
    %101 = arith.truncf %100 : vector<8x256xf32> to vector<8x256xbf16>
    %c0_78 = arith.constant 0 : index
    %c0_79 = arith.constant 0 : index
    %c0_80 = arith.constant 0 : index
    %102 = vector.load %arg2[%c0_78, %c0_79, %c0_80] : memref<1x256x128xbf16, #tpu.memory_space<vmem>>, vector<1x256x128xbf16>
    %103 = vector.shape_cast %102 : vector<1x256x128xbf16> to vector<256x128xbf16>
    %cst_81 = arith.constant dense<0.000000e+00> : vector<8x128xf32>
    %104 = tpu.matmul %101, %103, %cst_81 {dimension_numbers = #tpu.dot_dimension_numbers<[1], [0], [0], [1], [0, 0, 1, 1], [], []>} : vector<8x256xbf16>, vector<256x128xbf16>, vector<8x128xf32> -> vector<8x128xf32>
    %c0_82 = arith.constant 0 : index
    %c0_83 = arith.constant 0 : index
    %c0_84 = arith.constant 0 : index
    %105 = vector.load %arg4[%c0_82, %c0_83, %c0_84] : memref<1x1x128xf32, #tpu.memory_space<vmem>>, vector<1x1x128xf32>
    %106 = vector.shape_cast %105 : vector<1x1x128xf32> to vector<1x128xf32>
    %107 = vector.broadcast %106 : vector<1x128xf32> to vector<8x128xf32>
    %108 = arith.addf %104, %107 : vector<8x128xf32>
    %109 = math.tanh %108 : vector<8x128xf32>
    %c0_85 = arith.constant 0 : index
    %c0_86 = arith.constant 0 : index
    %c0_87 = arith.constant 0 : index
    %110 = vector.load %arg7[%c0_85, %c0_86, %c0_87] : memref<2x8x128xf32, #tpu.memory_space<vmem>>, vector<1x8x128xf32>
    %111 = vector.shape_cast %110 : vector<1x8x128xf32> to vector<8x128xf32>
    %112 = vector.shape_cast %99 : vector<8x128xf32> to vector<1x8x128xf32>
    tpu.vector_store %arg7[%c0_85, %c0_86, %c0_87], %112 {strides = array<i32>} : memref<2x8x128xf32, #tpu.memory_space<vmem>>, vector<1x8x128xf32>,
    %c1_88 = arith.constant 1 : index
    %c0_89 = arith.constant 0 : index
    %c0_90 = arith.constant 0 : index
    %113 = vector.load %arg7[%c1_88, %c0_89, %c0_90] : memref<2x8x128xf32, #tpu.memory_space<vmem>>, vector<1x8x128xf32>
    %114 = vector.shape_cast %113 : vector<1x8x128xf32> to vector<8x128xf32>
    %115 = vector.shape_cast %109 : vector<8x128xf32> to vector<1x8x128xf32>
    tpu.vector_store %arg7[%c1_88, %c0_89, %c0_90], %115 {strides = array<i32>} : memref<2x8x128xf32, #tpu.memory_space<vmem>>, vector<1x8x128xf32>,
    %c1_i32_91 = arith.constant 1 : i32
    %116 = arith.subi %c3_i32, %c1_i32_91 : i32
    %117 = arith.index_cast %116 : i32 to index
    %c0_92 = arith.constant 0 : index
    %c0_93 = arith.constant 0 : index
    %118 = vector.load %arg5[%117, %c0_92, %c0_93] : memref<8x8x128xf32, #tpu.memory_space<vmem>>, vector<1x8x128xf32>
    %119 = vector.shape_cast %118 : vector<1x8x128xf32> to vector<8x128xf32>
    %120 = vector.shape_cast %109 : vector<8x128xf32> to vector<1x8x128xf32>
    tpu.vector_store %arg5[%117, %c0_92, %c0_93], %120 {strides = array<i32>} : memref<8x8x128xf32, #tpu.memory_space<vmem>>, vector<1x8x128xf32>,
    %c4_i32 = arith.constant 4 : i32
    %c0_94 = arith.constant 0 : index
    %c0_95 = arith.constant 0 : index
    %c0_96 = arith.constant 0 : index
    %121 = vector.load %arg7[%c0_94, %c0_95, %c0_96] : memref<2x8x128xf32, #tpu.memory_space<vmem>>, vector<1x8x128xf32>
    %122 = vector.shape_cast %121 : vector<1x8x128xf32> to vector<8x128xf32>
    %c1_97 = arith.constant 1 : index
    %c0_98 = arith.constant 0 : index
    %c0_99 = arith.constant 0 : index
    %123 = vector.load %arg7[%c1_97, %c0_98, %c0_99] : memref<2x8x128xf32, #tpu.memory_space<vmem>>, vector<1x8x128xf32>
    %124 = vector.shape_cast %123 : vector<1x8x128xf32> to vector<8x128xf32>
    %c0_i32_100 = arith.constant 0 : i32
    %125 = arith.subi %c4_i32, %c0_i32_100 : i32
    %126 = arith.index_cast %125 : i32 to index
    %c0_101 = arith.constant 0 : index
    %c0_102 = arith.constant 0 : index
    %127 = vector.load %arg1[%126, %c0_101, %c0_102] : memref<8x8x128xbf16, #tpu.memory_space<vmem>>, vector<1x8x128xbf16>
    %128 = vector.shape_cast %127 : vector<1x8x128xbf16> to vector<8x128xbf16>
    %129 = arith.extf %128 : vector<8x128xbf16> to vector<8x128xf32>
    %130 = arith.truncf %122 : vector<8x128xf32> to vector<8x128xbf16>
    %c0_103 = arith.constant 0 : index
    %c0_104 = arith.constant 0 : index
    %131 = vector.load %arg3[%c0_103, %c0_104] : memref<128x128xbf16, #tpu.memory_space<vmem>>, vector<128x128xbf16>
    %cst_105 = arith.constant dense<0.000000e+00> : vector<8x128xf32>
    %132 = tpu.matmul %130, %131, %cst_105 {dimension_numbers = #tpu.dot_dimension_numbers<[1], [0], [0], [1], [0, 0, 1, 1], [], []>} : vector<8x128xbf16>, vector<128x128xbf16>, vector<8x128xf32> -> vector<8x128xf32>
    %133 = arith.addf %129, %132 : vector<8x128xf32>
    %134 = math.tanh %133 : vector<8x128xf32>
    %135 = tpu.concatenate %122, %124 in 1 : vector<8x128xf32>, vector<8x128xf32> -> vector<8x256xf32>
    %136 = arith.truncf %135 : vector<8x256xf32> to vector<8x256xbf16>
    %c0_106 = arith.constant 0 : index
    %c0_107 = arith.constant 0 : index
    %c0_108 = arith.constant 0 : index
    %137 = vector.load %arg2[%c0_106, %c0_107, %c0_108] : memref<1x256x128xbf16, #tpu.memory_space<vmem>>, vector<1x256x128xbf16>
    %138 = vector.shape_cast %137 : vector<1x256x128xbf16> to vector<256x128xbf16>
    %cst_109 = arith.constant dense<0.000000e+00> : vector<8x128xf32>
    %139 = tpu.matmul %136, %138, %cst_109 {dimension_numbers = #tpu.dot_dimension_numbers<[1], [0], [0], [1], [0, 0, 1, 1], [], []>} : vector<8x256xbf16>, vector<256x128xbf16>, vector<8x128xf32> -> vector<8x128xf32>
    %c0_110 = arith.constant 0 : index
    %c0_111 = arith.constant 0 : index
    %c0_112 = arith.constant 0 : index
    %140 = vector.load %arg4[%c0_110, %c0_111, %c0_112] : memref<1x1x128xf32, #tpu.memory_space<vmem>>, vector<1x1x128xf32>
    %141 = vector.shape_cast %140 : vector<1x1x128xf32> to vector<1x128xf32>
    %142 = vector.broadcast %141 : vector<1x128xf32> to vector<8x128xf32>
    %143 = arith.addf %139, %142 : vector<8x128xf32>
    %144 = math.tanh %143 : vector<8x128xf32>
    %c0_113 = arith.constant 0 : index
    %c0_114 = arith.constant 0 : index
    %c0_115 = arith.constant 0 : index
    %145 = vector.load %arg7[%c0_113, %c0_114, %c0_115] : memref<2x8x128xf32, #tpu.memory_space<vmem>>, vector<1x8x128xf32>
    %146 = vector.shape_cast %145 : vector<1x8x128xf32> to vector<8x128xf32>
    %147 = vector.shape_cast %134 : vector<8x128xf32> to vector<1x8x128xf32>
    tpu.vector_store %arg7[%c0_113, %c0_114, %c0_115], %147 {strides = array<i32>} : memref<2x8x128xf32, #tpu.memory_space<vmem>>, vector<1x8x128xf32>,
    %c1_116 = arith.constant 1 : index
    %c0_117 = arith.constant 0 : index
    %c0_118 = arith.constant 0 : index
    %148 = vector.load %arg7[%c1_116, %c0_117, %c0_118] : memref<2x8x128xf32, #tpu.memory_space<vmem>>, vector<1x8x128xf32>
    %149 = vector.shape_cast %148 : vector<1x8x128xf32> to vector<8x128xf32>
    %150 = vector.shape_cast %144 : vector<8x128xf32> to vector<1x8x128xf32>
    tpu.vector_store %arg7[%c1_116, %c0_117, %c0_118], %150 {strides = array<i32>} : memref<2x8x128xf32, #tpu.memory_space<vmem>>, vector<1x8x128xf32>,
    %c1_i32_119 = arith.constant 1 : i32
    %151 = arith.subi %c4_i32, %c1_i32_119 : i32
    %152 = arith.index_cast %151 : i32 to index
    %c0_120 = arith.constant 0 : index
    %c0_121 = arith.constant 0 : index
    %153 = vector.load %arg5[%152, %c0_120, %c0_121] : memref<8x8x128xf32, #tpu.memory_space<vmem>>, vector<1x8x128xf32>
    %154 = vector.shape_cast %153 : vector<1x8x128xf32> to vector<8x128xf32>
    %155 = vector.shape_cast %144 : vector<8x128xf32> to vector<1x8x128xf32>
    tpu.vector_store %arg5[%152, %c0_120, %c0_121], %155 {strides = array<i32>} : memref<8x8x128xf32, #tpu.memory_space<vmem>>, vector<1x8x128xf32>,
    %c5_i32 = arith.constant 5 : i32
    %c0_122 = arith.constant 0 : index
    %c0_123 = arith.constant 0 : index
    %c0_124 = arith.constant 0 : index
    %156 = vector.load %arg7[%c0_122, %c0_123, %c0_124] : memref<2x8x128xf32, #tpu.memory_space<vmem>>, vector<1x8x128xf32>
    %157 = vector.shape_cast %156 : vector<1x8x128xf32> to vector<8x128xf32>
    %c1_125 = arith.constant 1 : index
    %c0_126 = arith.constant 0 : index
    %c0_127 = arith.constant 0 : index
    %158 = vector.load %arg7[%c1_125, %c0_126, %c0_127] : memref<2x8x128xf32, #tpu.memory_space<vmem>>, vector<1x8x128xf32>
    %159 = vector.shape_cast %158 : vector<1x8x128xf32> to vector<8x128xf32>
    %c0_i32_128 = arith.constant 0 : i32
    %160 = arith.subi %c5_i32, %c0_i32_128 : i32
    %161 = arith.index_cast %160 : i32 to index
    %c0_129 = arith.constant 0 : index
    %c0_130 = arith.constant 0 : index
    %162 = vector.load %arg1[%161, %c0_129, %c0_130] : memref<8x8x128xbf16, #tpu.memory_space<vmem>>, vector<1x8x128xbf16>
    %163 = vector.shape_cast %162 : vector<1x8x128xbf16> to vector<8x128xbf16>
    %164 = arith.extf %163 : vector<8x128xbf16> to vector<8x128xf32>
    %165 = arith.truncf %157 : vector<8x128xf32> to vector<8x128xbf16>
    %c0_131 = arith.constant 0 : index
    %c0_132 = arith.constant 0 : index
    %166 = vector.load %arg3[%c0_131, %c0_132] : memref<128x128xbf16, #tpu.memory_space<vmem>>, vector<128x128xbf16>
    %cst_133 = arith.constant dense<0.000000e+00> : vector<8x128xf32>
    %167 = tpu.matmul %165, %166, %cst_133 {dimension_numbers = #tpu.dot_dimension_numbers<[1], [0], [0], [1], [0, 0, 1, 1], [], []>} : vector<8x128xbf16>, vector<128x128xbf16>, vector<8x128xf32> -> vector<8x128xf32>
    %168 = arith.addf %164, %167 : vector<8x128xf32>
    %169 = math.tanh %168 : vector<8x128xf32>
    %170 = tpu.concatenate %157, %159 in 1 : vector<8x128xf32>, vector<8x128xf32> -> vector<8x256xf32>
    %171 = arith.truncf %170 : vector<8x256xf32> to vector<8x256xbf16>
    %c0_134 = arith.constant 0 : index
    %c0_135 = arith.constant 0 : index
    %c0_136 = arith.constant 0 : index
    %172 = vector.load %arg2[%c0_134, %c0_135, %c0_136] : memref<1x256x128xbf16, #tpu.memory_space<vmem>>, vector<1x256x128xbf16>
    %173 = vector.shape_cast %172 : vector<1x256x128xbf16> to vector<256x128xbf16>
    %cst_137 = arith.constant dense<0.000000e+00> : vector<8x128xf32>
    %174 = tpu.matmul %171, %173, %cst_137 {dimension_numbers = #tpu.dot_dimension_numbers<[1], [0], [0], [1], [0, 0, 1, 1], [], []>} : vector<8x256xbf16>, vector<256x128xbf16>, vector<8x128xf32> -> vector<8x128xf32>
    %c0_138 = arith.constant 0 : index
    %c0_139 = arith.constant 0 : index
    %c0_140 = arith.constant 0 : index
    %175 = vector.load %arg4[%c0_138, %c0_139, %c0_140] : memref<1x1x128xf32, #tpu.memory_space<vmem>>, vector<1x1x128xf32>
    %176 = vector.shape_cast %175 : vector<1x1x128xf32> to vector<1x128xf32>
    %177 = vector.broadcast %176 : vector<1x128xf32> to vector<8x128xf32>
    %178 = arith.addf %174, %177 : vector<8x128xf32>
    %179 = math.tanh %178 : vector<8x128xf32>
    %c0_141 = arith.constant 0 : index
    %c0_142 = arith.constant 0 : index
    %c0_143 = arith.constant 0 : index
    %180 = vector.load %arg7[%c0_141, %c0_142, %c0_143] : memref<2x8x128xf32, #tpu.memory_space<vmem>>, vector<1x8x128xf32>
    %181 = vector.shape_cast %180 : vector<1x8x128xf32> to vector<8x128xf32>
    %182 = vector.shape_cast %169 : vector<8x128xf32> to vector<1x8x128xf32>
    tpu.vector_store %arg7[%c0_141, %c0_142, %c0_143], %182 {strides = array<i32>} : memref<2x8x128xf32, #tpu.memory_space<vmem>>, vector<1x8x128xf32>,
    %c1_144 = arith.constant 1 : index
    %c0_145 = arith.constant 0 : index
    %c0_146 = arith.constant 0 : index
    %183 = vector.load %arg7[%c1_144, %c0_145, %c0_146] : memref<2x8x128xf32, #tpu.memory_space<vmem>>, vector<1x8x128xf32>
    %184 = vector.shape_cast %183 : vector<1x8x128xf32> to vector<8x128xf32>
    %185 = vector.shape_cast %179 : vector<8x128xf32> to vector<1x8x128xf32>
    tpu.vector_store %arg7[%c1_144, %c0_145, %c0_146], %185 {strides = array<i32>} : memref<2x8x128xf32, #tpu.memory_space<vmem>>, vector<1x8x128xf32>,
    %c1_i32_147 = arith.constant 1 : i32
    %186 = arith.subi %c5_i32, %c1_i32_147 : i32
    %187 = arith.index_cast %186 : i32 to index
    %c0_148 = arith.constant 0 : index
    %c0_149 = arith.constant 0 : index
    %188 = vector.load %arg5[%187, %c0_148, %c0_149] : memref<8x8x128xf32, #tpu.memory_space<vmem>>, vector<1x8x128xf32>
    %189 = vector.shape_cast %188 : vector<1x8x128xf32> to vector<8x128xf32>
    %190 = vector.shape_cast %179 : vector<8x128xf32> to vector<1x8x128xf32>
    tpu.vector_store %arg5[%187, %c0_148, %c0_149], %190 {strides = array<i32>} : memref<8x8x128xf32, #tpu.memory_space<vmem>>, vector<1x8x128xf32>,
    %c6_i32 = arith.constant 6 : i32
    %c0_150 = arith.constant 0 : index
    %c0_151 = arith.constant 0 : index
    %c0_152 = arith.constant 0 : index
    %191 = vector.load %arg7[%c0_150, %c0_151, %c0_152] : memref<2x8x128xf32, #tpu.memory_space<vmem>>, vector<1x8x128xf32>
    %192 = vector.shape_cast %191 : vector<1x8x128xf32> to vector<8x128xf32>
    %c1_153 = arith.constant 1 : index
    %c0_154 = arith.constant 0 : index
    %c0_155 = arith.constant 0 : index
    %193 = vector.load %arg7[%c1_153, %c0_154, %c0_155] : memref<2x8x128xf32, #tpu.memory_space<vmem>>, vector<1x8x128xf32>
    %194 = vector.shape_cast %193 : vector<1x8x128xf32> to vector<8x128xf32>
    %c0_i32_156 = arith.constant 0 : i32
    %195 = arith.subi %c6_i32, %c0_i32_156 : i32
    %196 = arith.index_cast %195 : i32 to index
    %c0_157 = arith.constant 0 : index
    %c0_158 = arith.constant 0 : index
    %197 = vector.load %arg1[%196, %c0_157, %c0_158] : memref<8x8x128xbf16, #tpu.memory_space<vmem>>, vector<1x8x128xbf16>
    %198 = vector.shape_cast %197 : vector<1x8x128xbf16> to vector<8x128xbf16>
    %199 = arith.extf %198 : vector<8x128xbf16> to vector<8x128xf32>
    %200 = arith.truncf %192 : vector<8x128xf32> to vector<8x128xbf16>
    %c0_159 = arith.constant 0 : index
    %c0_160 = arith.constant 0 : index
    %201 = vector.load %arg3[%c0_159, %c0_160] : memref<128x128xbf16, #tpu.memory_space<vmem>>, vector<128x128xbf16>
    %cst_161 = arith.constant dense<0.000000e+00> : vector<8x128xf32>
    %202 = tpu.matmul %200, %201, %cst_161 {dimension_numbers = #tpu.dot_dimension_numbers<[1], [0], [0], [1], [0, 0, 1, 1], [], []>} : vector<8x128xbf16>, vector<128x128xbf16>, vector<8x128xf32> -> vector<8x128xf32>
    %203 = arith.addf %199, %202 : vector<8x128xf32>
    %204 = math.tanh %203 : vector<8x128xf32>
    %205 = tpu.concatenate %192, %194 in 1 : vector<8x128xf32>, vector<8x128xf32> -> vector<8x256xf32>
    %206 = arith.truncf %205 : vector<8x256xf32> to vector<8x256xbf16>
    %c0_162 = arith.constant 0 : index
    %c0_163 = arith.constant 0 : index
    %c0_164 = arith.constant 0 : index
    %207 = vector.load %arg2[%c0_162, %c0_163, %c0_164] : memref<1x256x128xbf16, #tpu.memory_space<vmem>>, vector<1x256x128xbf16>
    %208 = vector.shape_cast %207 : vector<1x256x128xbf16> to vector<256x128xbf16>
    %cst_165 = arith.constant dense<0.000000e+00> : vector<8x128xf32>
    %209 = tpu.matmul %206, %208, %cst_165 {dimension_numbers = #tpu.dot_dimension_numbers<[1], [0], [0], [1], [0, 0, 1, 1], [], []>} : vector<8x256xbf16>, vector<256x128xbf16>, vector<8x128xf32> -> vector<8x128xf32>
    %c0_166 = arith.constant 0 : index
    %c0_167 = arith.constant 0 : index
    %c0_168 = arith.constant 0 : index
    %210 = vector.load %arg4[%c0_166, %c0_167, %c0_168] : memref<1x1x128xf32, #tpu.memory_space<vmem>>, vector<1x1x128xf32>
    %211 = vector.shape_cast %210 : vector<1x1x128xf32> to vector<1x128xf32>
    %212 = vector.broadcast %211 : vector<1x128xf32> to vector<8x128xf32>
    %213 = arith.addf %209, %212 : vector<8x128xf32>
    %214 = math.tanh %213 : vector<8x128xf32>
    %c0_169 = arith.constant 0 : index
    %c0_170 = arith.constant 0 : index
    %c0_171 = arith.constant 0 : index
    %215 = vector.load %arg7[%c0_169, %c0_170, %c0_171] : memref<2x8x128xf32, #tpu.memory_space<vmem>>, vector<1x8x128xf32>
    %216 = vector.shape_cast %215 : vector<1x8x128xf32> to vector<8x128xf32>
    %217 = vector.shape_cast %204 : vector<8x128xf32> to vector<1x8x128xf32>
    tpu.vector_store %arg7[%c0_169, %c0_170, %c0_171], %217 {strides = array<i32>} : memref<2x8x128xf32, #tpu.memory_space<vmem>>, vector<1x8x128xf32>,
    %c1_172 = arith.constant 1 : index
    %c0_173 = arith.constant 0 : index
    %c0_174 = arith.constant 0 : index
    %218 = vector.load %arg7[%c1_172, %c0_173, %c0_174] : memref<2x8x128xf32, #tpu.memory_space<vmem>>, vector<1x8x128xf32>
    %219 = vector.shape_cast %218 : vector<1x8x128xf32> to vector<8x128xf32>
    %220 = vector.shape_cast %214 : vector<8x128xf32> to vector<1x8x128xf32>
    tpu.vector_store %arg7[%c1_172, %c0_173, %c0_174], %220 {strides = array<i32>} : memref<2x8x128xf32, #tpu.memory_space<vmem>>, vector<1x8x128xf32>,
    %c1_i32_175 = arith.constant 1 : i32
    %221 = arith.subi %c6_i32, %c1_i32_175 : i32
    %222 = arith.index_cast %221 : i32 to index
    %c0_176 = arith.constant 0 : index
    %c0_177 = arith.constant 0 : index
    %223 = vector.load %arg5[%222, %c0_176, %c0_177] : memref<8x8x128xf32, #tpu.memory_space<vmem>>, vector<1x8x128xf32>
    %224 = vector.shape_cast %223 : vector<1x8x128xf32> to vector<8x128xf32>
    %225 = vector.shape_cast %214 : vector<8x128xf32> to vector<1x8x128xf32>
    tpu.vector_store %arg5[%222, %c0_176, %c0_177], %225 {strides = array<i32>} : memref<8x8x128xf32, #tpu.memory_space<vmem>>, vector<1x8x128xf32>,
    %c7_i32 = arith.constant 7 : i32
    %c0_178 = arith.constant 0 : index
    %c0_179 = arith.constant 0 : index
    %c0_180 = arith.constant 0 : index
    %226 = vector.load %arg7[%c0_178, %c0_179, %c0_180] : memref<2x8x128xf32, #tpu.memory_space<vmem>>, vector<1x8x128xf32>
    %227 = vector.shape_cast %226 : vector<1x8x128xf32> to vector<8x128xf32>
    %c1_181 = arith.constant 1 : index
    %c0_182 = arith.constant 0 : index
    %c0_183 = arith.constant 0 : index
    %228 = vector.load %arg7[%c1_181, %c0_182, %c0_183] : memref<2x8x128xf32, #tpu.memory_space<vmem>>, vector<1x8x128xf32>
    %229 = vector.shape_cast %228 : vector<1x8x128xf32> to vector<8x128xf32>
    %c0_i32_184 = arith.constant 0 : i32
    %230 = arith.subi %c7_i32, %c0_i32_184 : i32
    %231 = arith.index_cast %230 : i32 to index
    %c0_185 = arith.constant 0 : index
    %c0_186 = arith.constant 0 : index
    %232 = vector.load %arg1[%231, %c0_185, %c0_186] : memref<8x8x128xbf16, #tpu.memory_space<vmem>>, vector<1x8x128xbf16>
    %233 = vector.shape_cast %232 : vector<1x8x128xbf16> to vector<8x128xbf16>
    %234 = arith.extf %233 : vector<8x128xbf16> to vector<8x128xf32>
    %235 = arith.truncf %227 : vector<8x128xf32> to vector<8x128xbf16>
    %c0_187 = arith.constant 0 : index
    %c0_188 = arith.constant 0 : index
    %236 = vector.load %arg3[%c0_187, %c0_188] : memref<128x128xbf16, #tpu.memory_space<vmem>>, vector<128x128xbf16>
    %cst_189 = arith.constant dense<0.000000e+00> : vector<8x128xf32>
    %237 = tpu.matmul %235, %236, %cst_189 {dimension_numbers = #tpu.dot_dimension_numbers<[1], [0], [0], [1], [0, 0, 1, 1], [], []>} : vector<8x128xbf16>, vector<128x128xbf16>, vector<8x128xf32> -> vector<8x128xf32>
    %238 = arith.addf %234, %237 : vector<8x128xf32>
    %239 = math.tanh %238 : vector<8x128xf32>
    %240 = tpu.concatenate %227, %229 in 1 : vector<8x128xf32>, vector<8x128xf32> -> vector<8x256xf32>
    %241 = arith.truncf %240 : vector<8x256xf32> to vector<8x256xbf16>
    %c0_190 = arith.constant 0 : index
    %c0_191 = arith.constant 0 : index
    %c0_192 = arith.constant 0 : index
    %242 = vector.load %arg2[%c0_190, %c0_191, %c0_192] : memref<1x256x128xbf16, #tpu.memory_space<vmem>>, vector<1x256x128xbf16>
    %243 = vector.shape_cast %242 : vector<1x256x128xbf16> to vector<256x128xbf16>
    %cst_193 = arith.constant dense<0.000000e+00> : vector<8x128xf32>
    %244 = tpu.matmul %241, %243, %cst_193 {dimension_numbers = #tpu.dot_dimension_numbers<[1], [0], [0], [1], [0, 0, 1, 1], [], []>} : vector<8x256xbf16>, vector<256x128xbf16>, vector<8x128xf32> -> vector<8x128xf32>
    %c0_194 = arith.constant 0 : index
    %c0_195 = arith.constant 0 : index
    %c0_196 = arith.constant 0 : index
    %245 = vector.load %arg4[%c0_194, %c0_195, %c0_196] : memref<1x1x128xf32, #tpu.memory_space<vmem>>, vector<1x1x128xf32>
    %246 = vector.shape_cast %245 : vector<1x1x128xf32> to vector<1x128xf32>
    %247 = vector.broadcast %246 : vector<1x128xf32> to vector<8x128xf32>
    %248 = arith.addf %244, %247 : vector<8x128xf32>
    %249 = math.tanh %248 : vector<8x128xf32>
    %c0_197 = arith.constant 0 : index
    %c0_198 = arith.constant 0 : index
    %c0_199 = arith.constant 0 : index
    %250 = vector.load %arg7[%c0_197, %c0_198, %c0_199] : memref<2x8x128xf32, #tpu.memory_space<vmem>>, vector<1x8x128xf32>
    %251 = vector.shape_cast %250 : vector<1x8x128xf32> to vector<8x128xf32>
    %252 = vector.shape_cast %239 : vector<8x128xf32> to vector<1x8x128xf32>
    tpu.vector_store %arg7[%c0_197, %c0_198, %c0_199], %252 {strides = array<i32>} : memref<2x8x128xf32, #tpu.memory_space<vmem>>, vector<1x8x128xf32>,
    %c1_200 = arith.constant 1 : index
    %c0_201 = arith.constant 0 : index
    %c0_202 = arith.constant 0 : index
    %253 = vector.load %arg7[%c1_200, %c0_201, %c0_202] : memref<2x8x128xf32, #tpu.memory_space<vmem>>, vector<1x8x128xf32>
    %254 = vector.shape_cast %253 : vector<1x8x128xf32> to vector<8x128xf32>
    %255 = vector.shape_cast %249 : vector<8x128xf32> to vector<1x8x128xf32>
    tpu.vector_store %arg7[%c1_200, %c0_201, %c0_202], %255 {strides = array<i32>} : memref<2x8x128xf32, #tpu.memory_space<vmem>>, vector<1x8x128xf32>,
    %c1_i32_203 = arith.constant 1 : i32
    %256 = arith.subi %c7_i32, %c1_i32_203 : i32
    %257 = arith.index_cast %256 : i32 to index
    %c0_204 = arith.constant 0 : index
    %c0_205 = arith.constant 0 : index
    %258 = vector.load %arg5[%257, %c0_204, %c0_205] : memref<8x8x128xf32, #tpu.memory_space<vmem>>, vector<1x8x128xf32>
    %259 = vector.shape_cast %258 : vector<1x8x128xf32> to vector<8x128xf32>
    %260 = vector.shape_cast %249 : vector<8x128xf32> to vector<1x8x128xf32>
    tpu.vector_store %arg5[%257, %c0_204, %c0_205], %260 {strides = array<i32>} : memref<8x8x128xf32, #tpu.memory_space<vmem>>, vector<1x8x128xf32>,
    %c7_i32_206 = arith.constant 7 : i32
    %c0_207 = arith.constant 0 : index
    %c0_208 = arith.constant 0 : index
    %c0_209 = arith.constant 0 : index
    %261 = vector.load %arg7[%c0_207, %c0_208, %c0_209] : memref<2x8x128xf32, #tpu.memory_space<vmem>>, vector<1x8x128xf32>
    %262 = vector.shape_cast %261 : vector<1x8x128xf32> to vector<8x128xf32>
    %c1_210 = arith.constant 1 : index
    %c0_211 = arith.constant 0 : index
    %c0_212 = arith.constant 0 : index
    %263 = vector.load %arg7[%c1_210, %c0_211, %c0_212] : memref<2x8x128xf32, #tpu.memory_space<vmem>>, vector<1x8x128xf32>
    %264 = vector.shape_cast %263 : vector<1x8x128xf32> to vector<8x128xf32>
    %265 = tpu.concatenate %262, %264 in 1 : vector<8x128xf32>, vector<8x128xf32> -> vector<8x256xf32>
    %266 = arith.truncf %265 : vector<8x256xf32> to vector<8x256xbf16>
    %c0_213 = arith.constant 0 : index
    %c0_214 = arith.constant 0 : index
    %c0_215 = arith.constant 0 : index
    %267 = vector.load %arg2[%c0_213, %c0_214, %c0_215] : memref<1x256x128xbf16, #tpu.memory_space<vmem>>, vector<1x256x128xbf16>
    %268 = vector.shape_cast %267 : vector<1x256x128xbf16> to vector<256x128xbf16>
    %cst_216 = arith.constant dense<0.000000e+00> : vector<8x128xf32>
    %269 = tpu.matmul %266, %268, %cst_216 {dimension_numbers = #tpu.dot_dimension_numbers<[1], [0], [0], [1], [0, 0, 1, 1], [], []>} : vector<8x256xbf16>, vector<256x128xbf16>, vector<8x128xf32> -> vector<8x128xf32>
    %c0_217 = arith.constant 0 : index
    %c0_218 = arith.constant 0 : index
    %c0_219 = arith.constant 0 : index
    %270 = vector.load %arg4[%c0_217, %c0_218, %c0_219] : memref<1x1x128xf32, #tpu.memory_space<vmem>>, vector<1x1x128xf32>
    %271 = vector.shape_cast %270 : vector<1x1x128xf32> to vector<1x128xf32>
    %272 = vector.broadcast %271 : vector<1x128xf32> to vector<8x128xf32>
    %273 = arith.addf %269, %272 : vector<8x128xf32>
    %274 = math.tanh %273 : vector<8x128xf32>
    %c1_220 = arith.constant 1 : index
    %c0_221 = arith.constant 0 : index
    %c0_222 = arith.constant 0 : index
    %275 = vector.load %arg7[%c1_220, %c0_221, %c0_222] : memref<2x8x128xf32, #tpu.memory_space<vmem>>, vector<1x8x128xf32>
    %276 = vector.shape_cast %275 : vector<1x8x128xf32> to vector<8x128xf32>
    %277 = vector.shape_cast %274 : vector<8x128xf32> to vector<1x8x128xf32>
    tpu.vector_store %arg7[%c1_220, %c0_221, %c0_222], %277 {strides = array<i32>} : memref<2x8x128xf32, #tpu.memory_space<vmem>>, vector<1x8x128xf32>,
    %c7 = arith.constant 7 : index
    %c0_223 = arith.constant 0 : index
    %c0_224 = arith.constant 0 : index
    %278 = vector.load %arg5[%c7, %c0_223, %c0_224] : memref<8x8x128xf32, #tpu.memory_space<vmem>>, vector<1x8x128xf32>
    %279 = vector.shape_cast %278 : vector<1x8x128xf32> to vector<8x128xf32>
    %280 = vector.shape_cast %274 : vector<8x128xf32> to vector<1x8x128xf32>
    tpu.vector_store %arg5[%c7, %c0_223, %c0_224], %280 {strides = array<i32>} : memref<8x8x128xf32, #tpu.memory_space<vmem>>, vector<1x8x128xf32>,
    %c0_i32_225 = arith.constant 0 : i32
    %281 = arith.cmpi eq, %arg0, %c0_i32_225 : i32
    %282 = arith.extui %281 : i1 to i32
    %c0_i32_226 = arith.constant 0 : i32
    %283 = arith.cmpi ne, %282, %c0_i32_226 : i32
    scf.if %283 {
      %c0_227 = arith.constant 0 : index
      %c0_228 = arith.constant 0 : index
      %c0_229 = arith.constant 0 : index
      %284 = vector.load %arg7[%c0_227, %c0_228, %c0_229] : memref<2x8x128xf32, #tpu.memory_space<vmem>>, vector<2x8x128xf32>
      %c0_230 = arith.constant 0 : index
      %c0_231 = arith.constant 0 : index
      %c0_232 = arith.constant 0 : index
      %285 = vector.load %arg6[%c0_230, %c0_231, %c0_232] : memref<2x8x128xf32, #tpu.memory_space<vmem>>, vector<2x8x128xf32>
      tpu.vector_store %arg6[%c0_230, %c0_231, %c0_232], %284 {strides = array<i32>} : memref<2x8x128xf32, #tpu.memory_space<vmem>>, vector<2x8x128xf32>,
    } else {
    }
    return
  }
  func.func @transform_0(%arg0: i32) -> (i32, i32, i32) {
    %c0_i32 = arith.constant 0 : i32
    %c0_i32_0 = arith.constant 0 : i32
    %c0_i32_1 = arith.constant 0 : i32
    return %arg0, %c0_i32, %c0_i32_0 : i32, i32, i32
  }
  func.func @transform_1(%arg0: i32) -> (i32, i32, i32) {
    %c0_i32 = arith.constant 0 : i32
    %c0_i32_0 = arith.constant 0 : i32
    %c0_i32_1 = arith.constant 0 : i32
    %c0_i32_2 = arith.constant 0 : i32
    return %c0_i32, %c0_i32_0, %c0_i32_1 : i32, i32, i32
  }
  func.func @transform_2(%arg0: i32) -> (i32, i32) {
    %c0_i32 = arith.constant 0 : i32
    %c0_i32_0 = arith.constant 0 : i32
    %c0_i32_1 = arith.constant 0 : i32
    return %c0_i32, %c0_i32_0 : i32, i32
  }
  func.func @transform_3(%arg0: i32) -> (i32, i32, i32) {
    %c0_i32 = arith.constant 0 : i32
    %c0_i32_0 = arith.constant 0 : i32
    %c0_i32_1 = arith.constant 0 : i32
    %c0_i32_2 = arith.constant 0 : i32
    return %c0_i32, %c0_i32_0, %c0_i32_1 : i32, i32, i32
  }
  func.func @transform_4(%arg0: i32) -> (i32, i32, i32) {
    %c0_i32 = arith.constant 0 : i32
    %c0_i32_0 = arith.constant 0 : i32
    %c0_i32_1 = arith.constant 0 : i32
    return %arg0, %c0_i32, %c0_i32_0 : i32, i32, i32
  }
  func.func @transform_5(%arg0: i32) -> (i32, i32, i32) {
    %c0_i32 = arith.constant 0 : i32
    %c0_i32_0 = arith.constant 0 : i32
    %c0_i32_1 = arith.constant 0 : i32
    %c0_i32_2 = arith.constant 0 : i32
    return %c0_i32, %c0_i32_0, %c0_i32_1 : i32, i32, i32
  }
}

</mosaic_0001>

<llo_original>
// kernel: encoder_forward.1
$region0: #{encoder_forward.1}
  #allocation0 [shape = 'u32[]', space=smem, size = 0x4, offset = 0x4, fixed_abs, tag = 'smem constant byte address 0x4 - core index']
  #allocation1 [shape = 'u32[72,128]{1,0:T(1,128)}', space=vmem, size = 0x9000, scoped, tag = 'internal scratch']
  #allocation2 [shape = 'f32[2,8,128]{2,1,0:T(8,128)}', space=vmem, size = 0x2000, scoped, tag = 'scratch operand']
  %s0 = inlined_call_operand.vmem [shape: bf16[8,8,128], index: 0, kind: input, shape index: {}]
  %s1 = inlined_call_operand.vmem [shape: bf16[1,256,128], index: 1, kind: input, shape index: {}]
  %s2 = inlined_call_operand.vmem [shape: bf16[128,128], index: 2, kind: input, shape index: {}]
  %s3 = inlined_call_operand.vmem [shape: f32[1,1,128], index: 3, kind: input, shape index: {}]
  %s4 = inlined_call_operand.vmem [shape: f32[8,8,128], index: 4, kind: output, shape index: {0}]
  %s5 = inlined_call_operand.vmem [shape: f32[2,8,128], index: 5, kind: output, shape index: {1}]
  %6 = xla_tuple %s4, %s5
  %s7 = sld [smem:[#allocation0]]
  $region42: #{encoder_forward.1} parent=0
    _
  %s9 = ssub.s32 1, %s7
  %s10 = scalar_select 0, %s9, %s7
  // Predicated region
  $region2: #{encoder_forward.1} parent=0 // pred_check
    _
  $region3: #{encoder_forward.1} parent=0 // pred_check_branch
    %12 = sbr.rel (0) target = $region5
  $region4: #{encoder_forward.1} parent=0 // pred_region
    _
  $region5: #{encoder_forward.1} parent=0 // pred_fallthru
    _
  // Predicated region
  $region6: #{encoder_forward.1} parent=0 // pred_check
    _
  $region7: #{encoder_forward.1} parent=0 // pred_check_branch
    %14 = sbr.rel (0) target = $region9
  $region8: #{encoder_forward.1} parent=0 // pred_region
    _
  $region9: #{encoder_forward.1} parent=0 // pred_fallthru
    _
  // Predicated region
  $region10: #{encoder_forward.1} parent=0 // pred_check
    _
  $region11: #{encoder_forward.1} parent=0 // pred_check_branch
    %16 = sbr.rel (0) target = $region13
  $region12: #{encoder_forward.1} parent=0 // pred_region
    _
  $region13: #{encoder_forward.1} parent=0 // pred_fallthru
    _
  // Predicated region
  $region14: #{encoder_forward.1} parent=0 // pred_check
    _
  $region15: #{encoder_forward.1} parent=0 // pred_check_branch
    %18 = sbr.rel (0) target = $region17
  $region16: #{encoder_forward.1} parent=0 // pred_region
    _
  $region17: #{encoder_forward.1} parent=0 // pred_fallthru
    _
  %p19 = scmp.eq.s32.totalorder 0, 0
  // Predicated region
  $region18: #{encoder_forward.1} parent=0 // pred_check
    %p20 = pneg %p19
  $region19: #{encoder_forward.1} parent=0 // pred_check_branch
    %22 = sbr.rel (%p20) target = $region21
  $region20: #{encoder_forward.1} parent=0 // pred_region
    %23 = vst [vmem:[#allocation2] sm:$0xff] 0.0
    %24 = vst [vmem:[#allocation2 + $0x8] sm:$0xff] 0.0
  $region21: #{encoder_forward.1} parent=0 // pred_fallthru
    _
  %v25 = vld [vmem:[#allocation2] sm:$0xff]
  %v26 = vld [vmem:[%s0] sm:$0xf]
  %v27 = vunpack.c.l.bf16 %v26
  %v28 = vpack.c.bf16 %v25, %v25
  %v29 = vld [vmem:[%s2] sm:$0xf]
  %v30 = vld [vmem:[%s2 + $0x4] sm:$0xf]
  %v31 = vld [vmem:[%s2 + $0x8] sm:$0xf]
  %v32 = vld [vmem:[%s2 + $0xc] sm:$0xf]
  %v33 = vld [vmem:[%s2 + $0x10] sm:$0xf]
  %v34 = vld [vmem:[%s2 + $0x14] sm:$0xf]
  %v35 = vld [vmem:[%s2 + $0x18] sm:$0xf]
  %v36 = vld [vmem:[%s2 + $0x1c] sm:$0xf]
  %v37 = vld [vmem:[%s2 + $0x20] sm:$0xf]
  %v38 = vld [vmem:[%s2 + $0x24] sm:$0xf]
  %v39 = vld [vmem:[%s2 + $0x28] sm:$0xf]
  %v40 = vld [vmem:[%s2 + $0x2c] sm:$0xf]
  %v41 = vld [vmem:[%s2 + $0x30] sm:$0xf]
  %v42 = vld [vmem:[%s2 + $0x34] sm:$0xf]
  %v43 = vld [vmem:[%s2 + $0x38] sm:$0xf]
  %v44 = vld [vmem:[%s2 + $0x3c] sm:$0xf]
  %v61 = vunpack.c.l.b16 %v29
  %v62 = vunpack.c.l.b16 %v30
  %v63 = vunpack.c.l.b16 %v31
  %v64 = vunpack.c.l.b16 %v32
  %v65 = vunpack.c.l.b16 %v33
  %v66 = vunpack.c.l.b16 %v34
  %v67 = vunpack.c.l.b16 %v35
  %v68 = vunpack.c.l.b16 %v36
  %v69 = vunpack.c.l.b16 %v37
  %v70 = vunpack.c.l.b16 %v38
  %v71 = vunpack.c.l.b16 %v39
  %v72 = vunpack.c.l.b16 %v40
  %v73 = vunpack.c.l.b16 %v41
  %v74 = vunpack.c.l.b16 %v42
  %v75 = vunpack.c.l.b16 %v43
  %v76 = vunpack.c.l.b16 %v44
  %v77 = vpack.c.b16 %v62, %v61
  %v78 = vpack.c.b16 %v64, %v63
  %v79 = vpack.c.b16 %v66, %v65
  %v80 = vpack.c.b16 %v68, %v67
  %v81 = vpack.c.b16 %v70, %v69
  %v82 = vpack.c.b16 %v72, %v71
  %v83 = vpack.c.b16 %v74, %v73
  %v84 = vpack.c.b16 %v76, %v75
  %93 = vmatpush.bf16.msra.mxu0 %v84
  %94 = vmatpush.bf16.msra.mxu0 %v83
  %95 = vmatpush.bf16.msra.mxu0 %v82
  %96 = vmatpush.bf16.msra.mxu0 %v81
  %97 = vmatpush.bf16.msra.mxu0 %v80
  %98 = vmatpush.bf16.msra.mxu0 %v79
  %99 = vmatpush.bf16.msra.mxu0 %v78
  %100 = vmatpush.bf16.msra.mxu0 %v77
  %101 = vmatmul.bf16.gmra.mxu0 %v28
  %v102 = vpop.f32.mrf.mxu0
  %v103 = vadd.f32 0.0, %v102
  %v104 = vpop.f32.mrf.mxu0
  %105 = vdwg.mxu0
  %v106 = vadd.f32 %v27, %v103
  %v107 = vtanh.pop %v106
  %108 = vst [vmem:[#allocation2] sm:$0xff] %v107
  %v109 = vld [vmem:[#allocation2] sm:$0xff]
  %s110 = scalar_lea.vmem [#allocation2], 8
  %v111 = vld [vmem:[%s110] sm:$0xff]
  %s112 = scalar_lea.vmem %s0, 4
  %v113 = vld [vmem:[%s112] sm:$0xf]
  %v114 = vunpack.c.l.bf16 %v113
  %v115 = vpack.c.bf16 %v109, %v109
  %v116 = vld [vmem:[%s2] sm:$0xf]
  %v117 = vld [vmem:[%s2 + $0x4] sm:$0xf]
  %v118 = vld [vmem:[%s2 + $0x8] sm:$0xf]
  %v119 = vld [vmem:[%s2 + $0xc] sm:$0xf]
  %v120 = vld [vmem:[%s2 + $0x10] sm:$0xf]
  %v121 = vld [vmem:[%s2 + $0x14] sm:$0xf]
  %v122 = vld [vmem:[%s2 + $0x18] sm:$0xf]
  %v123 = vld [vmem:[%s2 + $0x1c] sm:$0xf]
  %v124 = vld [vmem:[%s2 + $0x20] sm:$0xf]
  %v125 = vld [vmem:[%s2 + $0x24] sm:$0xf]
  %v126 = vld [vmem:[%s2 + $0x28] sm:$0xf]
  %v127 = vld [vmem:[%s2 + $0x2c] sm:$0xf]
  %v128 = vld [vmem:[%s2 + $0x30] sm:$0xf]
  %v129 = vld [vmem:[%s2 + $0x34] sm:$0xf]
  %v130 = vld [vmem:[%s2 + $0x38] sm:$0xf]
  %v131 = vld [vmem:[%s2 + $0x3c] sm:$0xf]
  %v148 = vunpack.c.l.b16 %v116
  %v149 = vunpack.c.l.b16 %v117
  %v150 = vunpack.c.l.b16 %v118
  %v151 = vunpack.c.l.b16 %v119
  %v152 = vunpack.c.l.b16 %v120
  %v153 = vunpack.c.l.b16 %v121
  %v154 = vunpack.c.l.b16 %v122
  %v155 = vunpack.c.l.b16 %v123
  %v156 = vunpack.c.l.b16 %v124
  %v157 = vunpack.c.l.b16 %v125
  %v158 = vunpack.c.l.b16 %v126
  %v159 = vunpack.c.l.b16 %v127
  %v160 = vunpack.c.l.b16 %v128
  %v161 = vunpack.c.l.b16 %v129
  %v162 = vunpack.c.l.b16 %v130
  %v163 = vunpack.c.l.b16 %v131
  %v164 = vpack.c.b16 %v149, %v148
  %v165 = vpack.c.b16 %v151, %v150
  %v166 = vpack.c.b16 %v153, %v152
  %v167 = vpack.c.b16 %v155, %v154
  %v168 = vpack.c.b16 %v157, %v156
  %v169 = vpack.c.b16 %v159, %v158
  %v170 = vpack.c.b16 %v161, %v160
  %v171 = vpack.c.b16 %v163, %v162
  %180 = vmatpush.bf16.msra.mxu0 %v171
  %181 = vmatpush.bf16.msra.mxu0 %v170
  %182 = vmatpush.bf16.msra.mxu0 %v169
  %183 = vmatpush.bf16.msra.mxu0 %v168
  %184 = vmatpush.bf16.msra.mxu0 %v167
  %185 = vmatpush.bf16.msra.mxu0 %v166
  %186 = vmatpush.bf16.msra.mxu0 %v165
  %187 = vmatpush.bf16.msra.mxu0 %v164
  %188 = vmatmul.bf16.gmra.mxu0 %v115
  %v189 = vpop.f32.mrf.mxu0
  %v190 = vadd.f32 0.0, %v189
  %v191 = vpop.f32.mrf.mxu0
  %192 = vdwg.mxu0
  %v193 = vadd.f32 %v114, %v190
  %v194 = vtanh.pop %v193
  %v195 = vpack.c.bf16 %v111, %v111
  %v196 = vld [vmem:[%s1] sm:$0xf]
  %v197 = vld [vmem:[%s1 + $0x4] sm:$0xf]
  %v198 = vld [vmem:[%s1 + $0x8] sm:$0xf]
  %v199 = vld [vmem:[%s1 + $0xc] sm:$0xf]
  %v200 = vld [vmem:[%s1 + $0x10] sm:$0xf]
  %v201 = vld [vmem:[%s1 + $0x14] sm:$0xf]
  %v202 = vld [vmem:[%s1 + $0x18] sm:$0xf]
  %v203 = vld [vmem:[%s1 + $0x1c] sm:$0xf]
  %v204 = vld [vmem:[%s1 + $0x20] sm:$0xf]
  %v205 = vld [vmem:[%s1 + $0x24] sm:$0xf]
  %v206 = vld [vmem:[%s1 + $0x28] sm:$0xf]
  %v207 = vld [vmem:[%s1 + $0x2c] sm:$0xf]
  %v208 = vld [vmem:[%s1 + $0x30] sm:$0xf]
  %v209 = vld [vmem:[%s1 + $0x34] sm:$0xf]
  %v210 = vld [vmem:[%s1 + $0x38] sm:$0xf]
  %v211 = vld [vmem:[%s1 + $0x3c] sm:$0xf]
  %v212 = vld [vmem:[%s1 + $0x40] sm:$0xf]
  %v213 = vld [vmem:[%s1 + $0x44] sm:$0xf]
  %v214 = vld [vmem:[%s1 + $0x48] sm:$0xf]
  %v215 = vld [vmem:[%s1 + $0x4c] sm:$0xf]
  %v216 = vld [vmem:[%s1 + $0x50] sm:$0xf]
  %v217 = vld [vmem:[%s1 + $0x54] sm:$0xf]
  %v218 = vld [vmem:[%s1 + $0x58] sm:$0xf]
  %v219 = vld [vmem:[%s1 + $0x5c] sm:$0xf]
  %v220 = vld [vmem:[%s1 + $0x60] sm:$0xf]
  %v221 = vld [vmem:[%s1 + $0x64] sm:$0xf]
  %v222 = vld [vmem:[%s1 + $0x68] sm:$0xf]
  %v223 = vld [vmem:[%s1 + $0x6c] sm:$0xf]
  %v224 = vld [vmem:[%s1 + $0x70] sm:$0xf]
  %v225 = vld [vmem:[%s1 + $0x74] sm:$0xf]
  %v226 = vld [vmem:[%s1 + $0x78] sm:$0xf]
  %v227 = vld [vmem:[%s1 + $0x7c] sm:$0xf]
  %v228 = vld [vmem:[%s3] sm:$0x1]
  %v230 = vperm.slane %v228, 0
  %v264 = vunpack.c.l.b16 %v196
  %v265 = vunpack.c.l.b16 %v197
  %v266 = vunpack.c.l.b16 %v198
  %v267 = vunpack.c.l.b16 %v199
  %v268 = vunpack.c.l.b16 %v200
  %v269 = vunpack.c.l.b16 %v201
  %v270 = vunpack.c.l.b16 %v202
  %v271 = vunpack.c.l.b16 %v203
  %v272 = vunpack.c.l.b16 %v204
  %v273 = vunpack.c.l.b16 %v205
  %v274 = vunpack.c.l.b16 %v206
  %v275 = vunpack.c.l.b16 %v207
  %v276 = vunpack.c.l.b16 %v208
  %v277 = vunpack.c.l.b16 %v209
  %v278 = vunpack.c.l.b16 %v210
  %v279 = vunpack.c.l.b16 %v211
  %v280 = vunpack.c.l.b16 %v212
  %v281 = vunpack.c.l.b16 %v213
  %v282 = vunpack.c.l.b16 %v214
  %v283 = vunpack.c.l.b16 %v215
  %v284 = vunpack.c.l.b16 %v216
  %v285 = vunpack.c.l.b16 %v217
  %v286 = vunpack.c.l.b16 %v218
  %v287 = vunpack.c.l.b16 %v219
  %v288 = vunpack.c.l.b16 %v220
  %v289 = vunpack.c.l.b16 %v221
  %v290 = vunpack.c.l.b16 %v222
  %v291 = vunpack.c.l.b16 %v223
  %v292 = vunpack.c.l.b16 %v224
  %v293 = vunpack.c.l.b16 %v225
  %v294 = vunpack.c.l.b16 %v226
  %v295 = vunpack.c.l.b16 %v227
  %v296 = vpack.c.b16 %v265, %v264
  %v297 = vpack.c.b16 %v267, %v266
  %v298 = vpack.c.b16 %v269, %v268
  %v299 = vpack.c.b16 %v271, %v270
  %v300 = vpack.c.b16 %v273, %v272
  %v301 = vpack.c.b16 %v275, %v274
  %v302 = vpack.c.b16 %v277, %v276
  %v303 = vpack.c.b16 %v279, %v278
  %v304 = vpack.c.b16 %v281, %v280
  %v305 = vpack.c.b16 %v283, %v282
  %v306 = vpack.c.b16 %v285, %v284
  %v307 = vpack.c.b16 %v287, %v286
  %v308 = vpack.c.b16 %v289, %v288
  %v309 = vpack.c.b16 %v291, %v290
  %v310 = vpack.c.b16 %v293, %v292
  %v311 = vpack.c.b16 %v295, %v294
  %328 = vmatpush.bf16.msra.mxu0 %v303
  %329 = vmatpush.bf16.msra.mxu0 %v302
  %330 = vmatpush.bf16.msra.mxu0 %v301
  %331 = vmatpush.bf16.msra.mxu0 %v300
  %332 = vmatpush.bf16.msra.mxu0 %v299
  %333 = vmatpush.bf16.msra.mxu0 %v298
  %334 = vmatpush.bf16.msra.mxu0 %v297
  %335 = vmatpush.bf16.msra.mxu0 %v296
  %336 = vmatmul.bf16.gmra.mxu0 %v115
  %v337 = vpop.f32.mrf.mxu0
  %v338 = vadd.f32 %v230, %v337
  %v339 = vpop.f32.mrf.mxu0
  %340 = vdwg.mxu0
  %341 = vmatpush.bf16.msra.mxu0 %v311
  %342 = vmatpush.bf16.msra.mxu0 %v310
  %343 = vmatpush.bf16.msra.mxu0 %v309
  %344 = vmatpush.bf16.msra.mxu0 %v308
  %345 = vmatpush.bf16.msra.mxu0 %v307
  %346 = vmatpush.bf16.msra.mxu0 %v306
  %347 = vmatpush.bf16.msra.mxu0 %v305
  %348 = vmatpush.bf16.msra.mxu0 %v304
  %349 = vmatmul.bf16.gmra.mxu0 %v195
  %v350 = vpop.f32.mrf.mxu0
  %v351 = vadd.f32 %v338, %v350
  %v352 = vpop.f32.mrf.mxu0
  %353 = vdwg.mxu0
  %v354 = vtanh.pop %v351
  %355 = vst [vmem:[#allocation2] sm:$0xff] %v194
  %356 = vst [vmem:[%s110] sm:$0xff] %v354
  %357 = vst [vmem:[%s4] sm:$0xff] %v354
  %v358 = vld [vmem:[#allocation2] sm:$0xff]
  %v359 = vld [vmem:[%s110] sm:$0xff]
  %s360 = scalar_lea.vmem %s0, 8
  %v361 = vld [vmem:[%s360] sm:$0xf]
  %v362 = vunpack.c.l.bf16 %v361
  %v363 = vpack.c.bf16 %v358, %v358
  %v364 = vld [vmem:[%s2] sm:$0xf]
  %v365 = vld [vmem:[%s2 + $0x4] sm:$0xf]
  %v366 = vld [vmem:[%s2 + $0x8] sm:$0xf]
  %v367 = vld [vmem:[%s2 + $0xc] sm:$0xf]
  %v368 = vld [vmem:[%s2 + $0x10] sm:$0xf]
  %v369 = vld [vmem:[%s2 + $0x14] sm:$0xf]
  %v370 = vld [vmem:[%s2 + $0x18] sm:$0xf]
  %v371 = vld [vmem:[%s2 + $0x1c] sm:$0xf]
  %v372 = vld [vmem:[%s2 + $0x20] sm:$0xf]
  %v373 = vld [vmem:[%s2 + $0x24] sm:$0xf]
  %v374 = vld [vmem:[%s2 + $0x28] sm:$0xf]
  %v375 = vld [vmem:[%s2 + $0x2c] sm:$0xf]
  %v376 = vld [vmem:[%s2 + $0x30] sm:$0xf]
  %v377 = vld [vmem:[%s2 + $0x34] sm:$0xf]
  %v378 = vld [vmem:[%s2 + $0x38] sm:$0xf]
  %v379 = vld [vmem:[%s2 + $0x3c] sm:$0xf]
  %v396 = vunpack.c.l.b16 %v364
  %v397 = vunpack.c.l.b16 %v365
  %v398 = vunpack.c.l.b16 %v366
  %v399 = vunpack.c.l.b16 %v367
  %v400 = vunpack.c.l.b16 %v368
  %v401 = vunpack.c.l.b16 %v369
  %v402 = vunpack.c.l.b16 %v370
  %v403 = vunpack.c.l.b16 %v371
  %v404 = vunpack.c.l.b16 %v372
  %v405 = vunpack.c.l.b16 %v373
  %v406 = vunpack.c.l.b16 %v374
  %v407 = vunpack.c.l.b16 %v375
  %v408 = vunpack.c.l.b16 %v376
  %v409 = vunpack.c.l.b16 %v377
  %v410 = vunpack.c.l.b16 %v378
  %v411 = vunpack.c.l.b16 %v379
  %v412 = vpack.c.b16 %v397, %v396
  %v413 = vpack.c.b16 %v399, %v398
  %v414 = vpack.c.b16 %v401, %v400
  %v415 = vpack.c.b16 %v403, %v402
  %v416 = vpack.c.b16 %v405, %v404
  %v417 = vpack.c.b16 %v407, %v406
  %v418 = vpack.c.b16 %v409, %v408
  %v419 = vpack.c.b16 %v411, %v410
  %428 = vmatpush.bf16.msra.mxu0 %v419
  %429 = vmatpush.bf16.msra.mxu0 %v418
  %430 = vmatpush.bf16.msra.mxu0 %v417
  %431 = vmatpush.bf16.msra.mxu0 %v416
  %432 = vmatpush.bf16.msra.mxu0 %v415
  %433 = vmatpush.bf16.msra.mxu0 %v414
  %434 = vmatpush.bf16.msra.mxu0 %v413
  %435 = vmatpush.bf16.msra.mxu0 %v412
  %436 = vmatmul.bf16.gmra.mxu0 %v363
  %v437 = vpop.f32.mrf.mxu0
  %v438 = vadd.f32 0.0, %v437
  %v439 = vpop.f32.mrf.mxu0
  %440 = vdwg.mxu0
  %v441 = vadd.f32 %v362, %v438
  %v442 = vtanh.pop %v441
  %v443 = vpack.c.bf16 %v359, %v359
  %v444 = vld [vmem:[%s1] sm:$0xf]
  %v445 = vld [vmem:[%s1 + $0x4] sm:$0xf]
  %v446 = vld [vmem:[%s1 + $0x8] sm:$0xf]
  %v447 = vld [vmem:[%s1 + $0xc] sm:$0xf]
  %v448 = vld [vmem:[%s1 + $0x10] sm:$0xf]
  %v449 = vld [vmem:[%s1 + $0x14] sm:$0xf]
  %v450 = vld [vmem:[%s1 + $0x18] sm:$0xf]
  %v451 = vld [vmem:[%s1 + $0x1c] sm:$0xf]
  %v452 = vld [vmem:[%s1 + $0x20] sm:$0xf]
  %v453 = vld [vmem:[%s1 + $0x24] sm:$0xf]
  %v454 = vld [vmem:[%s1 + $0x28] sm:$0xf]
  %v455 = vld [vmem:[%s1 + $0x2c] sm:$0xf]
  %v456 = vld [vmem:[%s1 + $0x30] sm:$0xf]
  %v457 = vld [vmem:[%s1 + $0x34] sm:$0xf]
  %v458 = vld [vmem:[%s1 + $0x38] sm:$0xf]
  %v459 = vld [vmem:[%s1 + $0x3c] sm:$0xf]
  %v460 = vld [vmem:[%s1 + $0x40] sm:$0xf]
  %v461 = vld [vmem:[%s1 + $0x44] sm:$0xf]
  %v462 = vld [vmem:[%s1 + $0x48] sm:$0xf]
  %v463 = vld [vmem:[%s1 + $0x4c] sm:$0xf]
  %v464 = vld [vmem:[%s1 + $0x50] sm:$0xf]
  %v465 = vld [vmem:[%s1 + $0x54] sm:$0xf]
  %v466 = vld [vmem:[%s1 + $0x58] sm:$0xf]
  %v467 = vld [vmem:[%s1 + $0x5c] sm:$0xf]
  %v468 = vld [vmem:[%s1 + $0x60] sm:$0xf]
  %v469 = vld [vmem:[%s1 + $0x64] sm:$0xf]
  %v470 = vld [vmem:[%s1 + $0x68] sm:$0xf]
  %v471 = vld [vmem:[%s1 + $0x6c] sm:$0xf]
  %v472 = vld [vmem:[%s1 + $0x70] sm:$0xf]
  %v473 = vld [vmem:[%s1 + $0x74] sm:$0xf]
  %v474 = vld [vmem:[%s1 + $0x78] sm:$0xf]
  %v475 = vld [vmem:[%s1 + $0x7c] sm:$0xf]
  %v476 = vld [vmem:[%s3] sm:$0x1]
  %v478 = vperm.slane %v476, 0
  %v512 = vunpack.c.l.b16 %v444
  %v513 = vunpack.c.l.b16 %v445
  %v514 = vunpack.c.l.b16 %v446
  %v515 = vunpack.c.l.b16 %v447
  %v516 = vunpack.c.l.b16 %v448
  %v517 = vunpack.c.l.b16 %v449
  %v518 = vunpack.c.l.b16 %v450
  %v519 = vunpack.c.l.b16 %v451
  %v520 = vunpack.c.l.b16 %v452
  %v521 = vunpack.c.l.b16 %v453
  %v522 = vunpack.c.l.b16 %v454
  %v523 = vunpack.c.l.b16 %v455
  %v524 = vunpack.c.l.b16 %v456
  %v525 = vunpack.c.l.b16 %v457
  %v526 = vunpack.c.l.b16 %v458
  %v527 = vunpack.c.l.b16 %v459
  %v528 = vunpack.c.l.b16 %v460
  %v529 = vunpack.c.l.b16 %v461
  %v530 = vunpack.c.l.b16 %v462
  %v531 = vunpack.c.l.b16 %v463
  %v532 = vunpack.c.l.b16 %v464
  %v533 = vunpack.c.l.b16 %v465
  %v534 = vunpack.c.l.b16 %v466
  %v535 = vunpack.c.l.b16 %v467
  %v536 = vunpack.c.l.b16 %v468
  %v537 = vunpack.c.l.b16 %v469
  %v538 = vunpack.c.l.b16 %v470
  %v539 = vunpack.c.l.b16 %v471
  %v540 = vunpack.c.l.b16 %v472
  %v541 = vunpack.c.l.b16 %v473
  %v542 = vunpack.c.l.b16 %v474
  %v543 = vunpack.c.l.b16 %v475
  %v544 = vpack.c.b16 %v513, %v512
  %v545 = vpack.c.b16 %v515, %v514
  %v546 = vpack.c.b16 %v517, %v516
  %v547 = vpack.c.b16 %v519, %v518
  %v548 = vpack.c.b16 %v521, %v520
  %v549 = vpack.c.b16 %v523, %v522
  %v550 = vpack.c.b16 %v525, %v524
  %v551 = vpack.c.b16 %v527, %v526
  %v552 = vpack.c.b16 %v529, %v528
  %v553 = vpack.c.b16 %v531, %v530
  %v554 = vpack.c.b16 %v533, %v532
  %v555 = vpack.c.b16 %v535, %v534
  %v556 = vpack.c.b16 %v537, %v536
  %v557 = vpack.c.b16 %v539, %v538
  %v558 = vpack.c.b16 %v541, %v540
  %v559 = vpack.c.b16 %v543, %v542
  %576 = vmatpush.bf16.msra.mxu0 %v551
  %577 = vmatpush.bf16.msra.mxu0 %v550
  %578 = vmatpush.bf16.msra.mxu0 %v549
  %579 = vmatpush.bf16.msra.mxu0 %v548
  %580 = vmatpush.bf16.msra.mxu0 %v547
  %581 = vmatpush.bf16.msra.mxu0 %v546
  %582 = vmatpush.bf16.msra.mxu0 %v545
  %583 = vmatpush.bf16.msra.mxu0 %v544
  %584 = vmatmul.bf16.gmra.mxu0 %v363
  %v585 = vpop.f32.mrf.mxu0
  %v586 = vadd.f32 %v478, %v585
  %v587 = vpop.f32.mrf.mxu0
  %588 = vdwg.mxu0
  %589 = vmatpush.bf16.msra.mxu0 %v559
  %590 = vmatpush.bf16.msra.mxu0 %v558
  %591 = vmatpush.bf16.msra.mxu0 %v557
  %592 = vmatpush.bf16.msra.mxu0 %v556
  %593 = vmatpush.bf16.msra.mxu0 %v555
  %594 = vmatpush.bf16.msra.mxu0 %v554
  %595 = vmatpush.bf16.msra.mxu0 %v553
  %596 = vmatpush.bf16.msra.mxu0 %v552
  %597 = vmatmul.bf16.gmra.mxu0 %v443
  %v598 = vpop.f32.mrf.mxu0
  %v599 = vadd.f32 %v586, %v598
  %v600 = vpop.f32.mrf.mxu0
  %601 = vdwg.mxu0
  %v602 = vtanh.pop %v599
  %603 = vst [vmem:[#allocation2] sm:$0xff] %v442
  %604 = vst [vmem:[%s110] sm:$0xff] %v602
  %s605 = scalar_lea.vmem %s4, 8
  %606 = vst [vmem:[%s605] sm:$0xff] %v602
  %v607 = vld [vmem:[#allocation2] sm:$0xff]
  %v608 = vld [vmem:[%s110] sm:$0xff]
  %s609 = scalar_lea.vmem %s0, 12
  %v610 = vld [vmem:[%s609] sm:$0xf]
  %v611 = vunpack.c.l.bf16 %v610
  %v612 = vpack.c.bf16 %v607, %v607
  %v613 = vld [vmem:[%s2] sm:$0xf]
  %v614 = vld [vmem:[%s2 + $0x4] sm:$0xf]
  %v615 = vld [vmem:[%s2 + $0x8] sm:$0xf]
  %v616 = vld [vmem:[%s2 + $0xc] sm:$0xf]
  %v617 = vld [vmem:[%s2 + $0x10] sm:$0xf]
  %v618 = vld [vmem:[%s2 + $0x14] sm:$0xf]
  %v619 = vld [vmem:[%s2 + $0x18] sm:$0xf]
  %v620 = vld [vmem:[%s2 + $0x1c] sm:$0xf]
  %v621 = vld [vmem:[%s2 + $0x20] sm:$0xf]
  %v622 = vld [vmem:[%s2 + $0x24] sm:$0xf]
  %v623 = vld [vmem:[%s2 + $0x28] sm:$0xf]
  %v624 = vld [vmem:[%s2 + $0x2c] sm:$0xf]
  %v625 = vld [vmem:[%s2 + $0x30] sm:$0xf]
  %v626 = vld [vmem:[%s2 + $0x34] sm:$0xf]
  %v627 = vld [vmem:[%s2 + $0x38] sm:$0xf]
  %v628 = vld [vmem:[%s2 + $0x3c] sm:$0xf]
  %v645 = vunpack.c.l.b16 %v613
  %v646 = vunpack.c.l.b16 %v614
  %v647 = vunpack.c.l.b16 %v615
  %v648 = vunpack.c.l.b16 %v616
  %v649 = vunpack.c.l.b16 %v617
  %v650 = vunpack.c.l.b16 %v618
  %v651 = vunpack.c.l.b16 %v619
  %v652 = vunpack.c.l.b16 %v620
  %v653 = vunpack.c.l.b16 %v621
  %v654 = vunpack.c.l.b16 %v622
  %v655 = vunpack.c.l.b16 %v623
  %v656 = vunpack.c.l.b16 %v624
  %v657 = vunpack.c.l.b16 %v625
  %v658 = vunpack.c.l.b16 %v626
  %v659 = vunpack.c.l.b16 %v627
  %v660 = vunpack.c.l.b16 %v628
  %v661 = vpack.c.b16 %v646, %v645
  %v662 = vpack.c.b16 %v648, %v647
  %v663 = vpack.c.b16 %v650, %v649
  %v664 = vpack.c.b16 %v652, %v651
  %v665 = vpack.c.b16 %v654, %v653
  %v666 = vpack.c.b16 %v656, %v655
  %v667 = vpack.c.b16 %v658, %v657
  %v668 = vpack.c.b16 %v660, %v659
  %677 = vmatpush.bf16.msra.mxu0 %v668
  %678 = vmatpush.bf16.msra.mxu0 %v667
  %679 = vmatpush.bf16.msra.mxu0 %v666
  %680 = vmatpush.bf16.msra.mxu0 %v665
  %681 = vmatpush.bf16.msra.mxu0 %v664
  %682 = vmatpush.bf16.msra.mxu0 %v663
  %683 = vmatpush.bf16.msra.mxu0 %v662
  %684 = vmatpush.bf16.msra.mxu0 %v661
  %685 = vmatmul.bf16.gmra.mxu0 %v612
  %v686 = vpop.f32.mrf.mxu0
  %v687 = vadd.f32 0.0, %v686
  %v688 = vpop.f32.mrf.mxu0
  %689 = vdwg.mxu0
  %v690 = vadd.f32 %v611, %v687
  %v691 = vtanh.pop %v690
  %v692 = vpack.c.bf16 %v608, %v608
  %v693 = vld [vmem:[%s1] sm:$0xf]
  %v694 = vld [vmem:[%s1 + $0x4] sm:$0xf]
  %v695 = vld [vmem:[%s1 + $0x8] sm:$0xf]
  %v696 = vld [vmem:[%s1 + $0xc] sm:$0xf]
  %v697 = vld [vmem:[%s1 + $0x10] sm:$0xf]
  %v698 = vld [vmem:[%s1 + $0x14] sm:$0xf]
  %v699 = vld [vmem:[%s1 + $0x18] sm:$0xf]
  %v700 = vld [vmem:[%s1 + $0x1c] sm:$0xf]
  %v701 = vld [vmem:[%s1 + $0x20] sm:$0xf]
  %v702 = vld [vmem:[%s1 + $0x24] sm:$0xf]
  %v703 = vld [vmem:[%s1 + $0x28] sm:$0xf]
  %v704 = vld [vmem:[%s1 + $0x2c] sm:$0xf]
  %v705 = vld [vmem:[%s1 + $0x30] sm:$0xf]
  %v706 = vld [vmem:[%s1 + $0x34] sm:$0xf]
  %v707 = vld [vmem:[%s1 + $0x38] sm:$0xf]
  %v708 = vld [vmem:[%s1 + $0x3c] sm:$0xf]
  %v709 = vld [vmem:[%s1 + $0x40] sm:$0xf]
  %v710 = vld [vmem:[%s1 + $0x44] sm:$0xf]
  %v711 = vld [vmem:[%s1 + $0x48] sm:$0xf]
  %v712 = vld [vmem:[%s1 + $0x4c] sm:$0xf]
  %v713 = vld [vmem:[%s1 + $0x50] sm:$0xf]
  %v714 = vld [vmem:[%s1 + $0x54] sm:$0xf]
  %v715 = vld [vmem:[%s1 + $0x58] sm:$0xf]
  %v716 = vld [vmem:[%s1 + $0x5c] sm:$0xf]
  %v717 = vld [vmem:[%s1 + $0x60] sm:$0xf]
  %v718 = vld [vmem:[%s1 + $0x64] sm:$0xf]
  %v719 = vld [vmem:[%s1 + $0x68] sm:$0xf]
  %v720 = vld [vmem:[%s1 + $0x6c] sm:$0xf]
  %v721 = vld [vmem:[%s1 + $0x70] sm:$0xf]
  %v722 = vld [vmem:[%s1 + $0x74] sm:$0xf]
  %v723 = vld [vmem:[%s1 + $0x78] sm:$0xf]
  %v724 = vld [vmem:[%s1 + $0x7c] sm:$0xf]
  %v725 = vld [vmem:[%s3] sm:$0x1]
  %v727 = vperm.slane %v725, 0
  %v761 = vunpack.c.l.b16 %v693
  %v762 = vunpack.c.l.b16 %v694
  %v763 = vunpack.c.l.b16 %v695
  %v764 = vunpack.c.l.b16 %v696
  %v765 = vunpack.c.l.b16 %v697
  %v766 = vunpack.c.l.b16 %v698
  %v767 = vunpack.c.l.b16 %v699
  %v768 = vunpack.c.l.b16 %v700
  %v769 = vunpack.c.l.b16 %v701
  %v770 = vunpack.c.l.b16 %v702
  %v771 = vunpack.c.l.b16 %v703
  %v772 = vunpack.c.l.b16 %v704
  %v773 = vunpack.c.l.b16 %v705
  %v774 = vunpack.c.l.b16 %v706
  %v775 = vunpack.c.l.b16 %v707
  %v776 = vunpack.c.l.b16 %v708
  %v777 = vunpack.c.l.b16 %v709
  %v778 = vunpack.c.l.b16 %v710
  %v779 = vunpack.c.l.b16 %v711
  %v780 = vunpack.c.l.b16 %v712
  %v781 = vunpack.c.l.b16 %v713
  %v782 = vunpack.c.l.b16 %v714
  %v783 = vunpack.c.l.b16 %v715
  %v784 = vunpack.c.l.b16 %v716
  %v785 = vunpack.c.l.b16 %v717
  %v786 = vunpack.c.l.b16 %v718
  %v787 = vunpack.c.l.b16 %v719
  %v788 = vunpack.c.l.b16 %v720
  %v789 = vunpack.c.l.b16 %v721
  %v790 = vunpack.c.l.b16 %v722
  %v791 = vunpack.c.l.b16 %v723
  %v792 = vunpack.c.l.b16 %v724
  %v793 = vpack.c.b16 %v762, %v761
  %v794 = vpack.c.b16 %v764, %v763
  %v795 = vpack.c.b16 %v766, %v765
  %v796 = vpack.c.b16 %v768, %v767
  %v797 = vpack.c.b16 %v770, %v769
  %v798 = vpack.c.b16 %v772, %v771
  %v799 = vpack.c.b16 %v774, %v773
  %v800 = vpack.c.b16 %v776, %v775
  %v801 = vpack.c.b16 %v778, %v777
  %v802 = vpack.c.b16 %v780, %v779
  %v803 = vpack.c.b16 %v782, %v781
  %v804 = vpack.c.b16 %v784, %v783
  %v805 = vpack.c.b16 %v786, %v785
  %v806 = vpack.c.b16 %v788, %v787
  %v807 = vpack.c.b16 %v790, %v789
  %v808 = vpack.c.b16 %v792, %v791
  %825 = vmatpush.bf16.msra.mxu0 %v800
  %826 = vmatpush.bf16.msra.mxu0 %v799
  %827 = vmatpush.bf16.msra.mxu0 %v798
  %828 = vmatpush.bf16.msra.mxu0 %v797
  %829 = vmatpush.bf16.msra.mxu0 %v796
  %830 = vmatpush.bf16.msra.mxu0 %v795
  %831 = vmatpush.bf16.msra.mxu0 %v794
  %832 = vmatpush.bf16.msra.mxu0 %v793
  %833 = vmatmul.bf16.gmra.mxu0 %v612
  %v834 = vpop.f32.mrf.mxu0
  %v835 = vadd.f32 %v727, %v834
  %v836 = vpop.f32.mrf.mxu0
  %837 = vdwg.mxu0
  %838 = vmatpush.bf16.msra.mxu0 %v808
  %839 = vmatpush.bf16.msra.mxu0 %v807
  %840 = vmatpush.bf16.msra.mxu0 %v806
  %841 = vmatpush.bf16.msra.mxu0 %v805
  %842 = vmatpush.bf16.msra.mxu0 %v804
  %843 = vmatpush.bf16.msra.mxu0 %v803
  %844 = vmatpush.bf16.msra.mxu0 %v802
  %845 = vmatpush.bf16.msra.mxu0 %v801
  %846 = vmatmul.bf16.gmra.mxu0 %v692
  %v847 = vpop.f32.mrf.mxu0
  %v848 = vadd.f32 %v835, %v847
  %v849 = vpop.f32.mrf.mxu0
  %850 = vdwg.mxu0
  %v851 = vtanh.pop %v848
  %852 = vst [vmem:[#allocation2] sm:$0xff] %v691
  %853 = vst [vmem:[%s110] sm:$0xff] %v851
  %s854 = scalar_lea.vmem %s4, 16
  %855 = vst [vmem:[%s854] sm:$0xff] %v851
  %v856 = vld [vmem:[#allocation2] sm:$0xff]
  %v857 = vld [vmem:[%s110] sm:$0xff]
  %s858 = scalar_lea.vmem %s0, 16
  %v859 = vld [vmem:[%s858] sm:$0xf]
  %v860 = vunpack.c.l.bf16 %v859
  %v861 = vpack.c.bf16 %v856, %v856
  %v862 = vld [vmem:[%s2] sm:$0xf]
  %v863 = vld [vmem:[%s2 + $0x4] sm:$0xf]
  %v864 = vld [vmem:[%s2 + $0x8] sm:$0xf]
  %v865 = vld [vmem:[%s2 + $0xc] sm:$0xf]
  %v866 = vld [vmem:[%s2 + $0x10] sm:$0xf]
  %v867 = vld [vmem:[%s2 + $0x14] sm:$0xf]
  %v868 = vld [vmem:[%s2 + $0x18] sm:$0xf]
  %v869 = vld [vmem:[%s2 + $0x1c] sm:$0xf]
  %v870 = vld [vmem:[%s2 + $0x20] sm:$0xf]
  %v871 = vld [vmem:[%s2 + $0x24] sm:$0xf]
  %v872 = vld [vmem:[%s2 + $0x28] sm:$0xf]
  %v873 = vld [vmem:[%s2 + $0x2c] sm:$0xf]
  %v874 = vld [vmem:[%s2 + $0x30] sm:$0xf]
  %v875 = vld [vmem:[%s2 + $0x34] sm:$0xf]
  %v876 = vld [vmem:[%s2 + $0x38] sm:$0xf]
  %v877 = vld [vmem:[%s2 + $0x3c] sm:$0xf]
  %v894 = vunpack.c.l.b16 %v862
  %v895 = vunpack.c.l.b16 %v863
  %v896 = vunpack.c.l.b16 %v864
  %v897 = vunpack.c.l.b16 %v865
  %v898 = vunpack.c.l.b16 %v866
  %v899 = vunpack.c.l.b16 %v867
  %v900 = vunpack.c.l.b16 %v868
  %v901 = vunpack.c.l.b16 %v869
  %v902 = vunpack.c.l.b16 %v870
  %v903 = vunpack.c.l.b16 %v871
  %v904 = vunpack.c.l.b16 %v872
  %v905 = vunpack.c.l.b16 %v873
  %v906 = vunpack.c.l.b16 %v874
  %v907 = vunpack.c.l.b16 %v875
  %v908 = vunpack.c.l.b16 %v876
  %v909 = vunpack.c.l.b16 %v877
  %v910 = vpack.c.b16 %v895, %v894
  %v911 = vpack.c.b16 %v897, %v896
  %v912 = vpack.c.b16 %v899, %v898
  %v913 = vpack.c.b16 %v901, %v900
  %v914 = vpack.c.b16 %v903, %v902
  %v915 = vpack.c.b16 %v905, %v904
  %v916 = vpack.c.b16 %v907, %v906
  %v917 = vpack.c.b16 %v909, %v908
  %926 = vmatpush.bf16.msra.mxu0 %v917
  %927 = vmatpush.bf16.msra.mxu0 %v916
  %928 = vmatpush.bf16.msra.mxu0 %v915
  %929 = vmatpush.bf16.msra.mxu0 %v914
  %930 = vmatpush.bf16.msra.mxu0 %v913
  %931 = vmatpush.bf16.msra.mxu0 %v912
  %932 = vmatpush.bf16.msra.mxu0 %v911
  %933 = vmatpush.bf16.msra.mxu0 %v910
  %934 = vmatmul.bf16.gmra.mxu0 %v861
  %v935 = vpop.f32.mrf.mxu0
  %v936 = vadd.f32 0.0, %v935
  %v937 = vpop.f32.mrf.mxu0
  %938 = vdwg.mxu0
  %v939 = vadd.f32 %v860, %v936
  %v940 = vtanh.pop %v939
  %v941 = vpack.c.bf16 %v857, %v857
  %v942 = vld [vmem:[%s1] sm:$0xf]
  %v943 = vld [vmem:[%s1 + $0x4] sm:$0xf]
  %v944 = vld [vmem:[%s1 + $0x8] sm:$0xf]
  %v945 = vld [vmem:[%s1 + $0xc] sm:$0xf]
  %v946 = vld [vmem:[%s1 + $0x10] sm:$0xf]
  %v947 = vld [vmem:[%s1 + $0x14] sm:$0xf]
  %v948 = vld [vmem:[%s1 + $0x18] sm:$0xf]
  %v949 = vld [vmem:[%s1 + $0x1c] sm:$0xf]
  %v950 = vld [vmem:[%s1 + $0x20] sm:$0xf]
  %v951 = vld [vmem:[%s1 + $0x24] sm:$0xf]
  %v952 = vld [vmem:[%s1 + $0x28] sm:$0xf]
  %v953 = vld [vmem:[%s1 + $0x2c] sm:$0xf]
  %v954 = vld [vmem:[%s1 + $0x30] sm:$0xf]
  %v955 = vld [vmem:[%s1 + $0x34] sm:$0xf]
  %v956 = vld [vmem:[%s1 + $0x38] sm:$0xf]
  %v957 = vld [vmem:[%s1 + $0x3c] sm:$0xf]
  %v958 = vld [vmem:[%s1 + $0x40] sm:$0xf]
  %v959 = vld [vmem:[%s1 + $0x44] sm:$0xf]
  %v960 = vld [vmem:[%s1 + $0x48] sm:$0xf]
  %v961 = vld [vmem:[%s1 + $0x4c] sm:$0xf]
  %v962 = vld [vmem:[%s1 + $0x50] sm:$0xf]
  %v963 = vld [vmem:[%s1 + $0x54] sm:$0xf]
  %v964 = vld [vmem:[%s1 + $0x58] sm:$0xf]
  %v965 = vld [vmem:[%s1 + $0x5c] sm:$0xf]
  %v966 = vld [vmem:[%s1 + $0x60] sm:$0xf]
  %v967 = vld [vmem:[%s1 + $0x64] sm:$0xf]
  %v968 = vld [vmem:[%s1 + $0x68] sm:$0xf]
  %v969 = vld [vmem:[%s1 + $0x6c] sm:$0xf]
  %v970 = vld [vmem:[%s1 + $0x70] sm:$0xf]
  %v971 = vld [vmem:[%s1 + $0x74] sm:$0xf]
  %v972 = vld [vmem:[%s1 + $0x78] sm:$0xf]
  %v973 = vld [vmem:[%s1 + $0x7c] sm:$0xf]
  %v974 = vld [vmem:[%s3] sm:$0x1]
  %v976 = vperm.slane %v974, 0
  %v1010 = vunpack.c.l.b16 %v942
  %v1011 = vunpack.c.l.b16 %v943
  %v1012 = vunpack.c.l.b16 %v944
  %v1013 = vunpack.c.l.b16 %v945
  %v1014 = vunpack.c.l.b16 %v946
  %v1015 = vunpack.c.l.b16 %v947
  %v1016 = vunpack.c.l.b16 %v948
  %v1017 = vunpack.c.l.b16 %v949
  %v1018 = vunpack.c.l.b16 %v950
  %v1019 = vunpack.c.l.b16 %v951
  %v1020 = vunpack.c.l.b16 %v952
  %v1021 = vunpack.c.l.b16 %v953
  %v1022 = vunpack.c.l.b16 %v954
  %v1023 = vunpack.c.l.b16 %v955
  %v1024 = vunpack.c.l.b16 %v956
  %v1025 = vunpack.c.l.b16 %v957
  %v1026 = vunpack.c.l.b16 %v958
  %v1027 = vunpack.c.l.b16 %v959
  %v1028 = vunpack.c.l.b16 %v960
  %v1029 = vunpack.c.l.b16 %v961
  %v1030 = vunpack.c.l.b16 %v962
  %v1031 = vunpack.c.l.b16 %v963
  %v1032 = vunpack.c.l.b16 %v964
  %v1033 = vunpack.c.l.b16 %v965
  %v1034 = vunpack.c.l.b16 %v966
  %v1035 = vunpack.c.l.b16 %v967
  %v1036 = vunpack.c.l.b16 %v968
  %v1037 = vunpack.c.l.b16 %v969
  %v1038 = vunpack.c.l.b16 %v970
  %v1039 = vunpack.c.l.b16 %v971
  %v1040 = vunpack.c.l.b16 %v972
  %v1041 = vunpack.c.l.b16 %v973
  %v1042 = vpack.c.b16 %v1011, %v1010
  %v1043 = vpack.c.b16 %v1013, %v1012
  %v1044 = vpack.c.b16 %v1015, %v1014
  %v1045 = vpack.c.b16 %v1017, %v1016
  %v1046 = vpack.c.b16 %v1019, %v1018
  %v1047 = vpack.c.b16 %v1021, %v1020
  %v1048 = vpack.c.b16 %v1023, %v1022
  %v1049 = vpack.c.b16 %v1025, %v1024
  %v1050 = vpack.c.b16 %v1027, %v1026
  %v1051 = vpack.c.b16 %v1029, %v1028
  %v1052 = vpack.c.b16 %v1031, %v1030
  %v1053 = vpack.c.b16 %v1033, %v1032
  %v1054 = vpack.c.b16 %v1035, %v1034
  %v1055 = vpack.c.b16 %v1037, %v1036
  %v1056 = vpack.c.b16 %v1039, %v1038
  %v1057 = vpack.c.b16 %v1041, %v1040
  %1074 = vmatpush.bf16.msra.mxu0 %v1049
  %1075 = vmatpush.bf16.msra.mxu0 %v1048
  %1076 = vmatpush.bf16.msra.mxu0 %v1047
  %1077 = vmatpush.bf16.msra.mxu0 %v1046
  %1078 = vmatpush.bf16.msra.mxu0 %v1045
  %1079 = vmatpush.bf16.msra.mxu0 %v1044
  %1080 = vmatpush.bf16.msra.mxu0 %v1043
  %1081 = vmatpush.bf16.msra.mxu0 %v1042
  %1082 = vmatmul.bf16.gmra.mxu0 %v861
  %v1083 = vpop.f32.mrf.mxu0
  %v1084 = vadd.f32 %v976, %v1083
  %v1085 = vpop.f32.mrf.mxu0
  %1086 = vdwg.mxu0
  %1087 = vmatpush.bf16.msra.mxu0 %v1057
  %1088 = vmatpush.bf16.msra.mxu0 %v1056
  %1089 = vmatpush.bf16.msra.mxu0 %v1055
  %1090 = vmatpush.bf16.msra.mxu0 %v1054
  %1091 = vmatpush.bf16.msra.mxu0 %v1053
  %1092 = vmatpush.bf16.msra.mxu0 %v1052
  %1093 = vmatpush.bf16.msra.mxu0 %v1051
  %1094 = vmatpush.bf16.msra.mxu0 %v1050
  %1095 = vmatmul.bf16.gmra.mxu0 %v941
  %v1096 = vpop.f32.mrf.mxu0
  %v1097 = vadd.f32 %v1084, %v1096
  %v1098 = vpop.f32.mrf.mxu0
  %1099 = vdwg.mxu0
  %v1100 = vtanh.pop %v1097
  %1101 = vst [vmem:[#allocation2] sm:$0xff] %v940
  %1102 = vst [vmem:[%s110] sm:$0xff] %v1100
  %s1103 = scalar_lea.vmem %s4, 24
  %1104 = vst [vmem:[%s1103] sm:$0xff] %v1100
  %v1105 = vld [vmem:[#allocation2] sm:$0xff]
  %v1106 = vld [vmem:[%s110] sm:$0xff]
  %s1107 = scalar_lea.vmem %s0, 20
  %v1108 = vld [vmem:[%s1107] sm:$0xf]
  %v1109 = vunpack.c.l.bf16 %v1108
  %v1110 = vpack.c.bf16 %v1105, %v1105
  %v1111 = vld [vmem:[%s2] sm:$0xf]
  %v1112 = vld [vmem:[%s2 + $0x4] sm:$0xf]
  %v1113 = vld [vmem:[%s2 + $0x8] sm:$0xf]
  %v1114 = vld [vmem:[%s2 + $0xc] sm:$0xf]
  %v1115 = vld [vmem:[%s2 + $0x10] sm:$0xf]
  %v1116 = vld [vmem:[%s2 + $0x14] sm:$0xf]
  %v1117 = vld [vmem:[%s2 + $0x18] sm:$0xf]
  %v1118 = vld [vmem:[%s2 + $0x1c] sm:$0xf]
  %v1119 = vld [vmem:[%s2 + $0x20] sm:$0xf]
  %v1120 = vld [vmem:[%s2 + $0x24] sm:$0xf]
  %v1121 = vld [vmem:[%s2 + $0x28] sm:$0xf]
  %v1122 = vld [vmem:[%s2 + $0x2c] sm:$0xf]
  %v1123 = vld [vmem:[%s2 + $0x30] sm:$0xf]
  %v1124 = vld [vmem:[%s2 + $0x34] sm:$0xf]
  %v1125 = vld [vmem:[%s2 + $0x38] sm:$0xf]
  %v1126 = vld [vmem:[%s2 + $0x3c] sm:$0xf]
  %v1143 = vunpack.c.l.b16 %v1111
  %v1144 = vunpack.c.l.b16 %v1112
  %v1145 = vunpack.c.l.b16 %v1113
  %v1146 = vunpack.c.l.b16 %v1114
  %v1147 = vunpack.c.l.b16 %v1115
  %v1148 = vunpack.c.l.b16 %v1116
  %v1149 = vunpack.c.l.b16 %v1117
  %v1150 = vunpack.c.l.b16 %v1118
  %v1151 = vunpack.c.l.b16 %v1119
  %v1152 = vunpack.c.l.b16 %v1120
  %v1153 = vunpack.c.l.b16 %v1121
  %v1154 = vunpack.c.l.b16 %v1122
  %v1155 = vunpack.c.l.b16 %v1123
  %v1156 = vunpack.c.l.b16 %v1124
  %v1157 = vunpack.c.l.b16 %v1125
  %v1158 = vunpack.c.l.b16 %v1126
  %v1159 = vpack.c.b16 %v1144, %v1143
  %v1160 = vpack.c.b16 %v1146, %v1145
  %v1161 = vpack.c.b16 %v1148, %v1147
  %v1162 = vpack.c.b16 %v1150, %v1149
  %v1163 = vpack.c.b16 %v1152, %v1151
  %v1164 = vpack.c.b16 %v1154, %v1153
  %v1165 = vpack.c.b16 %v1156, %v1155
  %v1166 = vpack.c.b16 %v1158, %v1157
  %1175 = vmatpush.bf16.msra.mxu0 %v1166
  %1176 = vmatpush.bf16.msra.mxu0 %v1165
  %1177 = vmatpush.bf16.msra.mxu0 %v1164
  %1178 = vmatpush.bf16.msra.mxu0 %v1163
  %1179 = vmatpush.bf16.msra.mxu0 %v1162
  %1180 = vmatpush.bf16.msra.mxu0 %v1161
  %1181 = vmatpush.bf16.msra.mxu0 %v1160
  %1182 = vmatpush.bf16.msra.mxu0 %v1159
  %1183 = vmatmul.bf16.gmra.mxu0 %v1110
  %v1184 = vpop.f32.mrf.mxu0
  %v1185 = vadd.f32 0.0, %v1184
  %v1186 = vpop.f32.mrf.mxu0
  %1187 = vdwg.mxu0
  %v1188 = vadd.f32 %v1109, %v1185
  %v1189 = vtanh.pop %v1188
  %v1190 = vpack.c.bf16 %v1106, %v1106
  %v1191 = vld [vmem:[%s1] sm:$0xf]
  %v1192 = vld [vmem:[%s1 + $0x4] sm:$0xf]
  %v1193 = vld [vmem:[%s1 + $0x8] sm:$0xf]
  %v1194 = vld [vmem:[%s1 + $0xc] sm:$0xf]
  %v1195 = vld [vmem:[%s1 + $0x10] sm:$0xf]
  %v1196 = vld [vmem:[%s1 + $0x14] sm:$0xf]
  %v1197 = vld [vmem:[%s1 + $0x18] sm:$0xf]
  %v1198 = vld [vmem:[%s1 + $0x1c] sm:$0xf]
  %v1199 = vld [vmem:[%s1 + $0x20] sm:$0xf]
  %v1200 = vld [vmem:[%s1 + $0x24] sm:$0xf]
  %v1201 = vld [vmem:[%s1 + $0x28] sm:$0xf]
  %v1202 = vld [vmem:[%s1 + $0x2c] sm:$0xf]
  %v1203 = vld [vmem:[%s1 + $0x30] sm:$0xf]
  %v1204 = vld [vmem:[%s1 + $0x34] sm:$0xf]
  %v1205 = vld [vmem:[%s1 + $0x38] sm:$0xf]
  %v1206 = vld [vmem:[%s1 + $0x3c] sm:$0xf]
  %v1207 = vld [vmem:[%s1 + $0x40] sm:$0xf]
  %v1208 = vld [vmem:[%s1 + $0x44] sm:$0xf]
  %v1209 = vld [vmem:[%s1 + $0x48] sm:$0xf]
  %v1210 = vld [vmem:[%s1 + $0x4c] sm:$0xf]
  %v1211 = vld [vmem:[%s1 + $0x50] sm:$0xf]
  %v1212 = vld [vmem:[%s1 + $0x54] sm:$0xf]
  %v1213 = vld [vmem:[%s1 + $0x58] sm:$0xf]
  %v1214 = vld [vmem:[%s1 + $0x5c] sm:$0xf]
  %v1215 = vld [vmem:[%s1 + $0x60] sm:$0xf]
  %v1216 = vld [vmem:[%s1 + $0x64] sm:$0xf]
  %v1217 = vld [vmem:[%s1 + $0x68] sm:$0xf]
  %v1218 = vld [vmem:[%s1 + $0x6c] sm:$0xf]
  %v1219 = vld [vmem:[%s1 + $0x70] sm:$0xf]
  %v1220 = vld [vmem:[%s1 + $0x74] sm:$0xf]
  %v1221 = vld [vmem:[%s1 + $0x78] sm:$0xf]
  %v1222 = vld [vmem:[%s1 + $0x7c] sm:$0xf]
  %v1223 = vld [vmem:[%s3] sm:$0x1]
  %v1225 = vperm.slane %v1223, 0
  %v1259 = vunpack.c.l.b16 %v1191
  %v1260 = vunpack.c.l.b16 %v1192
  %v1261 = vunpack.c.l.b16 %v1193
  %v1262 = vunpack.c.l.b16 %v1194
  %v1263 = vunpack.c.l.b16 %v1195
  %v1264 = vunpack.c.l.b16 %v1196
  %v1265 = vunpack.c.l.b16 %v1197
  %v1266 = vunpack.c.l.b16 %v1198
  %v1267 = vunpack.c.l.b16 %v1199
  %v1268 = vunpack.c.l.b16 %v1200
  %v1269 = vunpack.c.l.b16 %v1201
  %v1270 = vunpack.c.l.b16 %v1202
  %v1271 = vunpack.c.l.b16 %v1203
  %v1272 = vunpack.c.l.b16 %v1204
  %v1273 = vunpack.c.l.b16 %v1205
  %v1274 = vunpack.c.l.b16 %v1206
  %v1275 = vunpack.c.l.b16 %v1207
  %v1276 = vunpack.c.l.b16 %v1208
  %v1277 = vunpack.c.l.b16 %v1209
  %v1278 = vunpack.c.l.b16 %v1210
  %v1279 = vunpack.c.l.b16 %v1211
  %v1280 = vunpack.c.l.b16 %v1212
  %v1281 = vunpack.c.l.b16 %v1213
  %v1282 = vunpack.c.l.b16 %v1214
  %v1283 = vunpack.c.l.b16 %v1215
  %v1284 = vunpack.c.l.b16 %v1216
  %v1285 = vunpack.c.l.b16 %v1217
  %v1286 = vunpack.c.l.b16 %v1218
  %v1287 = vunpack.c.l.b16 %v1219
  %v1288 = vunpack.c.l.b16 %v1220
  %v1289 = vunpack.c.l.b16 %v1221
  %v1290 = vunpack.c.l.b16 %v1222
  %v1291 = vpack.c.b16 %v1260, %v1259
  %v1292 = vpack.c.b16 %v1262, %v1261
  %v1293 = vpack.c.b16 %v1264, %v1263
  %v1294 = vpack.c.b16 %v1266, %v1265
  %v1295 = vpack.c.b16 %v1268, %v1267
  %v1296 = vpack.c.b16 %v1270, %v1269
  %v1297 = vpack.c.b16 %v1272, %v1271
  %v1298 = vpack.c.b16 %v1274, %v1273
  %v1299 = vpack.c.b16 %v1276, %v1275
  %v1300 = vpack.c.b16 %v1278, %v1277
  %v1301 = vpack.c.b16 %v1280, %v1279
  %v1302 = vpack.c.b16 %v1282, %v1281
  %v1303 = vpack.c.b16 %v1284, %v1283
  %v1304 = vpack.c.b16 %v1286, %v1285
  %v1305 = vpack.c.b16 %v1288, %v1287
  %v1306 = vpack.c.b16 %v1290, %v1289
  %1323 = vmatpush.bf16.msra.mxu0 %v1298
  %1324 = vmatpush.bf16.msra.mxu0 %v1297
  %1325 = vmatpush.bf16.msra.mxu0 %v1296
  %1326 = vmatpush.bf16.msra.mxu0 %v1295
  %1327 = vmatpush.bf16.msra.mxu0 %v1294
  %1328 = vmatpush.bf16.msra.mxu0 %v1293
  %1329 = vmatpush.bf16.msra.mxu0 %v1292
  %1330 = vmatpush.bf16.msra.mxu0 %v1291
  %1331 = vmatmul.bf16.gmra.mxu0 %v1110
  %v1332 = vpop.f32.mrf.mxu0
  %v1333 = vadd.f32 %v1225, %v1332
  %v1334 = vpop.f32.mrf.mxu0
  %1335 = vdwg.mxu0
  %1336 = vmatpush.bf16.msra.mxu0 %v1306
  %1337 = vmatpush.bf16.msra.mxu0 %v1305
  %1338 = vmatpush.bf16.msra.mxu0 %v1304
  %1339 = vmatpush.bf16.msra.mxu0 %v1303
  %1340 = vmatpush.bf16.msra.mxu0 %v1302
  %1341 = vmatpush.bf16.msra.mxu0 %v1301
  %1342 = vmatpush.bf16.msra.mxu0 %v1300
  %1343 = vmatpush.bf16.msra.mxu0 %v1299
  %1344 = vmatmul.bf16.gmra.mxu0 %v1190
  %v1345 = vpop.f32.mrf.mxu0
  %v1346 = vadd.f32 %v1333, %v1345
  %v1347 = vpop.f32.mrf.mxu0
  %1348 = vdwg.mxu0
  %v1349 = vtanh.pop %v1346
  %1350 = vst [vmem:[#allocation2] sm:$0xff] %v1189
  %1351 = vst [vmem:[%s110] sm:$0xff] %v1349
  %s1352 = scalar_lea.vmem %s4, 32
  %1353 = vst [vmem:[%s1352] sm:$0xff] %v1349
  %v1354 = vld [vmem:[#allocation2] sm:$0xff]
  %v1355 = vld [vmem:[%s110] sm:$0xff]
  %s1356 = scalar_lea.vmem %s0, 24
  %v1357 = vld [vmem:[%s1356] sm:$0xf]
  %v1358 = vunpack.c.l.bf16 %v1357
  %v1359 = vpack.c.bf16 %v1354, %v1354
  %v1360 = vld [vmem:[%s2] sm:$0xf]
  %v1361 = vld [vmem:[%s2 + $0x4] sm:$0xf]
  %v1362 = vld [vmem:[%s2 + $0x8] sm:$0xf]
  %v1363 = vld [vmem:[%s2 + $0xc] sm:$0xf]
  %v1364 = vld [vmem:[%s2 + $0x10] sm:$0xf]
  %v1365 = vld [vmem:[%s2 + $0x14] sm:$0xf]
  %v1366 = vld [vmem:[%s2 + $0x18] sm:$0xf]
  %v1367 = vld [vmem:[%s2 + $0x1c] sm:$0xf]
  %v1368 = vld [vmem:[%s2 + $0x20] sm:$0xf]
  %v1369 = vld [vmem:[%s2 + $0x24] sm:$0xf]
  %v1370 = vld [vmem:[%s2 + $0x28] sm:$0xf]
  %v1371 = vld [vmem:[%s2 + $0x2c] sm:$0xf]
  %v1372 = vld [vmem:[%s2 + $0x30] sm:$0xf]
  %v1373 = vld [vmem:[%s2 + $0x34] sm:$0xf]
  %v1374 = vld [vmem:[%s2 + $0x38] sm:$0xf]
  %v1375 = vld [vmem:[%s2 + $0x3c] sm:$0xf]
  %v1392 = vunpack.c.l.b16 %v1360
  %v1393 = vunpack.c.l.b16 %v1361
  %v1394 = vunpack.c.l.b16 %v1362
  %v1395 = vunpack.c.l.b16 %v1363
  %v1396 = vunpack.c.l.b16 %v1364
  %v1397 = vunpack.c.l.b16 %v1365
  %v1398 = vunpack.c.l.b16 %v1366
  %v1399 = vunpack.c.l.b16 %v1367
  %v1400 = vunpack.c.l.b16 %v1368
  %v1401 = vunpack.c.l.b16 %v1369
  %v1402 = vunpack.c.l.b16 %v1370
  %v1403 = vunpack.c.l.b16 %v1371
  %v1404 = vunpack.c.l.b16 %v1372
  %v1405 = vunpack.c.l.b16 %v1373
  %v1406 = vunpack.c.l.b16 %v1374
  %v1407 = vunpack.c.l.b16 %v1375
  %v1408 = vpack.c.b16 %v1393, %v1392
  %v1409 = vpack.c.b16 %v1395, %v1394
  %v1410 = vpack.c.b16 %v1397, %v1396
  %v1411 = vpack.c.b16 %v1399, %v1398
  %v1412 = vpack.c.b16 %v1401, %v1400
  %v1413 = vpack.c.b16 %v1403, %v1402
  %v1414 = vpack.c.b16 %v1405, %v1404
  %v1415 = vpack.c.b16 %v1407, %v1406
  %1424 = vmatpush.bf16.msra.mxu0 %v1415
  %1425 = vmatpush.bf16.msra.mxu0 %v1414
  %1426 = vmatpush.bf16.msra.mxu0 %v1413
  %1427 = vmatpush.bf16.msra.mxu0 %v1412
  %1428 = vmatpush.bf16.msra.mxu0 %v1411
  %1429 = vmatpush.bf16.msra.mxu0 %v1410
  %1430 = vmatpush.bf16.msra.mxu0 %v1409
  %1431 = vmatpush.bf16.msra.mxu0 %v1408
  %1432 = vmatmul.bf16.gmra.mxu0 %v1359
  %v1433 = vpop.f32.mrf.mxu0
  %v1434 = vadd.f32 0.0, %v1433
  %v1435 = vpop.f32.mrf.mxu0
  %1436 = vdwg.mxu0
  %v1437 = vadd.f32 %v1358, %v1434
  %v1438 = vtanh.pop %v1437
  %v1439 = vpack.c.bf16 %v1355, %v1355
  %v1440 = vld [vmem:[%s1] sm:$0xf]
  %v1441 = vld [vmem:[%s1 + $0x4] sm:$0xf]
  %v1442 = vld [vmem:[%s1 + $0x8] sm:$0xf]
  %v1443 = vld [vmem:[%s1 + $0xc] sm:$0xf]
  %v1444 = vld [vmem:[%s1 + $0x10] sm:$0xf]
  %v1445 = vld [vmem:[%s1 + $0x14] sm:$0xf]
  %v1446 = vld [vmem:[%s1 + $0x18] sm:$0xf]
  %v1447 = vld [vmem:[%s1 + $0x1c] sm:$0xf]
  %v1448 = vld [vmem:[%s1 + $0x20] sm:$0xf]
  %v1449 = vld [vmem:[%s1 + $0x24] sm:$0xf]
  %v1450 = vld [vmem:[%s1 + $0x28] sm:$0xf]
  %v1451 = vld [vmem:[%s1 + $0x2c] sm:$0xf]
  %v1452 = vld [vmem:[%s1 + $0x30] sm:$0xf]
  %v1453 = vld [vmem:[%s1 + $0x34] sm:$0xf]
  %v1454 = vld [vmem:[%s1 + $0x38] sm:$0xf]
  %v1455 = vld [vmem:[%s1 + $0x3c] sm:$0xf]
  %v1456 = vld [vmem:[%s1 + $0x40] sm:$0xf]
  %v1457 = vld [vmem:[%s1 + $0x44] sm:$0xf]
  %v1458 = vld [vmem:[%s1 + $0x48] sm:$0xf]
  %v1459 = vld [vmem:[%s1 + $0x4c] sm:$0xf]
  %v1460 = vld [vmem:[%s1 + $0x50] sm:$0xf]
  %v1461 = vld [vmem:[%s1 + $0x54] sm:$0xf]
  %v1462 = vld [vmem:[%s1 + $0x58] sm:$0xf]
  %v1463 = vld [vmem:[%s1 + $0x5c] sm:$0xf]
  %v1464 = vld [vmem:[%s1 + $0x60] sm:$0xf]
  %v1465 = vld [vmem:[%s1 + $0x64] sm:$0xf]
  %v1466 = vld [vmem:[%s1 + $0x68] sm:$0xf]
  %v1467 = vld [vmem:[%s1 + $0x6c] sm:$0xf]
  %v1468 = vld [vmem:[%s1 + $0x70] sm:$0xf]
  %v1469 = vld [vmem:[%s1 + $0x74] sm:$0xf]
  %v1470 = vld [vmem:[%s1 + $0x78] sm:$0xf]
  %v1471 = vld [vmem:[%s1 + $0x7c] sm:$0xf]
  %v1472 = vld [vmem:[%s3] sm:$0x1]
  %v1474 = vperm.slane %v1472, 0
  %v1508 = vunpack.c.l.b16 %v1440
  %v1509 = vunpack.c.l.b16 %v1441
  %v1510 = vunpack.c.l.b16 %v1442
  %v1511 = vunpack.c.l.b16 %v1443
  %v1512 = vunpack.c.l.b16 %v1444
  %v1513 = vunpack.c.l.b16 %v1445
  %v1514 = vunpack.c.l.b16 %v1446
  %v1515 = vunpack.c.l.b16 %v1447
  %v1516 = vunpack.c.l.b16 %v1448
  %v1517 = vunpack.c.l.b16 %v1449
  %v1518 = vunpack.c.l.b16 %v1450
  %v1519 = vunpack.c.l.b16 %v1451
  %v1520 = vunpack.c.l.b16 %v1452
  %v1521 = vunpack.c.l.b16 %v1453
  %v1522 = vunpack.c.l.b16 %v1454
  %v1523 = vunpack.c.l.b16 %v1455
  %v1524 = vunpack.c.l.b16 %v1456
  %v1525 = vunpack.c.l.b16 %v1457
  %v1526 = vunpack.c.l.b16 %v1458
  %v1527 = vunpack.c.l.b16 %v1459
  %v1528 = vunpack.c.l.b16 %v1460
  %v1529 = vunpack.c.l.b16 %v1461
  %v1530 = vunpack.c.l.b16 %v1462
  %v1531 = vunpack.c.l.b16 %v1463
  %v1532 = vunpack.c.l.b16 %v1464
  %v1533 = vunpack.c.l.b16 %v1465
  %v1534 = vunpack.c.l.b16 %v1466
  %v1535 = vunpack.c.l.b16 %v1467
  %v1536 = vunpack.c.l.b16 %v1468
  %v1537 = vunpack.c.l.b16 %v1469
  %v1538 = vunpack.c.l.b16 %v1470
  %v1539 = vunpack.c.l.b16 %v1471
  %v1540 = vpack.c.b16 %v1509, %v1508
  %v1541 = vpack.c.b16 %v1511, %v1510
  %v1542 = vpack.c.b16 %v1513, %v1512
  %v1543 = vpack.c.b16 %v1515, %v1514
  %v1544 = vpack.c.b16 %v1517, %v1516
  %v1545 = vpack.c.b16 %v1519, %v1518
  %v1546 = vpack.c.b16 %v1521, %v1520
  %v1547 = vpack.c.b16 %v1523, %v1522
  %v1548 = vpack.c.b16 %v1525, %v1524
  %v1549 = vpack.c.b16 %v1527, %v1526
  %v1550 = vpack.c.b16 %v1529, %v1528
  %v1551 = vpack.c.b16 %v1531, %v1530
  %v1552 = vpack.c.b16 %v1533, %v1532
  %v1553 = vpack.c.b16 %v1535, %v1534
  %v1554 = vpack.c.b16 %v1537, %v1536
  %v1555 = vpack.c.b16 %v1539, %v1538
  %1572 = vmatpush.bf16.msra.mxu0 %v1547
  %1573 = vmatpush.bf16.msra.mxu0 %v1546
  %1574 = vmatpush.bf16.msra.mxu0 %v1545
  %1575 = vmatpush.bf16.msra.mxu0 %v1544
  %1576 = vmatpush.bf16.msra.mxu0 %v1543
  %1577 = vmatpush.bf16.msra.mxu0 %v1542
  %1578 = vmatpush.bf16.msra.mxu0 %v1541
  %1579 = vmatpush.bf16.msra.mxu0 %v1540
  %1580 = vmatmul.bf16.gmra.mxu0 %v1359
  %v1581 = vpop.f32.mrf.mxu0
  %v1582 = vadd.f32 %v1474, %v1581
  %v1583 = vpop.f32.mrf.mxu0
  %1584 = vdwg.mxu0
  %1585 = vmatpush.bf16.msra.mxu0 %v1555
  %1586 = vmatpush.bf16.msra.mxu0 %v1554
  %1587 = vmatpush.bf16.msra.mxu0 %v1553
  %1588 = vmatpush.bf16.msra.mxu0 %v1552
  %1589 = vmatpush.bf16.msra.mxu0 %v1551
  %1590 = vmatpush.bf16.msra.mxu0 %v1550
  %1591 = vmatpush.bf16.msra.mxu0 %v1549
  %1592 = vmatpush.bf16.msra.mxu0 %v1548
  %1593 = vmatmul.bf16.gmra.mxu0 %v1439
  %v1594 = vpop.f32.mrf.mxu0
  %v1595 = vadd.f32 %v1582, %v1594
  %v1596 = vpop.f32.mrf.mxu0
  %1597 = vdwg.mxu0
  %v1598 = vtanh.pop %v1595
  %1599 = vst [vmem:[#allocation2] sm:$0xff] %v1438
  %1600 = vst [vmem:[%s110] sm:$0xff] %v1598
  %s1601 = scalar_lea.vmem %s4, 40
  %1602 = vst [vmem:[%s1601] sm:$0xff] %v1598
  %v1603 = vld [vmem:[#allocation2] sm:$0xff]
  %v1604 = vld [vmem:[%s110] sm:$0xff]
  %s1605 = scalar_lea.vmem %s0, 28
  %v1606 = vld [vmem:[%s1605] sm:$0xf]
  %v1607 = vunpack.c.l.bf16 %v1606
  %v1608 = vpack.c.bf16 %v1603, %v1603
  %v1609 = vld [vmem:[%s2] sm:$0xf]
  %v1610 = vld [vmem:[%s2 + $0x4] sm:$0xf]
  %v1611 = vld [vmem:[%s2 + $0x8] sm:$0xf]
  %v1612 = vld [vmem:[%s2 + $0xc] sm:$0xf]
  %v1613 = vld [vmem:[%s2 + $0x10] sm:$0xf]
  %v1614 = vld [vmem:[%s2 + $0x14] sm:$0xf]
  %v1615 = vld [vmem:[%s2 + $0x18] sm:$0xf]
  %v1616 = vld [vmem:[%s2 + $0x1c] sm:$0xf]
  %v1617 = vld [vmem:[%s2 + $0x20] sm:$0xf]
  %v1618 = vld [vmem:[%s2 + $0x24] sm:$0xf]
  %v1619 = vld [vmem:[%s2 + $0x28] sm:$0xf]
  %v1620 = vld [vmem:[%s2 + $0x2c] sm:$0xf]
  %v1621 = vld [vmem:[%s2 + $0x30] sm:$0xf]
  %v1622 = vld [vmem:[%s2 + $0x34] sm:$0xf]
  %v1623 = vld [vmem:[%s2 + $0x38] sm:$0xf]
  %v1624 = vld [vmem:[%s2 + $0x3c] sm:$0xf]
  %v1641 = vunpack.c.l.b16 %v1609
  %v1642 = vunpack.c.l.b16 %v1610
  %v1643 = vunpack.c.l.b16 %v1611
  %v1644 = vunpack.c.l.b16 %v1612
  %v1645 = vunpack.c.l.b16 %v1613
  %v1646 = vunpack.c.l.b16 %v1614
  %v1647 = vunpack.c.l.b16 %v1615
  %v1648 = vunpack.c.l.b16 %v1616
  %v1649 = vunpack.c.l.b16 %v1617
  %v1650 = vunpack.c.l.b16 %v1618
  %v1651 = vunpack.c.l.b16 %v1619
  %v1652 = vunpack.c.l.b16 %v1620
  %v1653 = vunpack.c.l.b16 %v1621
  %v1654 = vunpack.c.l.b16 %v1622
  %v1655 = vunpack.c.l.b16 %v1623
  %v1656 = vunpack.c.l.b16 %v1624
  %v1657 = vpack.c.b16 %v1642, %v1641
  %v1658 = vpack.c.b16 %v1644, %v1643
  %v1659 = vpack.c.b16 %v1646, %v1645
  %v1660 = vpack.c.b16 %v1648, %v1647
  %v1661 = vpack.c.b16 %v1650, %v1649
  %v1662 = vpack.c.b16 %v1652, %v1651
  %v1663 = vpack.c.b16 %v1654, %v1653
  %v1664 = vpack.c.b16 %v1656, %v1655
  %1673 = vmatpush.bf16.msra.mxu0 %v1664
  %1674 = vmatpush.bf16.msra.mxu0 %v1663
  %1675 = vmatpush.bf16.msra.mxu0 %v1662
  %1676 = vmatpush.bf16.msra.mxu0 %v1661
  %1677 = vmatpush.bf16.msra.mxu0 %v1660
  %1678 = vmatpush.bf16.msra.mxu0 %v1659
  %1679 = vmatpush.bf16.msra.mxu0 %v1658
  %1680 = vmatpush.bf16.msra.mxu0 %v1657
  %1681 = vmatmul.bf16.gmra.mxu0 %v1608
  %v1682 = vpop.f32.mrf.mxu0
  %v1683 = vadd.f32 0.0, %v1682
  %v1684 = vpop.f32.mrf.mxu0
  %1685 = vdwg.mxu0
  %v1686 = vadd.f32 %v1607, %v1683
  %v1687 = vtanh.pop %v1686
  %v1688 = vpack.c.bf16 %v1604, %v1604
  %v1689 = vld [vmem:[%s1] sm:$0xf]
  %v1690 = vld [vmem:[%s1 + $0x4] sm:$0xf]
  %v1691 = vld [vmem:[%s1 + $0x8] sm:$0xf]
  %v1692 = vld [vmem:[%s1 + $0xc] sm:$0xf]
  %v1693 = vld [vmem:[%s1 + $0x10] sm:$0xf]
  %v1694 = vld [vmem:[%s1 + $0x14] sm:$0xf]
  %v1695 = vld [vmem:[%s1 + $0x18] sm:$0xf]
  %v1696 = vld [vmem:[%s1 + $0x1c] sm:$0xf]
  %v1697 = vld [vmem:[%s1 + $0x20] sm:$0xf]
  %v1698 = vld [vmem:[%s1 + $0x24] sm:$0xf]
  %v1699 = vld [vmem:[%s1 + $0x28] sm:$0xf]
  %v1700 = vld [vmem:[%s1 + $0x2c] sm:$0xf]
  %v1701 = vld [vmem:[%s1 + $0x30] sm:$0xf]
  %v1702 = vld [vmem:[%s1 + $0x34] sm:$0xf]
  %v1703 = vld [vmem:[%s1 + $0x38] sm:$0xf]
  %v1704 = vld [vmem:[%s1 + $0x3c] sm:$0xf]
  %v1705 = vld [vmem:[%s1 + $0x40] sm:$0xf]
  %v1706 = vld [vmem:[%s1 + $0x44] sm:$0xf]
  %v1707 = vld [vmem:[%s1 + $0x48] sm:$0xf]
  %v1708 = vld [vmem:[%s1 + $0x4c] sm:$0xf]
  %v1709 = vld [vmem:[%s1 + $0x50] sm:$0xf]
  %v1710 = vld [vmem:[%s1 + $0x54] sm:$0xf]
  %v1711 = vld [vmem:[%s1 + $0x58] sm:$0xf]
  %v1712 = vld [vmem:[%s1 + $0x5c] sm:$0xf]
  %v1713 = vld [vmem:[%s1 + $0x60] sm:$0xf]
  %v1714 = vld [vmem:[%s1 + $0x64] sm:$0xf]
  %v1715 = vld [vmem:[%s1 + $0x68] sm:$0xf]
  %v1716 = vld [vmem:[%s1 + $0x6c] sm:$0xf]
  %v1717 = vld [vmem:[%s1 + $0x70] sm:$0xf]
  %v1718 = vld [vmem:[%s1 + $0x74] sm:$0xf]
  %v1719 = vld [vmem:[%s1 + $0x78] sm:$0xf]
  %v1720 = vld [vmem:[%s1 + $0x7c] sm:$0xf]
  %v1721 = vld [vmem:[%s3] sm:$0x1]
  %v1723 = vperm.slane %v1721, 0
  %v1757 = vunpack.c.l.b16 %v1689
  %v1758 = vunpack.c.l.b16 %v1690
  %v1759 = vunpack.c.l.b16 %v1691
  %v1760 = vunpack.c.l.b16 %v1692
  %v1761 = vunpack.c.l.b16 %v1693
  %v1762 = vunpack.c.l.b16 %v1694
  %v1763 = vunpack.c.l.b16 %v1695
  %v1764 = vunpack.c.l.b16 %v1696
  %v1765 = vunpack.c.l.b16 %v1697
  %v1766 = vunpack.c.l.b16 %v1698
  %v1767 = vunpack.c.l.b16 %v1699
  %v1768 = vunpack.c.l.b16 %v1700
  %v1769 = vunpack.c.l.b16 %v1701
  %v1770 = vunpack.c.l.b16 %v1702
  %v1771 = vunpack.c.l.b16 %v1703
  %v1772 = vunpack.c.l.b16 %v1704
  %v1773 = vunpack.c.l.b16 %v1705
  %v1774 = vunpack.c.l.b16 %v1706
  %v1775 = vunpack.c.l.b16 %v1707
  %v1776 = vunpack.c.l.b16 %v1708
  %v1777 = vunpack.c.l.b16 %v1709
  %v1778 = vunpack.c.l.b16 %v1710
  %v1779 = vunpack.c.l.b16 %v1711
  %v1780 = vunpack.c.l.b16 %v1712
  %v1781 = vunpack.c.l.b16 %v1713
  %v1782 = vunpack.c.l.b16 %v1714
  %v1783 = vunpack.c.l.b16 %v1715
  %v1784 = vunpack.c.l.b16 %v1716
  %v1785 = vunpack.c.l.b16 %v1717
  %v1786 = vunpack.c.l.b16 %v1718
  %v1787 = vunpack.c.l.b16 %v1719
  %v1788 = vunpack.c.l.b16 %v1720
  %v1789 = vpack.c.b16 %v1758, %v1757
  %v1790 = vpack.c.b16 %v1760, %v1759
  %v1791 = vpack.c.b16 %v1762, %v1761
  %v1792 = vpack.c.b16 %v1764, %v1763
  %v1793 = vpack.c.b16 %v1766, %v1765
  %v1794 = vpack.c.b16 %v1768, %v1767
  %v1795 = vpack.c.b16 %v1770, %v1769
  %v1796 = vpack.c.b16 %v1772, %v1771
  %v1797 = vpack.c.b16 %v1774, %v1773
  %v1798 = vpack.c.b16 %v1776, %v1775
  %v1799 = vpack.c.b16 %v1778, %v1777
  %v1800 = vpack.c.b16 %v1780, %v1779
  %v1801 = vpack.c.b16 %v1782, %v1781
  %v1802 = vpack.c.b16 %v1784, %v1783
  %v1803 = vpack.c.b16 %v1786, %v1785
  %v1804 = vpack.c.b16 %v1788, %v1787
  %1821 = vmatpush.bf16.msra.mxu0 %v1796
  %1822 = vmatpush.bf16.msra.mxu0 %v1795
  %1823 = vmatpush.bf16.msra.mxu0 %v1794
  %1824 = vmatpush.bf16.msra.mxu0 %v1793
  %1825 = vmatpush.bf16.msra.mxu0 %v1792
  %1826 = vmatpush.bf16.msra.mxu0 %v1791
  %1827 = vmatpush.bf16.msra.mxu0 %v1790
  %1828 = vmatpush.bf16.msra.mxu0 %v1789
  %1829 = vmatmul.bf16.gmra.mxu0 %v1608
  %v1830 = vpop.f32.mrf.mxu0
  %v1831 = vadd.f32 %v1723, %v1830
  %v1832 = vpop.f32.mrf.mxu0
  %1833 = vdwg.mxu0
  %1834 = vmatpush.bf16.msra.mxu0 %v1804
  %1835 = vmatpush.bf16.msra.mxu0 %v1803
  %1836 = vmatpush.bf16.msra.mxu0 %v1802
  %1837 = vmatpush.bf16.msra.mxu0 %v1801
  %1838 = vmatpush.bf16.msra.mxu0 %v1800
  %1839 = vmatpush.bf16.msra.mxu0 %v1799
  %1840 = vmatpush.bf16.msra.mxu0 %v1798
  %1841 = vmatpush.bf16.msra.mxu0 %v1797
  %1842 = vmatmul.bf16.gmra.mxu0 %v1688
  %v1843 = vpop.f32.mrf.mxu0
  %v1844 = vadd.f32 %v1831, %v1843
  %v1845 = vpop.f32.mrf.mxu0
  %1846 = vdwg.mxu0
  %v1847 = vtanh.pop %v1844
  %1848 = vst [vmem:[#allocation2] sm:$0xff] %v1687
  %1849 = vst [vmem:[%s110] sm:$0xff] %v1847
  %s1850 = scalar_lea.vmem %s4, 48
  %1851 = vst [vmem:[%s1850] sm:$0xff] %v1847
  %v1852 = vld [vmem:[#allocation2] sm:$0xff]
  %v1853 = vld [vmem:[%s110] sm:$0xff]
  %v1854 = vpack.c.bf16 %v1852, %v1852
  %v1855 = vpack.c.bf16 %v1853, %v1853
  %v1856 = vld [vmem:[%s1] sm:$0xf]
  %v1857 = vld [vmem:[%s1 + $0x4] sm:$0xf]
  %v1858 = vld [vmem:[%s1 + $0x8] sm:$0xf]
  %v1859 = vld [vmem:[%s1 + $0xc] sm:$0xf]
  %v1860 = vld [vmem:[%s1 + $0x10] sm:$0xf]
  %v1861 = vld [vmem:[%s1 + $0x14] sm:$0xf]
  %v1862 = vld [vmem:[%s1 + $0x18] sm:$0xf]
  %v1863 = vld [vmem:[%s1 + $0x1c] sm:$0xf]
  %v1864 = vld [vmem:[%s1 + $0x20] sm:$0xf]
  %v1865 = vld [vmem:[%s1 + $0x24] sm:$0xf]
  %v1866 = vld [vmem:[%s1 + $0x28] sm:$0xf]
  %v1867 = vld [vmem:[%s1 + $0x2c] sm:$0xf]
  %v1868 = vld [vmem:[%s1 + $0x30] sm:$0xf]
  %v1869 = vld [vmem:[%s1 + $0x34] sm:$0xf]
  %v1870 = vld [vmem:[%s1 + $0x38] sm:$0xf]
  %v1871 = vld [vmem:[%s1 + $0x3c] sm:$0xf]
  %v1872 = vld [vmem:[%s1 + $0x40] sm:$0xf]
  %v1873 = vld [vmem:[%s1 + $0x44] sm:$0xf]
  %v1874 = vld [vmem:[%s1 + $0x48] sm:$0xf]
  %v1875 = vld [vmem:[%s1 + $0x4c] sm:$0xf]
  %v1876 = vld [vmem:[%s1 + $0x50] sm:$0xf]
  %v1877 = vld [vmem:[%s1 + $0x54] sm:$0xf]
  %v1878 = vld [vmem:[%s1 + $0x58] sm:$0xf]
  %v1879 = vld [vmem:[%s1 + $0x5c] sm:$0xf]
  %v1880 = vld [vmem:[%s1 + $0x60] sm:$0xf]
  %v1881 = vld [vmem:[%s1 + $0x64] sm:$0xf]
  %v1882 = vld [vmem:[%s1 + $0x68] sm:$0xf]
  %v1883 = vld [vmem:[%s1 + $0x6c] sm:$0xf]
  %v1884 = vld [vmem:[%s1 + $0x70] sm:$0xf]
  %v1885 = vld [vmem:[%s1 + $0x74] sm:$0xf]
  %v1886 = vld [vmem:[%s1 + $0x78] sm:$0xf]
  %v1887 = vld [vmem:[%s1 + $0x7c] sm:$0xf]
  %v1888 = vld [vmem:[%s3] sm:$0x1]
  %v1890 = vperm.slane %v1888, 0
  %v1924 = vunpack.c.l.b16 %v1856
  %v1925 = vunpack.c.l.b16 %v1857
  %v1926 = vunpack.c.l.b16 %v1858
  %v1927 = vunpack.c.l.b16 %v1859
  %v1928 = vunpack.c.l.b16 %v1860
  %v1929 = vunpack.c.l.b16 %v1861
  %v1930 = vunpack.c.l.b16 %v1862
  %v1931 = vunpack.c.l.b16 %v1863
  %v1932 = vunpack.c.l.b16 %v1864
  %v1933 = vunpack.c.l.b16 %v1865
  %v1934 = vunpack.c.l.b16 %v1866
  %v1935 = vunpack.c.l.b16 %v1867
  %v1936 = vunpack.c.l.b16 %v1868
  %v1937 = vunpack.c.l.b16 %v1869
  %v1938 = vunpack.c.l.b16 %v1870
  %v1939 = vunpack.c.l.b16 %v1871
  %v1940 = vunpack.c.l.b16 %v1872
  %v1941 = vunpack.c.l.b16 %v1873
  %v1942 = vunpack.c.l.b16 %v1874
  %v1943 = vunpack.c.l.b16 %v1875
  %v1944 = vunpack.c.l.b16 %v1876
  %v1945 = vunpack.c.l.b16 %v1877
  %v1946 = vunpack.c.l.b16 %v1878
  %v1947 = vunpack.c.l.b16 %v1879
  %v1948 = vunpack.c.l.b16 %v1880
  %v1949 = vunpack.c.l.b16 %v1881
  %v1950 = vunpack.c.l.b16 %v1882
  %v1951 = vunpack.c.l.b16 %v1883
  %v1952 = vunpack.c.l.b16 %v1884
  %v1953 = vunpack.c.l.b16 %v1885
  %v1954 = vunpack.c.l.b16 %v1886
  %v1955 = vunpack.c.l.b16 %v1887
  %v1956 = vpack.c.b16 %v1925, %v1924
  %v1957 = vpack.c.b16 %v1927, %v1926
  %v1958 = vpack.c.b16 %v1929, %v1928
  %v1959 = vpack.c.b16 %v1931, %v1930
  %v1960 = vpack.c.b16 %v1933, %v1932
  %v1961 = vpack.c.b16 %v1935, %v1934
  %v1962 = vpack.c.b16 %v1937, %v1936
  %v1963 = vpack.c.b16 %v1939, %v1938
  %v1964 = vpack.c.b16 %v1941, %v1940
  %v1965 = vpack.c.b16 %v1943, %v1942
  %v1966 = vpack.c.b16 %v1945, %v1944
  %v1967 = vpack.c.b16 %v1947, %v1946
  %v1968 = vpack.c.b16 %v1949, %v1948
  %v1969 = vpack.c.b16 %v1951, %v1950
  %v1970 = vpack.c.b16 %v1953, %v1952
  %v1971 = vpack.c.b16 %v1955, %v1954
  %1988 = vmatpush.bf16.msra.mxu0 %v1963
  %1989 = vmatpush.bf16.msra.mxu0 %v1962
  %1990 = vmatpush.bf16.msra.mxu0 %v1961
  %1991 = vmatpush.bf16.msra.mxu0 %v1960
  %1992 = vmatpush.bf16.msra.mxu0 %v1959
  %1993 = vmatpush.bf16.msra.mxu0 %v1958
  %1994 = vmatpush.bf16.msra.mxu0 %v1957
  %1995 = vmatpush.bf16.msra.mxu0 %v1956
  %1996 = vmatmul.bf16.gmra.mxu0 %v1854
  %v1997 = vpop.f32.mrf.mxu0
  %v1998 = vadd.f32 %v1890, %v1997
  %v1999 = vpop.f32.mrf.mxu0
  %2000 = vdwg.mxu0
  %2001 = vmatpush.bf16.msra.mxu0 %v1971
  %2002 = vmatpush.bf16.msra.mxu0 %v1970
  %2003 = vmatpush.bf16.msra.mxu0 %v1969
  %2004 = vmatpush.bf16.msra.mxu0 %v1968
  %2005 = vmatpush.bf16.msra.mxu0 %v1967
  %2006 = vmatpush.bf16.msra.mxu0 %v1966
  %2007 = vmatpush.bf16.msra.mxu0 %v1965
  %2008 = vmatpush.bf16.msra.mxu0 %v1964
  %2009 = vmatmul.bf16.gmra.mxu0 %v1855
  %v2010 = vpop.f32.mrf.mxu0
  %v2011 = vadd.f32 %v1998, %v2010
  %v2012 = vpop.f32.mrf.mxu0
  %2013 = vdwg.mxu0
  %v2014 = vtanh.pop %v2011
  %2015 = vst [vmem:[%s110] sm:$0xff] %v2014
  %s2016 = scalar_lea.vmem %s4, 56
  %2017 = vst [vmem:[%s2016] sm:$0xff] %v2014
  // Predicated region
  $region22: #{encoder_forward.1} parent=0 // pred_check
    %p2018 = pneg %p19
  $region23: #{encoder_forward.1} parent=0 // pred_check_branch
    %2020 = sbr.rel (%p2018) target = $region25
  $region24: #{encoder_forward.1} parent=0 // pred_region
    %v2021 = vld [vmem:[#allocation2] sm:$0xff]
    %v2022 = vld [vmem:[#allocation2 + $0x8] sm:$0xff]
    %2023 = vst [vmem:[%s5] sm:$0xff] %v2021
    %2024 = vst [vmem:[%s5 + $0x8] sm:$0xff] %v2022
  $region25: #{encoder_forward.1} parent=0 // pred_fallthru
    _
  // Predicated region
  $region26: #{encoder_forward.1} parent=0 // pred_check
    _
  $region27: #{encoder_forward.1} parent=0 // pred_check_branch
    %2026 = sbr.rel (0) target = $region29
  $region28: #{encoder_forward.1} parent=0 // pred_region
    _
  $region29: #{encoder_forward.1} parent=0 // pred_fallthru
    _
  // Predicated region
  $region30: #{encoder_forward.1} parent=0 // pred_check
    _
  $region31: #{encoder_forward.1} parent=0 // pred_check_branch
    %2028 = sbr.rel (0) target = $region33
  $region32: #{encoder_forward.1} parent=0 // pred_region
    _
  $region33: #{encoder_forward.1} parent=0 // pred_fallthru
    _
  // Predicated region
  $region34: #{encoder_forward.1} parent=0 // pred_check
    _
  $region35: #{encoder_forward.1} parent=0 // pred_check_branch
    %2030 = sbr.rel (0) target = $region37
  $region36: #{encoder_forward.1} parent=0 // pred_region
    _
  $region37: #{encoder_forward.1} parent=0 // pred_fallthru
    _
  // Predicated region
  $region38: #{encoder_forward.1} parent=0 // pred_check
    _
  $region39: #{encoder_forward.1} parent=0 // pred_check_branch
    %2032 = sbr.rel (0) target = $region41
  $region40: #{encoder_forward.1} parent=0 // pred_region
    _
  $region41: #{encoder_forward.1} parent=0 // pred_fallthru
    _

// kernel: encoder_forward.1
$region0: #{encoder_forward.1}
  #allocation0 [shape = 'u32[]', space=smem, size = 0x4, offset = 0x4, fixed_abs, tag = 'smem constant byte address 0x4 - core index']
  #allocation1 [shape = 'u32[72,128]{1,0:T(1,128)}', space=vmem, size = 0x9000, scoped, tag = 'internal scratch']
  #allocation2 [shape = 'f32[2,8,128]{2,1,0:T(8,128)}', space=vmem, size = 0x2000, scoped, tag = 'scratch operand']
  %s0 = inlined_call_operand.vmem [shape: bf16[8,8,128], index: 0, kind: input, shape index: {}]
  %s1 = inlined_call_operand.vmem [shape: bf16[1,256,128], index: 1, kind: input, shape index: {}]
  %s2 = inlined_call_operand.vmem [shape: bf16[128,128], index: 2, kind: input, shape index: {}]
  %s3 = inlined_call_operand.vmem [shape: f32[1,1,128], index: 3, kind: input, shape index: {}]
  %s4 = inlined_call_operand.vmem [shape: f32[8,8,128], index: 4, kind: output, shape index: {0}]
  %s5 = inlined_call_operand.vmem [shape: f32[2,8,128], index: 5, kind: output, shape index: {1}]
  %6 = xla_tuple %s4, %s5
  %s7 = sld [smem:[#allocation0]]
  $region42: #{encoder_forward.1} parent=0
    _
  %s9 = ssub.s32 1, %s7
  %s10 = scalar_select 0, %s9, %s7
  // Predicated region
  $region2: #{encoder_forward.1} parent=0 // pred_check
    _
  $region3: #{encoder_forward.1} parent=0 // pred_check_branch
    %12 = sbr.rel (0) target = $region5
  $region4: #{encoder_forward.1} parent=0 // pred_region
    _
  $region5: #{encoder_forward.1} parent=0 // pred_fallthru
    _
  // Predicated region
  $region6: #{encoder_forward.1} parent=0 // pred_check
    _
  $region7: #{encoder_forward.1} parent=0 // pred_check_branch
    %14 = sbr.rel (0) target = $region9
  $region8: #{encoder_forward.1} parent=0 // pred_region
    _
  $region9: #{encoder_forward.1} parent=0 // pred_fallthru
    _
  // Predicated region
  $region10: #{encoder_forward.1} parent=0 // pred_check
    _
  $region11: #{encoder_forward.1} parent=0 // pred_check_branch
    %16 = sbr.rel (0) target = $region13
  $region12: #{encoder_forward.1} parent=0 // pred_region
    _
  $region13: #{encoder_forward.1} parent=0 // pred_fallthru
    _
  // Predicated region
  $region14: #{encoder_forward.1} parent=0 // pred_check
    _
  $region15: #{encoder_forward.1} parent=0 // pred_check_branch
    %18 = sbr.rel (0) target = $region17
  $region16: #{encoder_forward.1} parent=0 // pred_region
    _
  $region17: #{encoder_forward.1} parent=0 // pred_fallthru
    _
  %p19 = scmp.eq.s32.totalorder 0, 0
  // Predicated region
  $region18: #{encoder_forward.1} parent=0 // pred_check
    %p20 = pneg %p19
  $region19: #{encoder_forward.1} parent=0 // pred_check_branch
    %22 = sbr.rel (%p20) target = $region21
  $region20: #{encoder_forward.1} parent=0 // pred_region
    %23 = vst [vmem:[#allocation2] sm:$0xff] 0.0
    %24 = vst [vmem:[#allocation2 + $0x8] sm:$0xff] 0.0
  $region21: #{encoder_forward.1} parent=0 // pred_fallthru
    _
  %v25 = vld [vmem:[#allocation2] sm:$0xff]
  %v26 = vld [vmem:[%s0] sm:$0xf]
  %v27 = vunpack.c.l.bf16 %v26
  %v28 = vpack.c.bf16 %v25, %v25
  %v29 = vld [vmem:[%s2] sm:$0xf]
  %v30 = vld [vmem:[%s2 + $0x4] sm:$0xf]
  %v31 = vld [vmem:[%s2 + $0x8] sm:$0xf]
  %v32 = vld [vmem:[%s2 + $0xc] sm:$0xf]
  %v33 = vld [vmem:[%s2 + $0x10] sm:$0xf]
  %v34 = vld [vmem:[%s2 + $0x14] sm:$0xf]
  %v35 = vld [vmem:[%s2 + $0x18] sm:$0xf]
  %v36 = vld [vmem:[%s2 + $0x1c] sm:$0xf]
  %v37 = vld [vmem:[%s2 + $0x20] sm:$0xf]
  %v38 = vld [vmem:[%s2 + $0x24] sm:$0xf]
  %v39 = vld [vmem:[%s2 + $0x28] sm:$0xf]
  %v40 = vld [vmem:[%s2 + $0x2c] sm:$0xf]
  %v41 = vld [vmem:[%s2 + $0x30] sm:$0xf]
  %v42 = vld [vmem:[%s2 + $0x34] sm:$0xf]
  %v43 = vld [vmem:[%s2 + $0x38] sm:$0xf]
  %v44 = vld [vmem:[%s2 + $0x3c] sm:$0xf]
  %v61 = vunpack.c.l.b16 %v29
  %v62 = vunpack.c.l.b16 %v30
  %v63 = vunpack.c.l.b16 %v31
  %v64 = vunpack.c.l.b16 %v32
  %v65 = vunpack.c.l.b16 %v33
  %v66 = vunpack.c.l.b16 %v34
  %v67 = vunpack.c.l.b16 %v35
  %v68 = vunpack.c.l.b16 %v36
  %v69 = vunpack.c.l.b16 %v37
  %v70 = vunpack.c.l.b16 %v38
  %v71 = vunpack.c.l.b16 %v39
  %v72 = vunpack.c.l.b16 %v40
  %v73 = vunpack.c.l.b16 %v41
  %v74 = vunpack.c.l.b16 %v42
  %v75 = vunpack.c.l.b16 %v43
  %v76 = vunpack.c.l.b16 %v44
  %v77 = vpack.c.b16 %v62, %v61
  %v78 = vpack.c.b16 %v64, %v63
  %v79 = vpack.c.b16 %v66, %v65
  %v80 = vpack.c.b16 %v68, %v67
  %v81 = vpack.c.b16 %v70, %v69
  %v82 = vpack.c.b16 %v72, %v71
  %v83 = vpack.c.b16 %v74, %v73
  %v84 = vpack.c.b16 %v76, %v75
  %93 = vmatpush.bf16.msra.mxu0 %v84
  %94 = vmatpush.bf16.msra.mxu0 %v83
  %95 = vmatpush.bf16.msra.mxu0 %v82
  %96 = vmatpush.bf16.msra.mxu0 %v81
  %97 = vmatpush.bf16.msra.mxu0 %v80
  %98 = vmatpush.bf16.msra.mxu0 %v79
  %99 = vmatpush.bf16.msra.mxu0 %v78
  %100 = vmatpush.bf16.msra.mxu0 %v77
  %101 = vmatmul.bf16.gmra.mxu0 %v28
  %v102 = vpop.f32.mrf.mxu0
  %v103 = vadd.f32 0.0, %v102
  %v104 = vpop.f32.mrf.mxu0
  %105 = vdwg.mxu0
  %v106 = vadd.f32 %v27, %v103
  %v107 = vtanh.pop %v106
  %108 = vst [vmem:[#allocation2] sm:$0xff] %v107
  %v109 = vld [vmem:[#allocation2] sm:$0xff]
  %s110 = scalar_lea.vmem [#allocation2], 8
  %v111 = vld [vmem:[%s110] sm:$0xff]
  %s112 = scalar_lea.vmem %s0, 4
  %v113 = vld [vmem:[%s112] sm:$0xf]
  %v114 = vunpack.c.l.bf16 %v113
  %v115 = vpack.c.bf16 %v109, %v109
  %v116 = vld [vmem:[%s2] sm:$0xf]
  %v117 = vld [vmem:[%s2 + $0x4] sm:$0xf]
  %v118 = vld [vmem:[%s2 + $0x8] sm:$0xf]
  %v119 = vld [vmem:[%s2 + $0xc] sm:$0xf]
  %v120 = vld [vmem:[%s2 + $0x10] sm:$0xf]
  %v121 = vld [vmem:[%s2 + $0x14] sm:$0xf]
  %v122 = vld [vmem:[%s2 + $0x18] sm:$0xf]
  %v123 = vld [vmem:[%s2 + $0x1c] sm:$0xf]
  %v124 = vld [vmem:[%s2 + $0x20] sm:$0xf]
  %v125 = vld [vmem:[%s2 + $0x24] sm:$0xf]
  %v126 = vld [vmem:[%s2 + $0x28] sm:$0xf]
  %v127 = vld [vmem:[%s2 + $0x2c] sm:$0xf]
  %v128 = vld [vmem:[%s2 + $0x30] sm:$0xf]
  %v129 = vld [vmem:[%s2 + $0x34] sm:$0xf]
  %v130 = vld [vmem:[%s2 + $0x38] sm:$0xf]
  %v131 = vld [vmem:[%s2 + $0x3c] sm:$0xf]
  %v148 = vunpack.c.l.b16 %v116
  %v149 = vunpack.c.l.b16 %v117
  %v150 = vunpack.c.l.b16 %v118
  %v151 = vunpack.c.l.b16 %v119
  %v152 = vunpack.c.l.b16 %v120
  %v153 = vunpack.c.l.b16 %v121
  %v154 = vunpack.c.l.b16 %v122
  %v155 = vunpack.c.l.b16 %v123
  %v156 = vunpack.c.l.b16 %v124
  %v157 = vunpack.c.l.b16 %v125
  %v158 = vunpack.c.l.b16 %v126
  %v159 = vunpack.c.l.b16 %v127
  %v160 = vunpack.c.l.b16 %v128
  %v161 = vunpack.c.l.b16 %v129
  %v162 = vunpack.c.l.b16 %v130
  %v163 = vunpack.c.l.b16 %v131
  %v164 = vpack.c.b16 %v149, %v148
  %v165 = vpack.c.b16 %v151, %v150
  %v166 = vpack.c.b16 %v153, %v152
  %v167 = vpack.c.b16 %v155, %v154
  %v168 = vpack.c.b16 %v157, %v156
  %v169 = vpack.c.b16 %v159, %v158
  %v170 = vpack.c.b16 %v161, %v160
  %v171 = vpack.c.b16 %v163, %v162
  %180 = vmatpush.bf16.msra.mxu0 %v171
  %181 = vmatpush.bf16.msra.mxu0 %v170
  %182 = vmatpush.bf16.msra.mxu0 %v169
  %183 = vmatpush.bf16.msra.mxu0 %v168
  %184 = vmatpush.bf16.msra.mxu0 %v167
  %185 = vmatpush.bf16.msra.mxu0 %v166
  %186 = vmatpush.bf16.msra.mxu0 %v165
  %187 = vmatpush.bf16.msra.mxu0 %v164
  %188 = vmatmul.bf16.gmra.mxu0 %v115
  %v189 = vpop.f32.mrf.mxu0
  %v190 = vadd.f32 0.0, %v189
  %v191 = vpop.f32.mrf.mxu0
  %192 = vdwg.mxu0
  %v193 = vadd.f32 %v114, %v190
  %v194 = vtanh.pop %v193
  %v195 = vpack.c.bf16 %v111, %v111
  %v196 = vld [vmem:[%s1] sm:$0xf]
  %v197 = vld [vmem:[%s1 + $0x4] sm:$0xf]
  %v198 = vld [vmem:[%s1 + $0x8] sm:$0xf]
  %v199 = vld [vmem:[%s1 + $0xc] sm:$0xf]
  %v200 = vld [vmem:[%s1 + $0x10] sm:$0xf]
  %v201 = vld [vmem:[%s1 + $0x14] sm:$0xf]
  %v202 = vld [vmem:[%s1 + $0x18] sm:$0xf]
  %v203 = vld [vmem:[%s1 + $0x1c] sm:$0xf]
  %v204 = vld [vmem:[%s1 + $0x20] sm:$0xf]
  %v205 = vld [vmem:[%s1 + $0x24] sm:$0xf]
  %v206 = vld [vmem:[%s1 + $0x28] sm:$0xf]
  %v207 = vld [vmem:[%s1 + $0x2c] sm:$0xf]
  %v208 = vld [vmem:[%s1 + $0x30] sm:$0xf]
  %v209 = vld [vmem:[%s1 + $0x34] sm:$0xf]
  %v210 = vld [vmem:[%s1 + $0x38] sm:$0xf]
  %v211 = vld [vmem:[%s1 + $0x3c] sm:$0xf]
  %v212 = vld [vmem:[%s1 + $0x40] sm:$0xf]
  %v213 = vld [vmem:[%s1 + $0x44] sm:$0xf]
  %v214 = vld [vmem:[%s1 + $0x48] sm:$0xf]
  %v215 = vld [vmem:[%s1 + $0x4c] sm:$0xf]
  %v216 = vld [vmem:[%s1 + $0x50] sm:$0xf]
  %v217 = vld [vmem:[%s1 + $0x54] sm:$0xf]
  %v218 = vld [vmem:[%s1 + $0x58] sm:$0xf]
  %v219 = vld [vmem:[%s1 + $0x5c] sm:$0xf]
  %v220 = vld [vmem:[%s1 + $0x60] sm:$0xf]
  %v221 = vld [vmem:[%s1 + $0x64] sm:$0xf]
  %v222 = vld [vmem:[%s1 + $0x68] sm:$0xf]
  %v223 = vld [vmem:[%s1 + $0x6c] sm:$0xf]
  %v224 = vld [vmem:[%s1 + $0x70] sm:$0xf]
  %v225 = vld [vmem:[%s1 + $0x74] sm:$0xf]
  %v226 = vld [vmem:[%s1 + $0x78] sm:$0xf]
  %v227 = vld [vmem:[%s1 + $0x7c] sm:$0xf]
  %v228 = vld [vmem:[%s3] sm:$0x1]
  %v230 = vperm.slane %v228, 0
  %v264 = vunpack.c.l.b16 %v196
  %v265 = vunpack.c.l.b16 %v197
  %v266 = vunpack.c.l.b16 %v198
  %v267 = vunpack.c.l.b16 %v199
  %v268 = vunpack.c.l.b16 %v200
  %v269 = vunpack.c.l.b16 %v201
  %v270 = vunpack.c.l.b16 %v202
  %v271 = vunpack.c.l.b16 %v203
  %v272 = vunpack.c.l.b16 %v204
  %v273 = vunpack.c.l.b16 %v205
  %v274 = vunpack.c.l.b16 %v206
  %v275 = vunpack.c.l.b16 %v207
  %v276 = vunpack.c.l.b16 %v208
  %v277 = vunpack.c.l.b16 %v209
  %v278 = vunpack.c.l.b16 %v210
  %v279 = vunpack.c.l.b16 %v211
  %v280 = vunpack.c.l.b16 %v212
  %v281 = vunpack.c.l.b16 %v213
  %v282 = vunpack.c.l.b16 %v214
  %v283 = vunpack.c.l.b16 %v215
  %v284 = vunpack.c.l.b16 %v216
  %v285 = vunpack.c.l.b16 %v217
  %v286 = vunpack.c.l.b16 %v218
  %v287 = vunpack.c.l.b16 %v219
  %v288 = vunpack.c.l.b16 %v220
  %v289 = vunpack.c.l.b16 %v221
  %v290 = vunpack.c.l.b16 %v222
  %v291 = vunpack.c.l.b16 %v223
  %v292 = vunpack.c.l.b16 %v224
  %v293 = vunpack.c.l.b16 %v225
  %v294 = vunpack.c.l.b16 %v226
  %v295 = vunpack.c.l.b16 %v227
  %v296 = vpack.c.b16 %v265, %v264
  %v297 = vpack.c.b16 %v267, %v266
  %v298 = vpack.c.b16 %v269, %v268
  %v299 = vpack.c.b16 %v271, %v270
  %v300 = vpack.c.b16 %v273, %v272
  %v301 = vpack.c.b16 %v275, %v274
  %v302 = vpack.c.b16 %v277, %v276
  %v303 = vpack.c.b16 %v279, %v278
  %v304 = vpack.c.b16 %v281, %v280
  %v305 = vpack.c.b16 %v283, %v282
  %v306 = vpack.c.b16 %v285, %v284
  %v307 = vpack.c.b16 %v287, %v286
  %v308 = vpack.c.b16 %v289, %v288
  %v309 = vpack.c.b16 %v291, %v290
  %v310 = vpack.c.b16 %v293, %v292
  %v311 = vpack.c.b16 %v295, %v294
  %328 = vmatpush.bf16.msra.mxu0 %v303
  %329 = vmatpush.bf16.msra.mxu0 %v302
  %330 = vmatpush.bf16.msra.mxu0 %v301
  %331 = vmatpush.bf16.msra.mxu0 %v300
  %332 = vmatpush.bf16.msra.mxu0 %v299
  %333 = vmatpush.bf16.msra.mxu0 %v298
  %334 = vmatpush.bf16.msra.mxu0 %v297
  %335 = vmatpush.bf16.msra.mxu0 %v296
  %336 = vmatmul.bf16.gmra.mxu0 %v115
  %v337 = vpop.f32.mrf.mxu0
  %v338 = vadd.f32 %v230, %v337
  %v339 = vpop.f32.mrf.mxu0
  %340 = vdwg.mxu0
  %341 = vmatpush.bf16.msra.mxu0 %v311
  %342 = vmatpush.bf16.msra.mxu0 %v310
  %343 = vmatpush.bf16.msra.mxu0 %v309
  %344 = vmatpush.bf16.msra.mxu0 %v308
  %345 = vmatpush.bf16.msra.mxu0 %v307
  %346 = vmatpush.bf16.msra.mxu0 %v306
  %347 = vmatpush.bf16.msra.mxu0 %v305
  %348 = vmatpush.bf16.msra.mxu0 %v304
  %349 = vmatmul.bf16.gmra.mxu0 %v195
  %v350 = vpop.f32.mrf.mxu0
  %v351 = vadd.f32 %v338, %v350
  %v352 = vpop.f32.mrf.mxu0
  %353 = vdwg.mxu0
  %v354 = vtanh.pop %v351
  %355 = vst [vmem:[#allocation2] sm:$0xff] %v194
  %356 = vst [vmem:[%s110] sm:$0xff] %v354
  %357 = vst [vmem:[%s4] sm:$0xff] %v354
  %v358 = vld [vmem:[#allocation2] sm:$0xff]
  %v359 = vld [vmem:[%s110] sm:$0xff]
  %s360 = scalar_lea.vmem %s0, 8
  %v361 = vld [vmem:[%s360] sm:$0xf]
  %v362 = vunpack.c.l.bf16 %v361
  %v363 = vpack.c.bf16 %v358, %v358
  %v364 = vld [vmem:[%s2] sm:$0xf]
  %v365 = vld [vmem:[%s2 + $0x4] sm:$0xf]
  %v366 = vld [vmem:[%s2 + $0x8] sm:$0xf]
  %v367 = vld [vmem:[%s2 + $0xc] sm:$0xf]
  %v368 = vld [vmem:[%s2 + $0x10] sm:$0xf]
  %v369 = vld [vmem:[%s2 + $0x14] sm:$0xf]
  %v370 = vld [vmem:[%s2 + $0x18] sm:$0xf]
  %v371 = vld [vmem:[%s2 + $0x1c] sm:$0xf]
  %v372 = vld [vmem:[%s2 + $0x20] sm:$0xf]
  %v373 = vld [vmem:[%s2 + $0x24] sm:$0xf]
  %v374 = vld [vmem:[%s2 + $0x28] sm:$0xf]
  %v375 = vld [vmem:[%s2 + $0x2c] sm:$0xf]
  %v376 = vld [vmem:[%s2 + $0x30] sm:$0xf]
  %v377 = vld [vmem:[%s2 + $0x34] sm:$0xf]
  %v378 = vld [vmem:[%s2 + $0x38] sm:$0xf]
  %v379 = vld [vmem:[%s2 + $0x3c] sm:$0xf]
  %v396 = vunpack.c.l.b16 %v364
  %v397 = vunpack.c.l.b16 %v365
  %v398 = vunpack.c.l.b16 %v366
  %v399 = vunpack.c.l.b16 %v367
  %v400 = vunpack.c.l.b16 %v368
  %v401 = vunpack.c.l.b16 %v369
  %v402 = vunpack.c.l.b16 %v370
  %v403 = vunpack.c.l.b16 %v371
  %v404 = vunpack.c.l.b16 %v372
  %v405 = vunpack.c.l.b16 %v373
  %v406 = vunpack.c.l.b16 %v374
  %v407 = vunpack.c.l.b16 %v375
  %v408 = vunpack.c.l.b16 %v376
  %v409 = vunpack.c.l.b16 %v377
  %v410 = vunpack.c.l.b16 %v378
  %v411 = vunpack.c.l.b16 %v379
  %v412 = vpack.c.b16 %v397, %v396
  %v413 = vpack.c.b16 %v399, %v398
  %v414 = vpack.c.b16 %v401, %v400
  %v415 = vpack.c.b16 %v403, %v402
  %v416 = vpack.c.b16 %v405, %v404
  %v417 = vpack.c.b16 %v407, %v406
  %v418 = vpack.c.b16 %v409, %v408
  %v419 = vpack.c.b16 %v411, %v410
  %428 = vmatpush.bf16.msra.mxu0 %v419
  %429 = vmatpush.bf16.msra.mxu0 %v418
  %430 = vmatpush.bf16.msra.mxu0 %v417
  %431 = vmatpush.bf16.msra.mxu0 %v416
  %432 = vmatpush.bf16.msra.mxu0 %v415
  %433 = vmatpush.bf16.msra.mxu0 %v414
  %434 = vmatpush.bf16.msra.mxu0 %v413
  %435 = vmatpush.bf16.msra.mxu0 %v412
  %436 = vmatmul.bf16.gmra.mxu0 %v363
  %v437 = vpop.f32.mrf.mxu0
  %v438 = vadd.f32 0.0, %v437
  %v439 = vpop.f32.mrf.mxu0
  %440 = vdwg.mxu0
  %v441 = vadd.f32 %v362, %v438
  %v442 = vtanh.pop %v441
  %v443 = vpack.c.bf16 %v359, %v359
  %v444 = vld [vmem:[%s1] sm:$0xf]
  %v445 = vld [vmem:[%s1 + $0x4] sm:$0xf]
  %v446 = vld [vmem:[%s1 + $0x8] sm:$0xf]
  %v447 = vld [vmem:[%s1 + $0xc] sm:$0xf]
  %v448 = vld [vmem:[%s1 + $0x10] sm:$0xf]
  %v449 = vld [vmem:[%s1 + $0x14] sm:$0xf]
  %v450 = vld [vmem:[%s1 + $0x18] sm:$0xf]
  %v451 = vld [vmem:[%s1 + $0x1c] sm:$0xf]
  %v452 = vld [vmem:[%s1 + $0x20] sm:$0xf]
  %v453 = vld [vmem:[%s1 + $0x24] sm:$0xf]
  %v454 = vld [vmem:[%s1 + $0x28] sm:$0xf]
  %v455 = vld [vmem:[%s1 + $0x2c] sm:$0xf]
  %v456 = vld [vmem:[%s1 + $0x30] sm:$0xf]
  %v457 = vld [vmem:[%s1 + $0x34] sm:$0xf]
  %v458 = vld [vmem:[%s1 + $0x38] sm:$0xf]
  %v459 = vld [vmem:[%s1 + $0x3c] sm:$0xf]
  %v460 = vld [vmem:[%s1 + $0x40] sm:$0xf]
  %v461 = vld [vmem:[%s1 + $0x44] sm:$0xf]
  %v462 = vld [vmem:[%s1 + $0x48] sm:$0xf]
  %v463 = vld [vmem:[%s1 + $0x4c] sm:$0xf]
  %v464 = vld [vmem:[%s1 + $0x50] sm:$0xf]
  %v465 = vld [vmem:[%s1 + $0x54] sm:$0xf]
  %v466 = vld [vmem:[%s1 + $0x58] sm:$0xf]
  %v467 = vld [vmem:[%s1 + $0x5c] sm:$0xf]
  %v468 = vld [vmem:[%s1 + $0x60] sm:$0xf]
  %v469 = vld [vmem:[%s1 + $0x64] sm:$0xf]
  %v470 = vld [vmem:[%s1 + $0x68] sm:$0xf]
  %v471 = vld [vmem:[%s1 + $0x6c] sm:$0xf]
  %v472 = vld [vmem:[%s1 + $0x70] sm:$0xf]
  %v473 = vld [vmem:[%s1 + $0x74] sm:$0xf]
  %v474 = vld [vmem:[%s1 + $0x78] sm:$0xf]
  %v475 = vld [vmem:[%s1 + $0x7c] sm:$0xf]
  %v476 = vld [vmem:[%s3] sm:$0x1]
  %v478 = vperm.slane %v476, 0
  %v512 = vunpack.c.l.b16 %v444
  %v513 = vunpack.c.l.b16 %v445
  %v514 = vunpack.c.l.b16 %v446
  %v515 = vunpack.c.l.b16 %v447
  %v516 = vunpack.c.l.b16 %v448
  %v517 = vunpack.c.l.b16 %v449
  %v518 = vunpack.c.l.b16 %v450
  %v519 = vunpack.c.l.b16 %v451
  %v520 = vunpack.c.l.b16 %v452
  %v521 = vunpack.c.l.b16 %v453
  %v522 = vunpack.c.l.b16 %v454
  %v523 = vunpack.c.l.b16 %v455
  %v524 = vunpack.c.l.b16 %v456
  %v525 = vunpack.c.l.b16 %v457
  %v526 = vunpack.c.l.b16 %v458
  %v527 = vunpack.c.l.b16 %v459
  %v528 = vunpack.c.l.b16 %v460
  %v529 = vunpack.c.l.b16 %v461
  %v530 = vunpack.c.l.b16 %v462
  %v531 = vunpack.c.l.b16 %v463
  %v532 = vunpack.c.l.b16 %v464
  %v533 = vunpack.c.l.b16 %v465
  %v534 = vunpack.c.l.b16 %v466
  %v535 = vunpack.c.l.b16 %v467
  %v536 = vunpack.c.l.b16 %v468
  %v537 = vunpack.c.l.b16 %v469
  %v538 = vunpack.c.l.b16 %v470
  %v539 = vunpack.c.l.b16 %v471
  %v540 = vunpack.c.l.b16 %v472
  %v541 = vunpack.c.l.b16 %v473
  %v542 = vunpack.c.l.b16 %v474
  %v543 = vunpack.c.l.b16 %v475
  %v544 = vpack.c.b16 %v513, %v512
  %v545 = vpack.c.b16 %v515, %v514
  %v546 = vpack.c.b16 %v517, %v516
  %v547 = vpack.c.b16 %v519, %v518
  %v548 = vpack.c.b16 %v521, %v520
  %v549 = vpack.c.b16 %v523, %v522
  %v550 = vpack.c.b16 %v525, %v524
  %v551 = vpack.c.b16 %v527, %v526
  %v552 = vpack.c.b16 %v529, %v528
  %v553 = vpack.c.b16 %v531, %v530
  %v554 = vpack.c.b16 %v533, %v532
  %v555 = vpack.c.b16 %v535, %v534
  %v556 = vpack.c.b16 %v537, %v536
  %v557 = vpack.c.b16 %v539, %v538
  %v558 = vpack.c.b16 %v541, %v540
  %v559 = vpack.c.b16 %v543, %v542
  %576 = vmatpush.bf16.msra.mxu0 %v551
  %577 = vmatpush.bf16.msra.mxu0 %v550
  %578 = vmatpush.bf16.msra.mxu0 %v549
  %579 = vmatpush.bf16.msra.mxu0 %v548
  %580 = vmatpush.bf16.msra.mxu0 %v547
  %581 = vmatpush.bf16.msra.mxu0 %v546
  %582 = vmatpush.bf16.msra.mxu0 %v545
  %583 = vmatpush.bf16.msra.mxu0 %v544
  %584 = vmatmul.bf16.gmra.mxu0 %v363
  %v585 = vpop.f32.mrf.mxu0
  %v586 = vadd.f32 %v478, %v585
  %v587 = vpop.f32.mrf.mxu0
  %588 = vdwg.mxu0
  %589 = vmatpush.bf16.msra.mxu0 %v559
  %590 = vmatpush.bf16.msra.mxu0 %v558
  %591 = vmatpush.bf16.msra.mxu0 %v557
  %592 = vmatpush.bf16.msra.mxu0 %v556
  %593 = vmatpush.bf16.msra.mxu0 %v555
  %594 = vmatpush.bf16.msra.mxu0 %v554
  %595 = vmatpush.bf16.msra.mxu0 %v553
  %596 = vmatpush.bf16.msra.mxu0 %v552
  %597 = vmatmul.bf16.gmra.mxu0 %v443
  %v598 = vpop.f32.mrf.mxu0
  %v599 = vadd.f32 %v586, %v598
  %v600 = vpop.f32.mrf.mxu0
  %601 = vdwg.mxu0
  %v602 = vtanh.pop %v599
  %603 = vst [vmem:[#allocation2] sm:$0xff] %v442
  %604 = vst [vmem:[%s110] sm:$0xff] %v602
  %s605 = scalar_lea.vmem %s4, 8
  %606 = vst [vmem:[%s605] sm:$0xff] %v602
  %v607 = vld [vmem:[#allocation2] sm:$0xff]
  %v608 = vld [vmem:[%s110] sm:$0xff]
  %s609 = scalar_lea.vmem %s0, 12
  %v610 = vld [vmem:[%s609] sm:$0xf]
  %v611 = vunpack.c.l.bf16 %v610
  %v612 = vpack.c.bf16 %v607, %v607
  %v613 = vld [vmem:[%s2] sm:$0xf]
  %v614 = vld [vmem:[%s2 + $0x4] sm:$0xf]
  %v615 = vld [vmem:[%s2 + $0x8] sm:$0xf]
  %v616 = vld [vmem:[%s2 + $0xc] sm:$0xf]
  %v617 = vld [vmem:[%s2 + $0x10] sm:$0xf]
  %v618 = vld [vmem:[%s2 + $0x14] sm:$0xf]
  %v619 = vld [vmem:[%s2 + $0x18] sm:$0xf]
  %v620 = vld [vmem:[%s2 + $0x1c] sm:$0xf]
  %v621 = vld [vmem:[%s2 + $0x20] sm:$0xf]
  %v622 = vld [vmem:[%s2 + $0x24] sm:$0xf]
  %v623 = vld [vmem:[%s2 + $0x28] sm:$0xf]
  %v624 = vld [vmem:[%s2 + $0x2c] sm:$0xf]
  %v625 = vld [vmem:[%s2 + $0x30] sm:$0xf]
  %v626 = vld [vmem:[%s2 + $0x34] sm:$0xf]
  %v627 = vld [vmem:[%s2 + $0x38] sm:$0xf]
  %v628 = vld [vmem:[%s2 + $0x3c] sm:$0xf]
  %v645 = vunpack.c.l.b16 %v613
  %v646 = vunpack.c.l.b16 %v614
  %v647 = vunpack.c.l.b16 %v615
  %v648 = vunpack.c.l.b16 %v616
  %v649 = vunpack.c.l.b16 %v617
  %v650 = vunpack.c.l.b16 %v618
  %v651 = vunpack.c.l.b16 %v619
  %v652 = vunpack.c.l.b16 %v620
  %v653 = vunpack.c.l.b16 %v621
  %v654 = vunpack.c.l.b16 %v622
  %v655 = vunpack.c.l.b16 %v623
  %v656 = vunpack.c.l.b16 %v624
  %v657 = vunpack.c.l.b16 %v625
  %v658 = vunpack.c.l.b16 %v626
  %v659 = vunpack.c.l.b16 %v627
  %v660 = vunpack.c.l.b16 %v628
  %v661 = vpack.c.b16 %v646, %v645
  %v662 = vpack.c.b16 %v648, %v647
  %v663 = vpack.c.b16 %v650, %v649
  %v664 = vpack.c.b16 %v652, %v651
  %v665 = vpack.c.b16 %v654, %v653
  %v666 = vpack.c.b16 %v656, %v655
  %v667 = vpack.c.b16 %v658, %v657
  %v668 = vpack.c.b16 %v660, %v659
  %677 = vmatpush.bf16.msra.mxu0 %v668
  %678 = vmatpush.bf16.msra.mxu0 %v667
  %679 = vmatpush.bf16.msra.mxu0 %v666
  %680 = vmatpush.bf16.msra.mxu0 %v665
  %681 = vmatpush.bf16.msra.mxu0 %v664
  %682 = vmatpush.bf16.msra.mxu0 %v663
  %683 = vmatpush.bf16.msra.mxu0 %v662
  %684 = vmatpush.bf16.msra.mxu0 %v661
  %685 = vmatmul.bf16.gmra.mxu0 %v612
  %v686 = vpop.f32.mrf.mxu0
  %v687 = vadd.f32 0.0, %v686
  %v688 = vpop.f32.mrf.mxu0
  %689 = vdwg.mxu0
  %v690 = vadd.f32 %v611, %v687
  %v691 = vtanh.pop %v690
  %v692 = vpack.c.bf16 %v608, %v608
  %v693 = vld [vmem:[%s1] sm:$0xf]
  %v694 = vld [vmem:[%s1 + $0x4] sm:$0xf]
  %v695 = vld [vmem:[%s1 + $0x8] sm:$0xf]
  %v696 = vld [vmem:[%s1 + $0xc] sm:$0xf]
  %v697 = vld [vmem:[%s1 + $0x10] sm:$0xf]
  %v698 = vld [vmem:[%s1 + $0x14] sm:$0xf]
  %v699 = vld [vmem:[%s1 + $0x18] sm:$0xf]
  %v700 = vld [vmem:[%s1 + $0x1c] sm:$0xf]
  %v701 = vld [vmem:[%s1 + $0x20] sm:$0xf]
  %v702 = vld [vmem:[%s1 + $0x24] sm:$0xf]
  %v703 = vld [vmem:[%s1 + $0x28] sm:$0xf]
  %v704 = vld [vmem:[%s1 + $0x2c] sm:$0xf]
  %v705 = vld [vmem:[%s1 + $0x30] sm:$0xf]
  %v706 = vld [vmem:[%s1 + $0x34] sm:$0xf]
  %v707 = vld [vmem:[%s1 + $0x38] sm:$0xf]
  %v708 = vld [vmem:[%s1 + $0x3c] sm:$0xf]
  %v709 = vld [vmem:[%s1 + $0x40] sm:$0xf]
  %v710 = vld [vmem:[%s1 + $0x44] sm:$0xf]
  %v711 = vld [vmem:[%s1 + $0x48] sm:$0xf]
  %v712 = vld [vmem:[%s1 + $0x4c] sm:$0xf]
  %v713 = vld [vmem:[%s1 + $0x50] sm:$0xf]
  %v714 = vld [vmem:[%s1 + $0x54] sm:$0xf]
  %v715 = vld [vmem:[%s1 + $0x58] sm:$0xf]
  %v716 = vld [vmem:[%s1 + $0x5c] sm:$0xf]
  %v717 = vld [vmem:[%s1 + $0x60] sm:$0xf]
  %v718 = vld [vmem:[%s1 + $0x64] sm:$0xf]
  %v719 = vld [vmem:[%s1 + $0x68] sm:$0xf]
  %v720 = vld [vmem:[%s1 + $0x6c] sm:$0xf]
  %v721 = vld [vmem:[%s1 + $0x70] sm:$0xf]
  %v722 = vld [vmem:[%s1 + $0x74] sm:$0xf]
  %v723 = vld [vmem:[%s1 + $0x78] sm:$0xf]
  %v724 = vld [vmem:[%s1 + $0x7c] sm:$0xf]
  %v725 = vld [vmem:[%s3] sm:$0x1]
  %v727 = vperm.slane %v725, 0
  %v761 = vunpack.c.l.b16 %v693
  %v762 = vunpack.c.l.b16 %v694
  %v763 = vunpack.c.l.b16 %v695
  %v764 = vunpack.c.l.b16 %v696
  %v765 = vunpack.c.l.b16 %v697
  %v766 = vunpack.c.l.b16 %v698
  %v767 = vunpack.c.l.b16 %v699
  %v768 = vunpack.c.l.b16 %v700
  %v769 = vunpack.c.l.b16 %v701
  %v770 = vunpack.c.l.b16 %v702
  %v771 = vunpack.c.l.b16 %v703
  %v772 = vunpack.c.l.b16 %v704
  %v773 = vunpack.c.l.b16 %v705
  %v774 = vunpack.c.l.b16 %v706
  %v775 = vunpack.c.l.b16 %v707
  %v776 = vunpack.c.l.b16 %v708
  %v777 = vunpack.c.l.b16 %v709
  %v778 = vunpack.c.l.b16 %v710
  %v779 = vunpack.c.l.b16 %v711
  %v780 = vunpack.c.l.b16 %v712
  %v781 = vunpack.c.l.b16 %v713
  %v782 = vunpack.c.l.b16 %v714
  %v783 = vunpack.c.l.b16 %v715
  %v784 = vunpack.c.l.b16 %v716
  %v785 = vunpack.c.l.b16 %v717
  %v786 = vunpack.c.l.b16 %v718
  %v787 = vunpack.c.l.b16 %v719
  %v788 = vunpack.c.l.b16 %v720
  %v789 = vunpack.c.l.b16 %v721
  %v790 = vunpack.c.l.b16 %v722
  %v791 = vunpack.c.l.b16 %v723
  %v792 = vunpack.c.l.b16 %v724
  %v793 = vpack.c.b16 %v762, %v761
  %v794 = vpack.c.b16 %v764, %v763
  %v795 = vpack.c.b16 %v766, %v765
  %v796 = vpack.c.b16 %v768, %v767
  %v797 = vpack.c.b16 %v770, %v769
  %v798 = vpack.c.b16 %v772, %v771
  %v799 = vpack.c.b16 %v774, %v773
  %v800 = vpack.c.b16 %v776, %v775
  %v801 = vpack.c.b16 %v778, %v777
  %v802 = vpack.c.b16 %v780, %v779
  %v803 = vpack.c.b16 %v782, %v781
  %v804 = vpack.c.b16 %v784, %v783
  %v805 = vpack.c.b16 %v786, %v785
  %v806 = vpack.c.b16 %v788, %v787
  %v807 = vpack.c.b16 %v790, %v789
  %v808 = vpack.c.b16 %v792, %v791
  %825 = vmatpush.bf16.msra.mxu0 %v800
  %826 = vmatpush.bf16.msra.mxu0 %v799
  %827 = vmatpush.bf16.msra.mxu0 %v798
  %828 = vmatpush.bf16.msra.mxu0 %v797
  %829 = vmatpush.bf16.msra.mxu0 %v796
  %830 = vmatpush.bf16.msra.mxu0 %v795
  %831 = vmatpush.bf16.msra.mxu0 %v794
  %832 = vmatpush.bf16.msra.mxu0 %v793
  %833 = vmatmul.bf16.gmra.mxu0 %v612
  %v834 = vpop.f32.mrf.mxu0
  %v835 = vadd.f32 %v727, %v834
  %v836 = vpop.f32.mrf.mxu0
  %837 = vdwg.mxu0
  %838 = vmatpush.bf16.msra.mxu0 %v808
  %839 = vmatpush.bf16.msra.mxu0 %v807
  %840 = vmatpush.bf16.msra.mxu0 %v806
  %841 = vmatpush.bf16.msra.mxu0 %v805
  %842 = vmatpush.bf16.msra.mxu0 %v804
  %843 = vmatpush.bf16.msra.mxu0 %v803
  %844 = vmatpush.bf16.msra.mxu0 %v802
  %845 = vmatpush.bf16.msra.mxu0 %v801
  %846 = vmatmul.bf16.gmra.mxu0 %v692
  %v847 = vpop.f32.mrf.mxu0
  %v848 = vadd.f32 %v835, %v847
  %v849 = vpop.f32.mrf.mxu0
  %850 = vdwg.mxu0
  %v851 = vtanh.pop %v848
  %852 = vst [vmem:[#allocation2] sm:$0xff] %v691
  %853 = vst [vmem:[%s110] sm:$0xff] %v851
  %s854 = scalar_lea.vmem %s4, 16
  %855 = vst [vmem:[%s854] sm:$0xff] %v851
  %v856 = vld [vmem:[#allocation2] sm:$0xff]
  %v857 = vld [vmem:[%s110] sm:$0xff]
  %s858 = scalar_lea.vmem %s0, 16
  %v859 = vld [vmem:[%s858] sm:$0xf]
  %v860 = vunpack.c.l.bf16 %v859
  %v861 = vpack.c.bf16 %v856, %v856
  %v862 = vld [vmem:[%s2] sm:$0xf]
  %v863 = vld [vmem:[%s2 + $0x4] sm:$0xf]
  %v864 = vld [vmem:[%s2 + $0x8] sm:$0xf]
  %v865 = vld [vmem:[%s2 + $0xc] sm:$0xf]
  %v866 = vld [vmem:[%s2 + $0x10] sm:$0xf]
  %v867 = vld [vmem:[%s2 + $0x14] sm:$0xf]
  %v868 = vld [vmem:[%s2 + $0x18] sm:$0xf]
  %v869 = vld [vmem:[%s2 + $0x1c] sm:$0xf]
  %v870 = vld [vmem:[%s2 + $0x20] sm:$0xf]
  %v871 = vld [vmem:[%s2 + $0x24] sm:$0xf]
  %v872 = vld [vmem:[%s2 + $0x28] sm:$0xf]
  %v873 = vld [vmem:[%s2 + $0x2c] sm:$0xf]
  %v874 = vld [vmem:[%s2 + $0x30] sm:$0xf]
  %v875 = vld [vmem:[%s2 + $0x34] sm:$0xf]
  %v876 = vld [vmem:[%s2 + $0x38] sm:$0xf]
  %v877 = vld [vmem:[%s2 + $0x3c] sm:$0xf]
  %v894 = vunpack.c.l.b16 %v862
  %v895 = vunpack.c.l.b16 %v863
  %v896 = vunpack.c.l.b16 %v864
  %v897 = vunpack.c.l.b16 %v865
  %v898 = vunpack.c.l.b16 %v866
  %v899 = vunpack.c.l.b16 %v867
  %v900 = vunpack.c.l.b16 %v868
  %v901 = vunpack.c.l.b16 %v869
  %v902 = vunpack.c.l.b16 %v870
  %v903 = vunpack.c.l.b16 %v871
  %v904 = vunpack.c.l.b16 %v872
  %v905 = vunpack.c.l.b16 %v873
  %v906 = vunpack.c.l.b16 %v874
  %v907 = vunpack.c.l.b16 %v875
  %v908 = vunpack.c.l.b16 %v876
  %v909 = vunpack.c.l.b16 %v877
  %v910 = vpack.c.b16 %v895, %v894
  %v911 = vpack.c.b16 %v897, %v896
  %v912 = vpack.c.b16 %v899, %v898
  %v913 = vpack.c.b16 %v901, %v900
  %v914 = vpack.c.b16 %v903, %v902
  %v915 = vpack.c.b16 %v905, %v904
  %v916 = vpack.c.b16 %v907, %v906
  %v917 = vpack.c.b16 %v909, %v908
  %926 = vmatpush.bf16.msra.mxu0 %v917
  %927 = vmatpush.bf16.msra.mxu0 %v916
  %928 = vmatpush.bf16.msra.mxu0 %v915
  %929 = vmatpush.bf16.msra.mxu0 %v914
  %930 = vmatpush.bf16.msra.mxu0 %v913
  %931 = vmatpush.bf16.msra.mxu0 %v912
  %932 = vmatpush.bf16.msra.mxu0 %v911
  %933 = vmatpush.bf16.msra.mxu0 %v910
  %934 = vmatmul.bf16.gmra.mxu0 %v861
  %v935 = vpop.f32.mrf.mxu0
  %v936 = vadd.f32 0.0, %v935
  %v937 = vpop.f32.mrf.mxu0
  %938 = vdwg.mxu0
  %v939 = vadd.f32 %v860, %v936
  %v940 = vtanh.pop %v939
  %v941 = vpack.c.bf16 %v857, %v857
  %v942 = vld [vmem:[%s1] sm:$0xf]
  %v943 = vld [vmem:[%s1 + $0x4] sm:$0xf]
  %v944 = vld [vmem:[%s1 + $0x8] sm:$0xf]
  %v945 = vld [vmem:[%s1 + $0xc] sm:$0xf]
  %v946 = vld [vmem:[%s1 + $0x10] sm:$0xf]
  %v947 = vld [vmem:[%s1 + $0x14] sm:$0xf]
  %v948 = vld [vmem:[%s1 + $0x18] sm:$0xf]
  %v949 = vld [vmem:[%s1 + $0x1c] sm:$0xf]
  %v950 = vld [vmem:[%s1 + $0x20] sm:$0xf]
  %v951 = vld [vmem:[%s1 + $0x24] sm:$0xf]
  %v952 = vld [vmem:[%s1 + $0x28] sm:$0xf]
  %v953 = vld [vmem:[%s1 + $0x2c] sm:$0xf]
  %v954 = vld [vmem:[%s1 + $0x30] sm:$0xf]
  %v955 = vld [vmem:[%s1 + $0x34] sm:$0xf]
  %v956 = vld [vmem:[%s1 + $0x38] sm:$0xf]
  %v957 = vld [vmem:[%s1 + $0x3c] sm:$0xf]
  %v958 = vld [vmem:[%s1 + $0x40] sm:$0xf]
  %v959 = vld [vmem:[%s1 + $0x44] sm:$0xf]
  %v960 = vld [vmem:[%s1 + $0x48] sm:$0xf]
  %v961 = vld [vmem:[%s1 + $0x4c] sm:$0xf]
  %v962 = vld [vmem:[%s1 + $0x50] sm:$0xf]
  %v963 = vld [vmem:[%s1 + $0x54] sm:$0xf]
  %v964 = vld [vmem:[%s1 + $0x58] sm:$0xf]
  %v965 = vld [vmem:[%s1 + $0x5c] sm:$0xf]
  %v966 = vld [vmem:[%s1 + $0x60] sm:$0xf]
  %v967 = vld [vmem:[%s1 + $0x64] sm:$0xf]
  %v968 = vld [vmem:[%s1 + $0x68] sm:$0xf]
  %v969 = vld [vmem:[%s1 + $0x6c] sm:$0xf]
  %v970 = vld [vmem:[%s1 + $0x70] sm:$0xf]
  %v971 = vld [vmem:[%s1 + $0x74] sm:$0xf]
  %v972 = vld [vmem:[%s1 + $0x78] sm:$0xf]
  %v973 = vld [vmem:[%s1 + $0x7c] sm:$0xf]
  %v974 = vld [vmem:[%s3] sm:$0x1]
  %v976 = vperm.slane %v974, 0
  %v1010 = vunpack.c.l.b16 %v942
  %v1011 = vunpack.c.l.b16 %v943
  %v1012 = vunpack.c.l.b16 %v944
  %v1013 = vunpack.c.l.b16 %v945
  %v1014 = vunpack.c.l.b16 %v946
  %v1015 = vunpack.c.l.b16 %v947
  %v1016 = vunpack.c.l.b16 %v948
  %v1017 = vunpack.c.l.b16 %v949
  %v1018 = vunpack.c.l.b16 %v950
  %v1019 = vunpack.c.l.b16 %v951
  %v1020 = vunpack.c.l.b16 %v952
  %v1021 = vunpack.c.l.b16 %v953
  %v1022 = vunpack.c.l.b16 %v954
  %v1023 = vunpack.c.l.b16 %v955
  %v1024 = vunpack.c.l.b16 %v956
  %v1025 = vunpack.c.l.b16 %v957
  %v1026 = vunpack.c.l.b16 %v958
  %v1027 = vunpack.c.l.b16 %v959
  %v1028 = vunpack.c.l.b16 %v960
  %v1029 = vunpack.c.l.b16 %v961
  %v1030 = vunpack.c.l.b16 %v962
  %v1031 = vunpack.c.l.b16 %v963
  %v1032 = vunpack.c.l.b16 %v964
  %v1033 = vunpack.c.l.b16 %v965
  %v1034 = vunpack.c.l.b16 %v966
  %v1035 = vunpack.c.l.b16 %v967
  %v1036 = vunpack.c.l.b16 %v968
  %v1037 = vunpack.c.l.b16 %v969
  %v1038 = vunpack.c.l.b16 %v970
  %v1039 = vunpack.c.l.b16 %v971
  %v1040 = vunpack.c.l.b16 %v972
  %v1041 = vunpack.c.l.b16 %v973
  %v1042 = vpack.c.b16 %v1011, %v1010
  %v1043 = vpack.c.b16 %v1013, %v1012
  %v1044 = vpack.c.b16 %v1015, %v1014
  %v1045 = vpack.c.b16 %v1017, %v1016
  %v1046 = vpack.c.b16 %v1019, %v1018
  %v1047 = vpack.c.b16 %v1021, %v1020
  %v1048 = vpack.c.b16 %v1023, %v1022
  %v1049 = vpack.c.b16 %v1025, %v1024
  %v1050 = vpack.c.b16 %v1027, %v1026
  %v1051 = vpack.c.b16 %v1029, %v1028
  %v1052 = vpack.c.b16 %v1031, %v1030
  %v1053 = vpack.c.b16 %v1033, %v1032
  %v1054 = vpack.c.b16 %v1035, %v1034
  %v1055 = vpack.c.b16 %v1037, %v1036
  %v1056 = vpack.c.b16 %v1039, %v1038
  %v1057 = vpack.c.b16 %v1041, %v1040
  %1074 = vmatpush.bf16.msra.mxu0 %v1049
  %1075 = vmatpush.bf16.msra.mxu0 %v1048
  %1076 = vmatpush.bf16.msra.mxu0 %v1047
  %1077 = vmatpush.bf16.msra.mxu0 %v1046
  %1078 = vmatpush.bf16.msra.mxu0 %v1045
  %1079 = vmatpush.bf16.msra.mxu0 %v1044
  %1080 = vmatpush.bf16.msra.mxu0 %v1043
  %1081 = vmatpush.bf16.msra.mxu0 %v1042
  %1082 = vmatmul.bf16.gmra.mxu0 %v861
  %v1083 = vpop.f32.mrf.mxu0
  %v1084 = vadd.f32 %v976, %v1083
  %v1085 = vpop.f32.mrf.mxu0
  %1086 = vdwg.mxu0
  %1087 = vmatpush.bf16.msra.mxu0 %v1057
  %1088 = vmatpush.bf16.msra.mxu0 %v1056
  %1089 = vmatpush.bf16.msra.mxu0 %v1055
  %1090 = vmatpush.bf16.msra.mxu0 %v1054
  %1091 = vmatpush.bf16.msra.mxu0 %v1053
  %1092 = vmatpush.bf16.msra.mxu0 %v1052
  %1093 = vmatpush.bf16.msra.mxu0 %v1051
  %1094 = vmatpush.bf16.msra.mxu0 %v1050
  %1095 = vmatmul.bf16.gmra.mxu0 %v941
  %v1096 = vpop.f32.mrf.mxu0
  %v1097 = vadd.f32 %v1084, %v1096
  %v1098 = vpop.f32.mrf.mxu0
  %1099 = vdwg.mxu0
  %v1100 = vtanh.pop %v1097
  %1101 = vst [vmem:[#allocation2] sm:$0xff] %v940
  %1102 = vst [vmem:[%s110] sm:$0xff] %v1100
  %s1103 = scalar_lea.vmem %s4, 24
  %1104 = vst [vmem:[%s1103] sm:$0xff] %v1100
  %v1105 = vld [vmem:[#allocation2] sm:$0xff]
  %v1106 = vld [vmem:[%s110] sm:$0xff]
  %s1107 = scalar_lea.vmem %s0, 20
  %v1108 = vld [vmem:[%s1107] sm:$0xf]
  %v1109 = vunpack.c.l.bf16 %v1108
  %v1110 = vpack.c.bf16 %v1105, %v1105
  %v1111 = vld [vmem:[%s2] sm:$0xf]
  %v1112 = vld [vmem:[%s2 + $0x4] sm:$0xf]
  %v1113 = vld [vmem:[%s2 + $0x8] sm:$0xf]
  %v1114 = vld [vmem:[%s2 + $0xc] sm:$0xf]
  %v1115 = vld [vmem:[%s2 + $0x10] sm:$0xf]
  %v1116 = vld [vmem:[%s2 + $0x14] sm:$0xf]
  %v1117 = vld [vmem:[%s2 + $0x18] sm:$0xf]
  %v1118 = vld [vmem:[%s2 + $0x1c] sm:$0xf]
  %v1119 = vld [vmem:[%s2 + $0x20] sm:$0xf]
  %v1120 = vld [vmem:[%s2 + $0x24] sm:$0xf]
  %v1121 = vld [vmem:[%s2 + $0x28] sm:$0xf]
  %v1122 = vld [vmem:[%s2 + $0x2c] sm:$0xf]
  %v1123 = vld [vmem:[%s2 + $0x30] sm:$0xf]
  %v1124 = vld [vmem:[%s2 + $0x34] sm:$0xf]
  %v1125 = vld [vmem:[%s2 + $0x38] sm:$0xf]
  %v1126 = vld [vmem:[%s2 + $0x3c] sm:$0xf]
  %v1143 = vunpack.c.l.b16 %v1111
  %v1144 = vunpack.c.l.b16 %v1112
  %v1145 = vunpack.c.l.b16 %v1113
  %v1146 = vunpack.c.l.b16 %v1114
  %v1147 = vunpack.c.l.b16 %v1115
  %v1148 = vunpack.c.l.b16 %v1116
  %v1149 = vunpack.c.l.b16 %v1117
  %v1150 = vunpack.c.l.b16 %v1118
  %v1151 = vunpack.c.l.b16 %v1119
  %v1152 = vunpack.c.l.b16 %v1120
  %v1153 = vunpack.c.l.b16 %v1121
  %v1154 = vunpack.c.l.b16 %v1122
  %v1155 = vunpack.c.l.b16 %v1123
  %v1156 = vunpack.c.l.b16 %v1124
  %v1157 = vunpack.c.l.b16 %v1125
  %v1158 = vunpack.c.l.b16 %v1126
  %v1159 = vpack.c.b16 %v1144, %v1143
  %v1160 = vpack.c.b16 %v1146, %v1145
  %v1161 = vpack.c.b16 %v1148, %v1147
  %v1162 = vpack.c.b16 %v1150, %v1149
  %v1163 = vpack.c.b16 %v1152, %v1151
  %v1164 = vpack.c.b16 %v1154, %v1153
  %v1165 = vpack.c.b16 %v1156, %v1155
  %v1166 = vpack.c.b16 %v1158, %v1157
  %1175 = vmatpush.bf16.msra.mxu0 %v1166
  %1176 = vmatpush.bf16.msra.mxu0 %v1165
  %1177 = vmatpush.bf16.msra.mxu0 %v1164
  %1178 = vmatpush.bf16.msra.mxu0 %v1163
  %1179 = vmatpush.bf16.msra.mxu0 %v1162
  %1180 = vmatpush.bf16.msra.mxu0 %v1161
  %1181 = vmatpush.bf16.msra.mxu0 %v1160
  %1182 = vmatpush.bf16.msra.mxu0 %v1159
  %1183 = vmatmul.bf16.gmra.mxu0 %v1110
  %v1184 = vpop.f32.mrf.mxu0
  %v1185 = vadd.f32 0.0, %v1184
  %v1186 = vpop.f32.mrf.mxu0
  %1187 = vdwg.mxu0
  %v1188 = vadd.f32 %v1109, %v1185
  %v1189 = vtanh.pop %v1188
  %v1190 = vpack.c.bf16 %v1106, %v1106
  %v1191 = vld [vmem:[%s1] sm:$0xf]
  %v1192 = vld [vmem:[%s1 + $0x4] sm:$0xf]
  %v1193 = vld [vmem:[%s1 + $0x8] sm:$0xf]
  %v1194 = vld [vmem:[%s1 + $0xc] sm:$0xf]
  %v1195 = vld [vmem:[%s1 + $0x10] sm:$0xf]
  %v1196 = vld [vmem:[%s1 + $0x14] sm:$0xf]
  %v1197 = vld [vmem:[%s1 + $0x18] sm:$0xf]
  %v1198 = vld [vmem:[%s1 + $0x1c] sm:$0xf]
  %v1199 = vld [vmem:[%s1 + $0x20] sm:$0xf]
  %v1200 = vld [vmem:[%s1 + $0x24] sm:$0xf]
  %v1201 = vld [vmem:[%s1 + $0x28] sm:$0xf]
  %v1202 = vld [vmem:[%s1 + $0x2c] sm:$0xf]
  %v1203 = vld [vmem:[%s1 + $0x30] sm:$0xf]
  %v1204 = vld [vmem:[%s1 + $0x34] sm:$0xf]
  %v1205 = vld [vmem:[%s1 + $0x38] sm:$0xf]
  %v1206 = vld [vmem:[%s1 + $0x3c] sm:$0xf]
  %v1207 = vld [vmem:[%s1 + $0x40] sm:$0xf]
  %v1208 = vld [vmem:[%s1 + $0x44] sm:$0xf]
  %v1209 = vld [vmem:[%s1 + $0x48] sm:$0xf]
  %v1210 = vld [vmem:[%s1 + $0x4c] sm:$0xf]
  %v1211 = vld [vmem:[%s1 + $0x50] sm:$0xf]
  %v1212 = vld [vmem:[%s1 + $0x54] sm:$0xf]
  %v1213 = vld [vmem:[%s1 + $0x58] sm:$0xf]
  %v1214 = vld [vmem:[%s1 + $0x5c] sm:$0xf]
  %v1215 = vld [vmem:[%s1 + $0x60] sm:$0xf]
  %v1216 = vld [vmem:[%s1 + $0x64] sm:$0xf]
  %v1217 = vld [vmem:[%s1 + $0x68] sm:$0xf]
  %v1218 = vld [vmem:[%s1 + $0x6c] sm:$0xf]
  %v1219 = vld [vmem:[%s1 + $0x70] sm:$0xf]
  %v1220 = vld [vmem:[%s1 + $0x74] sm:$0xf]
  %v1221 = vld [vmem:[%s1 + $0x78] sm:$0xf]
  %v1222 = vld [vmem:[%s1 + $0x7c] sm:$0xf]
  %v1223 = vld [vmem:[%s3] sm:$0x1]
  %v1225 = vperm.slane %v1223, 0
  %v1259 = vunpack.c.l.b16 %v1191
  %v1260 = vunpack.c.l.b16 %v1192
  %v1261 = vunpack.c.l.b16 %v1193
  %v1262 = vunpack.c.l.b16 %v1194
  %v1263 = vunpack.c.l.b16 %v1195
  %v1264 = vunpack.c.l.b16 %v1196
  %v1265 = vunpack.c.l.b16 %v1197
  %v1266 = vunpack.c.l.b16 %v1198
  %v1267 = vunpack.c.l.b16 %v1199
  %v1268 = vunpack.c.l.b16 %v1200
  %v1269 = vunpack.c.l.b16 %v1201
  %v1270 = vunpack.c.l.b16 %v1202
  %v1271 = vunpack.c.l.b16 %v1203
  %v1272 = vunpack.c.l.b16 %v1204
  %v1273 = vunpack.c.l.b16 %v1205
  %v1274 = vunpack.c.l.b16 %v1206
  %v1275 = vunpack.c.l.b16 %v1207
  %v1276 = vunpack.c.l.b16 %v1208
  %v1277 = vunpack.c.l.b16 %v1209
  %v1278 = vunpack.c.l.b16 %v1210
  %v1279 = vunpack.c.l.b16 %v1211
  %v1280 = vunpack.c.l.b16 %v1212
  %v1281 = vunpack.c.l.b16 %v1213
  %v1282 = vunpack.c.l.b16 %v1214
  %v1283 = vunpack.c.l.b16 %v1215
  %v1284 = vunpack.c.l.b16 %v1216
  %v1285 = vunpack.c.l.b16 %v1217
  %v1286 = vunpack.c.l.b16 %v1218
  %v1287 = vunpack.c.l.b16 %v1219
  %v1288 = vunpack.c.l.b16 %v1220
  %v1289 = vunpack.c.l.b16 %v1221
  %v1290 = vunpack.c.l.b16 %v1222
  %v1291 = vpack.c.b16 %v1260, %v1259
  %v1292 = vpack.c.b16 %v1262, %v1261
  %v1293 = vpack.c.b16 %v1264, %v1263
  %v1294 = vpack.c.b16 %v1266, %v1265
  %v1295 = vpack.c.b16 %v1268, %v1267
  %v1296 = vpack.c.b16 %v1270, %v1269
  %v1297 = vpack.c.b16 %v1272, %v1271
  %v1298 = vpack.c.b16 %v1274, %v1273
  %v1299 = vpack.c.b16 %v1276, %v1275
  %v1300 = vpack.c.b16 %v1278, %v1277
  %v1301 = vpack.c.b16 %v1280, %v1279
  %v1302 = vpack.c.b16 %v1282, %v1281
  %v1303 = vpack.c.b16 %v1284, %v1283
  %v1304 = vpack.c.b16 %v1286, %v1285
  %v1305 = vpack.c.b16 %v1288, %v1287
  %v1306 = vpack.c.b16 %v1290, %v1289
  %1323 = vmatpush.bf16.msra.mxu0 %v1298
  %1324 = vmatpush.bf16.msra.mxu0 %v1297
  %1325 = vmatpush.bf16.msra.mxu0 %v1296
  %1326 = vmatpush.bf16.msra.mxu0 %v1295
  %1327 = vmatpush.bf16.msra.mxu0 %v1294
  %1328 = vmatpush.bf16.msra.mxu0 %v1293
  %1329 = vmatpush.bf16.msra.mxu0 %v1292
  %1330 = vmatpush.bf16.msra.mxu0 %v1291
  %1331 = vmatmul.bf16.gmra.mxu0 %v1110
  %v1332 = vpop.f32.mrf.mxu0
  %v1333 = vadd.f32 %v1225, %v1332
  %v1334 = vpop.f32.mrf.mxu0
  %1335 = vdwg.mxu0
  %1336 = vmatpush.bf16.msra.mxu0 %v1306
  %1337 = vmatpush.bf16.msra.mxu0 %v1305
  %1338 = vmatpush.bf16.msra.mxu0 %v1304
  %1339 = vmatpush.bf16.msra.mxu0 %v1303
  %1340 = vmatpush.bf16.msra.mxu0 %v1302
  %1341 = vmatpush.bf16.msra.mxu0 %v1301
  %1342 = vmatpush.bf16.msra.mxu0 %v1300
  %1343 = vmatpush.bf16.msra.mxu0 %v1299
  %1344 = vmatmul.bf16.gmra.mxu0 %v1190
  %v1345 = vpop.f32.mrf.mxu0
  %v1346 = vadd.f32 %v1333, %v1345
  %v1347 = vpop.f32.mrf.mxu0
  %1348 = vdwg.mxu0
  %v1349 = vtanh.pop %v1346
  %1350 = vst [vmem:[#allocation2] sm:$0xff] %v1189
  %1351 = vst [vmem:[%s110] sm:$0xff] %v1349
  %s1352 = scalar_lea.vmem %s4, 32
  %1353 = vst [vmem:[%s1352] sm:$0xff] %v1349
  %v1354 = vld [vmem:[#allocation2] sm:$0xff]
  %v1355 = vld [vmem:[%s110] sm:$0xff]
  %s1356 = scalar_lea.vmem %s0, 24
  %v1357 = vld [vmem:[%s1356] sm:$0xf]
  %v1358 = vunpack.c.l.bf16 %v1357
  %v1359 = vpack.c.bf16 %v1354, %v1354
  %v1360 = vld [vmem:[%s2] sm:$0xf]
  %v1361 = vld [vmem:[%s2 + $0x4] sm:$0xf]
  %v1362 = vld [vmem:[%s2 + $0x8] sm:$0xf]
  %v1363 = vld [vmem:[%s2 + $0xc] sm:$0xf]
  %v1364 = vld [vmem:[%s2 + $0x10] sm:$0xf]
  %v1365 = vld [vmem:[%s2 + $0x14] sm:$0xf]
  %v1366 = vld [vmem:[%s2 + $0x18] sm:$0xf]
  %v1367 = vld [vmem:[%s2 + $0x1c] sm:$0xf]
  %v1368 = vld [vmem:[%s2 + $0x20] sm:$0xf]
  %v1369 = vld [vmem:[%s2 + $0x24] sm:$0xf]
  %v1370 = vld [vmem:[%s2 + $0x28] sm:$0xf]
  %v1371 = vld [vmem:[%s2 + $0x2c] sm:$0xf]
  %v1372 = vld [vmem:[%s2 + $0x30] sm:$0xf]
  %v1373 = vld [vmem:[%s2 + $0x34] sm:$0xf]
  %v1374 = vld [vmem:[%s2 + $0x38] sm:$0xf]
  %v1375 = vld [vmem:[%s2 + $0x3c] sm:$0xf]
  %v1392 = vunpack.c.l.b16 %v1360
  %v1393 = vunpack.c.l.b16 %v1361
  %v1394 = vunpack.c.l.b16 %v1362
  %v1395 = vunpack.c.l.b16 %v1363
  %v1396 = vunpack.c.l.b16 %v1364
  %v1397 = vunpack.c.l.b16 %v1365
  %v1398 = vunpack.c.l.b16 %v1366
  %v1399 = vunpack.c.l.b16 %v1367
  %v1400 = vunpack.c.l.b16 %v1368
  %v1401 = vunpack.c.l.b16 %v1369
  %v1402 = vunpack.c.l.b16 %v1370
  %v1403 = vunpack.c.l.b16 %v1371
  %v1404 = vunpack.c.l.b16 %v1372
  %v1405 = vunpack.c.l.b16 %v1373
  %v1406 = vunpack.c.l.b16 %v1374
  %v1407 = vunpack.c.l.b16 %v1375
  %v1408 = vpack.c.b16 %v1393, %v1392
  %v1409 = vpack.c.b16 %v1395, %v1394
  %v1410 = vpack.c.b16 %v1397, %v1396
  %v1411 = vpack.c.b16 %v1399, %v1398
  %v1412 = vpack.c.b16 %v1401, %v1400
  %v1413 = vpack.c.b16 %v1403, %v1402
  %v1414 = vpack.c.b16 %v1405, %v1404
  %v1415 = vpack.c.b16 %v1407, %v1406
  %1424 = vmatpush.bf16.msra.mxu0 %v1415
  %1425 = vmatpush.bf16.msra.mxu0 %v1414
  %1426 = vmatpush.bf16.msra.mxu0 %v1413
  %1427 = vmatpush.bf16.msra.mxu0 %v1412
  %1428 = vmatpush.bf16.msra.mxu0 %v1411
  %1429 = vmatpush.bf16.msra.mxu0 %v1410
  %1430 = vmatpush.bf16.msra.mxu0 %v1409
  %1431 = vmatpush.bf16.msra.mxu0 %v1408
  %1432 = vmatmul.bf16.gmra.mxu0 %v1359
  %v1433 = vpop.f32.mrf.mxu0
  %v1434 = vadd.f32 0.0, %v1433
  %v1435 = vpop.f32.mrf.mxu0
  %1436 = vdwg.mxu0
  %v1437 = vadd.f32 %v1358, %v1434
  %v1438 = vtanh.pop %v1437
  %v1439 = vpack.c.bf16 %v1355, %v1355
  %v1440 = vld [vmem:[%s1] sm:$0xf]
  %v1441 = vld [vmem:[%s1 + $0x4] sm:$0xf]
  %v1442 = vld [vmem:[%s1 + $0x8] sm:$0xf]
  %v1443 = vld [vmem:[%s1 + $0xc] sm:$0xf]
  %v1444 = vld [vmem:[%s1 + $0x10] sm:$0xf]
  %v1445 = vld [vmem:[%s1 + $0x14] sm:$0xf]
  %v1446 = vld [vmem:[%s1 + $0x18] sm:$0xf]
  %v1447 = vld [vmem:[%s1 + $0x1c] sm:$0xf]
  %v1448 = vld [vmem:[%s1 + $0x20] sm:$0xf]
  %v1449 = vld [vmem:[%s1 + $0x24] sm:$0xf]
  %v1450 = vld [vmem:[%s1 + $0x28] sm:$0xf]
  %v1451 = vld [vmem:[%s1 + $0x2c] sm:$0xf]
  %v1452 = vld [vmem:[%s1 + $0x30] sm:$0xf]
  %v1453 = vld [vmem:[%s1 + $0x34] sm:$0xf]
  %v1454 = vld [vmem:[%s1 + $0x38] sm:$0xf]
  %v1455 = vld [vmem:[%s1 + $0x3c] sm:$0xf]
  %v1456 = vld [vmem:[%s1 + $0x40] sm:$0xf]
  %v1457 = vld [vmem:[%s1 + $0x44] sm:$0xf]
  %v1458 = vld [vmem:[%s1 + $0x48] sm:$0xf]
  %v1459 = vld [vmem:[%s1 + $0x4c] sm:$0xf]
  %v1460 = vld [vmem:[%s1 + $0x50] sm:$0xf]
  %v1461 = vld [vmem:[%s1 + $0x54] sm:$0xf]
  %v1462 = vld [vmem:[%s1 + $0x58] sm:$0xf]
  %v1463 = vld [vmem:[%s1 + $0x5c] sm:$0xf]
  %v1464 = vld [vmem:[%s1 + $0x60] sm:$0xf]
  %v1465 = vld [vmem:[%s1 + $0x64] sm:$0xf]
  %v1466 = vld [vmem:[%s1 + $0x68] sm:$0xf]
  %v1467 = vld [vmem:[%s1 + $0x6c] sm:$0xf]
  %v1468 = vld [vmem:[%s1 + $0x70] sm:$0xf]
  %v1469 = vld [vmem:[%s1 + $0x74] sm:$0xf]
  %v1470 = vld [vmem:[%s1 + $0x78] sm:$0xf]
  %v1471 = vld [vmem:[%s1 + $0x7c] sm:$0xf]
  %v1472 = vld [vmem:[%s3] sm:$0x1]
  %v1474 = vperm.slane %v1472, 0
  %v1508 = vunpack.c.l.b16 %v1440
  %v1509 = vunpack.c.l.b16 %v1441
  %v1510 = vunpack.c.l.b16 %v1442
  %v1511 = vunpack.c.l.b16 %v1443
  %v1512 = vunpack.c.l.b16 %v1444
  %v1513 = vunpack.c.l.b16 %v1445
  %v1514 = vunpack.c.l.b16 %v1446
  %v1515 = vunpack.c.l.b16 %v1447
  %v1516 = vunpack.c.l.b16 %v1448
  %v1517 = vunpack.c.l.b16 %v1449
  %v1518 = vunpack.c.l.b16 %v1450
  %v1519 = vunpack.c.l.b16 %v1451
  %v1520 = vunpack.c.l.b16 %v1452
  %v1521 = vunpack.c.l.b16 %v1453
  %v1522 = vunpack.c.l.b16 %v1454
  %v1523 = vunpack.c.l.b16 %v1455
  %v1524 = vunpack.c.l.b16 %v1456
  %v1525 = vunpack.c.l.b16 %v1457
  %v1526 = vunpack.c.l.b16 %v1458
  %v1527 = vunpack.c.l.b16 %v1459
  %v1528 = vunpack.c.l.b16 %v1460
  %v1529 = vunpack.c.l.b16 %v1461
  %v1530 = vunpack.c.l.b16 %v1462
  %v1531 = vunpack.c.l.b16 %v1463
  %v1532 = vunpack.c.l.b16 %v1464
  %v1533 = vunpack.c.l.b16 %v1465
  %v1534 = vunpack.c.l.b16 %v1466
  %v1535 = vunpack.c.l.b16 %v1467
  %v1536 = vunpack.c.l.b16 %v1468
  %v1537 = vunpack.c.l.b16 %v1469
  %v1538 = vunpack.c.l.b16 %v1470
  %v1539 = vunpack.c.l.b16 %v1471
  %v1540 = vpack.c.b16 %v1509, %v1508
  %v1541 = vpack.c.b16 %v1511, %v1510
  %v1542 = vpack.c.b16 %v1513, %v1512
  %v1543 = vpack.c.b16 %v1515, %v1514
  %v1544 = vpack.c.b16 %v1517, %v1516
  %v1545 = vpack.c.b16 %v1519, %v1518
  %v1546 = vpack.c.b16 %v1521, %v1520
  %v1547 = vpack.c.b16 %v1523, %v1522
  %v1548 = vpack.c.b16 %v1525, %v1524
  %v1549 = vpack.c.b16 %v1527, %v1526
  %v1550 = vpack.c.b16 %v1529, %v1528
  %v1551 = vpack.c.b16 %v1531, %v1530
  %v1552 = vpack.c.b16 %v1533, %v1532
  %v1553 = vpack.c.b16 %v1535, %v1534
  %v1554 = vpack.c.b16 %v1537, %v1536
  %v1555 = vpack.c.b16 %v1539, %v1538
  %1572 = vmatpush.bf16.msra.mxu0 %v1547
  %1573 = vmatpush.bf16.msra.mxu0 %v1546
  %1574 = vmatpush.bf16.msra.mxu0 %v1545
  %1575 = vmatpush.bf16.msra.mxu0 %v1544
  %1576 = vmatpush.bf16.msra.mxu0 %v1543
  %1577 = vmatpush.bf16.msra.mxu0 %v1542
  %1578 = vmatpush.bf16.msra.mxu0 %v1541
  %1579 = vmatpush.bf16.msra.mxu0 %v1540
  %1580 = vmatmul.bf16.gmra.mxu0 %v1359
  %v1581 = vpop.f32.mrf.mxu0
  %v1582 = vadd.f32 %v1474, %v1581
  %v1583 = vpop.f32.mrf.mxu0
  %1584 = vdwg.mxu0
  %1585 = vmatpush.bf16.msra.mxu0 %v1555
  %1586 = vmatpush.bf16.msra.mxu0 %v1554
  %1587 = vmatpush.bf16.msra.mxu0 %v1553
  %1588 = vmatpush.bf16.msra.mxu0 %v1552
  %1589 = vmatpush.bf16.msra.mxu0 %v1551
  %1590 = vmatpush.bf16.msra.mxu0 %v1550
  %1591 = vmatpush.bf16.msra.mxu0 %v1549
  %1592 = vmatpush.bf16.msra.mxu0 %v1548
  %1593 = vmatmul.bf16.gmra.mxu0 %v1439
  %v1594 = vpop.f32.mrf.mxu0
  %v1595 = vadd.f32 %v1582, %v1594
  %v1596 = vpop.f32.mrf.mxu0
  %1597 = vdwg.mxu0
  %v1598 = vtanh.pop %v1595
  %1599 = vst [vmem:[#allocation2] sm:$0xff] %v1438
  %1600 = vst [vmem:[%s110] sm:$0xff] %v1598
  %s1601 = scalar_lea.vmem %s4, 40
  %1602 = vst [vmem:[%s1601] sm:$0xff] %v1598
  %v1603 = vld [vmem:[#allocation2] sm:$0xff]
  %v1604 = vld [vmem:[%s110] sm:$0xff]
  %s1605 = scalar_lea.vmem %s0, 28
  %v1606 = vld [vmem:[%s1605] sm:$0xf]
  %v1607 = vunpack.c.l.bf16 %v1606
  %v1608 = vpack.c.bf16 %v1603, %v1603
  %v1609 = vld [vmem:[%s2] sm:$0xf]
  %v1610 = vld [vmem:[%s2 + $0x4] sm:$0xf]
  %v1611 = vld [vmem:[%s2 + $0x8] sm:$0xf]
  %v1612 = vld [vmem:[%s2 + $0xc] sm:$0xf]
  %v1613 = vld [vmem:[%s2 + $0x10] sm:$0xf]
  %v1614 = vld [vmem:[%s2 + $0x14] sm:$0xf]
  %v1615 = vld [vmem:[%s2 + $0x18] sm:$0xf]
  %v1616 = vld [vmem:[%s2 + $0x1c] sm:$0xf]
  %v1617 = vld [vmem:[%s2 + $0x20] sm:$0xf]
  %v1618 = vld [vmem:[%s2 + $0x24] sm:$0xf]
  %v1619 = vld [vmem:[%s2 + $0x28] sm:$0xf]
  %v1620 = vld [vmem:[%s2 + $0x2c] sm:$0xf]
  %v1621 = vld [vmem:[%s2 + $0x30] sm:$0xf]
  %v1622 = vld [vmem:[%s2 + $0x34] sm:$0xf]
  %v1623 = vld [vmem:[%s2 + $0x38] sm:$0xf]
  %v1624 = vld [vmem:[%s2 + $0x3c] sm:$0xf]
  %v1641 = vunpack.c.l.b16 %v1609
  %v1642 = vunpack.c.l.b16 %v1610
  %v1643 = vunpack.c.l.b16 %v1611
  %v1644 = vunpack.c.l.b16 %v1612
  %v1645 = vunpack.c.l.b16 %v1613
  %v1646 = vunpack.c.l.b16 %v1614
  %v1647 = vunpack.c.l.b16 %v1615
  %v1648 = vunpack.c.l.b16 %v1616
  %v1649 = vunpack.c.l.b16 %v1617
  %v1650 = vunpack.c.l.b16 %v1618
  %v1651 = vunpack.c.l.b16 %v1619
  %v1652 = vunpack.c.l.b16 %v1620
  %v1653 = vunpack.c.l.b16 %v1621
  %v1654 = vunpack.c.l.b16 %v1622
  %v1655 = vunpack.c.l.b16 %v1623
  %v1656 = vunpack.c.l.b16 %v1624
  %v1657 = vpack.c.b16 %v1642, %v1641
  %v1658 = vpack.c.b16 %v1644, %v1643
  %v1659 = vpack.c.b16 %v1646, %v1645
  %v1660 = vpack.c.b16 %v1648, %v1647
  %v1661 = vpack.c.b16 %v1650, %v1649
  %v1662 = vpack.c.b16 %v1652, %v1651
  %v1663 = vpack.c.b16 %v1654, %v1653
  %v1664 = vpack.c.b16 %v1656, %v1655
  %1673 = vmatpush.bf16.msra.mxu0 %v1664
  %1674 = vmatpush.bf16.msra.mxu0 %v1663
  %1675 = vmatpush.bf16.msra.mxu0 %v1662
  %1676 = vmatpush.bf16.msra.mxu0 %v1661
  %1677 = vmatpush.bf16.msra.mxu0 %v1660
  %1678 = vmatpush.bf16.msra.mxu0 %v1659
  %1679 = vmatpush.bf16.msra.mxu0 %v1658
  %1680 = vmatpush.bf16.msra.mxu0 %v1657
  %1681 = vmatmul.bf16.gmra.mxu0 %v1608
  %v1682 = vpop.f32.mrf.mxu0
  %v1683 = vadd.f32 0.0, %v1682
  %v1684 = vpop.f32.mrf.mxu0
  %1685 = vdwg.mxu0
  %v1686 = vadd.f32 %v1607, %v1683
  %v1687 = vtanh.pop %v1686
  %v1688 = vpack.c.bf16 %v1604, %v1604
  %v1689 = vld [vmem:[%s1] sm:$0xf]
  %v1690 = vld [vmem:[%s1 + $0x4] sm:$0xf]
  %v1691 = vld [vmem:[%s1 + $0x8] sm:$0xf]
  %v1692 = vld [vmem:[%s1 + $0xc] sm:$0xf]
  %v1693 = vld [vmem:[%s1 + $0x10] sm:$0xf]
  %v1694 = vld [vmem:[%s1 + $0x14] sm:$0xf]
  %v1695 = vld [vmem:[%s1 + $0x18] sm:$0xf]
  %v1696 = vld [vmem:[%s1 + $0x1c] sm:$0xf]
  %v1697 = vld [vmem:[%s1 + $0x20] sm:$0xf]
  %v1698 = vld [vmem:[%s1 + $0x24] sm:$0xf]
  %v1699 = vld [vmem:[%s1 + $0x28] sm:$0xf]
  %v1700 = vld [vmem:[%s1 + $0x2c] sm:$0xf]
  %v1701 = vld [vmem:[%s1 + $0x30] sm:$0xf]
  %v1702 = vld [vmem:[%s1 + $0x34] sm:$0xf]
  %v1703 = vld [vmem:[%s1 + $0x38] sm:$0xf]
  %v1704 = vld [vmem:[%s1 + $0x3c] sm:$0xf]
  %v1705 = vld [vmem:[%s1 + $0x40] sm:$0xf]
  %v1706 = vld [vmem:[%s1 + $0x44] sm:$0xf]
  %v1707 = vld [vmem:[%s1 + $0x48] sm:$0xf]
  %v1708 = vld [vmem:[%s1 + $0x4c] sm:$0xf]
  %v1709 = vld [vmem:[%s1 + $0x50] sm:$0xf]
  %v1710 = vld [vmem:[%s1 + $0x54] sm:$0xf]
  %v1711 = vld [vmem:[%s1 + $0x58] sm:$0xf]
  %v1712 = vld [vmem:[%s1 + $0x5c] sm:$0xf]
  %v1713 = vld [vmem:[%s1 + $0x60] sm:$0xf]
  %v1714 = vld [vmem:[%s1 + $0x64] sm:$0xf]
  %v1715 = vld [vmem:[%s1 + $0x68] sm:$0xf]
  %v1716 = vld [vmem:[%s1 + $0x6c] sm:$0xf]
  %v1717 = vld [vmem:[%s1 + $0x70] sm:$0xf]
  %v1718 = vld [vmem:[%s1 + $0x74] sm:$0xf]
  %v1719 = vld [vmem:[%s1 + $0x78] sm:$0xf]
  %v1720 = vld [vmem:[%s1 + $0x7c] sm:$0xf]
  %v1721 = vld [vmem:[%s3] sm:$0x1]
  %v1723 = vperm.slane %v1721, 0
  %v1757 = vunpack.c.l.b16 %v1689
  %v1758 = vunpack.c.l.b16 %v1690
  %v1759 = vunpack.c.l.b16 %v1691
  %v1760 = vunpack.c.l.b16 %v1692
  %v1761 = vunpack.c.l.b16 %v1693
  %v1762 = vunpack.c.l.b16 %v1694
  %v1763 = vunpack.c.l.b16 %v1695
  %v1764 = vunpack.c.l.b16 %v1696
  %v1765 = vunpack.c.l.b16 %v1697
  %v1766 = vunpack.c.l.b16 %v1698
  %v1767 = vunpack.c.l.b16 %v1699
  %v1768 = vunpack.c.l.b16 %v1700
  %v1769 = vunpack.c.l.b16 %v1701
  %v1770 = vunpack.c.l.b16 %v1702
  %v1771 = vunpack.c.l.b16 %v1703
  %v1772 = vunpack.c.l.b16 %v1704
  %v1773 = vunpack.c.l.b16 %v1705
  %v1774 = vunpack.c.l.b16 %v1706
  %v1775 = vunpack.c.l.b16 %v1707
  %v1776 = vunpack.c.l.b16 %v1708
  %v1777 = vunpack.c.l.b16 %v1709
  %v1778 = vunpack.c.l.b16 %v1710
  %v1779 = vunpack.c.l.b16 %v1711
  %v1780 = vunpack.c.l.b16 %v1712
  %v1781 = vunpack.c.l.b16 %v1713
  %v1782 = vunpack.c.l.b16 %v1714
  %v1783 = vunpack.c.l.b16 %v1715
  %v1784 = vunpack.c.l.b16 %v1716
  %v1785 = vunpack.c.l.b16 %v1717
  %v1786 = vunpack.c.l.b16 %v1718
  %v1787 = vunpack.c.l.b16 %v1719
  %v1788 = vunpack.c.l.b16 %v1720
  %v1789 = vpack.c.b16 %v1758, %v1757
  %v1790 = vpack.c.b16 %v1760, %v1759
  %v1791 = vpack.c.b16 %v1762, %v1761
  %v1792 = vpack.c.b16 %v1764, %v1763
  %v1793 = vpack.c.b16 %v1766, %v1765
  %v1794 = vpack.c.b16 %v1768, %v1767
  %v1795 = vpack.c.b16 %v1770, %v1769
  %v1796 = vpack.c.b16 %v1772, %v1771
  %v1797 = vpack.c.b16 %v1774, %v1773
  %v1798 = vpack.c.b16 %v1776, %v1775
  %v1799 = vpack.c.b16 %v1778, %v1777
  %v1800 = vpack.c.b16 %v1780, %v1779
  %v1801 = vpack.c.b16 %v1782, %v1781
  %v1802 = vpack.c.b16 %v1784, %v1783
  %v1803 = vpack.c.b16 %v1786, %v1785
  %v1804 = vpack.c.b16 %v1788, %v1787
  %1821 = vmatpush.bf16.msra.mxu0 %v1796
  %1822 = vmatpush.bf16.msra.mxu0 %v1795
  %1823 = vmatpush.bf16.msra.mxu0 %v1794
  %1824 = vmatpush.bf16.msra.mxu0 %v1793
  %1825 = vmatpush.bf16.msra.mxu0 %v1792
  %1826 = vmatpush.bf16.msra.mxu0 %v1791
  %1827 = vmatpush.bf16.msra.mxu0 %v1790
  %1828 = vmatpush.bf16.msra.mxu0 %v1789
  %1829 = vmatmul.bf16.gmra.mxu0 %v1608
  %v1830 = vpop.f32.mrf.mxu0
  %v1831 = vadd.f32 %v1723, %v1830
  %v1832 = vpop.f32.mrf.mxu0
  %1833 = vdwg.mxu0
  %1834 = vmatpush.bf16.msra.mxu0 %v1804
  %1835 = vmatpush.bf16.msra.mxu0 %v1803
  %1836 = vmatpush.bf16.msra.mxu0 %v1802
  %1837 = vmatpush.bf16.msra.mxu0 %v1801
  %1838 = vmatpush.bf16.msra.mxu0 %v1800
  %1839 = vmatpush.bf16.msra.mxu0 %v1799
  %1840 = vmatpush.bf16.msra.mxu0 %v1798
  %1841 = vmatpush.bf16.msra.mxu0 %v1797
  %1842 = vmatmul.bf16.gmra.mxu0 %v1688
  %v1843 = vpop.f32.mrf.mxu0
  %v1844 = vadd.f32 %v1831, %v1843
  %v1845 = vpop.f32.mrf.mxu0
  %1846 = vdwg.mxu0
  %v1847 = vtanh.pop %v1844
  %1848 = vst [vmem:[#allocation2] sm:$0xff] %v1687
  %1849 = vst [vmem:[%s110] sm:$0xff] %v1847
  %s1850 = scalar_lea.vmem %s4, 48
  %1851 = vst [vmem:[%s1850] sm:$0xff] %v1847
  %v1852 = vld [vmem:[#allocation2] sm:$0xff]
  %v1853 = vld [vmem:[%s110] sm:$0xff]
  %v1854 = vpack.c.bf16 %v1852, %v1852
  %v1855 = vpack.c.bf16 %v1853, %v1853
  %v1856 = vld [vmem:[%s1] sm:$0xf]
  %v1857 = vld [vmem:[%s1 + $0x4] sm:$0xf]
  %v1858 = vld [vmem:[%s1 + $0x8] sm:$0xf]
  %v1859 = vld [vmem:[%s1 + $0xc] sm:$0xf]
  %v1860 = vld [vmem:[%s1 + $0x10] sm:$0xf]
  %v1861 = vld [vmem:[%s1 + $0x14] sm:$0xf]
  %v1862 = vld [vmem:[%s1 + $0x18] sm:$0xf]
  %v1863 = vld [vmem:[%s1 + $0x1c] sm:$0xf]
  %v1864 = vld [vmem:[%s1 + $0x20] sm:$0xf]
  %v1865 = vld [vmem:[%s1 + $0x24] sm:$0xf]
  %v1866 = vld [vmem:[%s1 + $0x28] sm:$0xf]
  %v1867 = vld [vmem:[%s1 + $0x2c] sm:$0xf]
  %v1868 = vld [vmem:[%s1 + $0x30] sm:$0xf]
  %v1869 = vld [vmem:[%s1 + $0x34] sm:$0xf]
  %v1870 = vld [vmem:[%s1 + $0x38] sm:$0xf]
  %v1871 = vld [vmem:[%s1 + $0x3c] sm:$0xf]
  %v1872 = vld [vmem:[%s1 + $0x40] sm:$0xf]
  %v1873 = vld [vmem:[%s1 + $0x44] sm:$0xf]
  %v1874 = vld [vmem:[%s1 + $0x48] sm:$0xf]
  %v1875 = vld [vmem:[%s1 + $0x4c] sm:$0xf]
  %v1876 = vld [vmem:[%s1 + $0x50] sm:$0xf]
  %v1877 = vld [vmem:[%s1 + $0x54] sm:$0xf]
  %v1878 = vld [vmem:[%s1 + $0x58] sm:$0xf]
  %v1879 = vld [vmem:[%s1 + $0x5c] sm:$0xf]
  %v1880 = vld [vmem:[%s1 + $0x60] sm:$0xf]
  %v1881 = vld [vmem:[%s1 + $0x64] sm:$0xf]
  %v1882 = vld [vmem:[%s1 + $0x68] sm:$0xf]
  %v1883 = vld [vmem:[%s1 + $0x6c] sm:$0xf]
  %v1884 = vld [vmem:[%s1 + $0x70] sm:$0xf]
  %v1885 = vld [vmem:[%s1 + $0x74] sm:$0xf]
  %v1886 = vld [vmem:[%s1 + $0x78] sm:$0xf]
  %v1887 = vld [vmem:[%s1 + $0x7c] sm:$0xf]
  %v1888 = vld [vmem:[%s3] sm:$0x1]
  %v1890 = vperm.slane %v1888, 0
  %v1924 = vunpack.c.l.b16 %v1856
  %v1925 = vunpack.c.l.b16 %v1857
  %v1926 = vunpack.c.l.b16 %v1858
  %v1927 = vunpack.c.l.b16 %v1859
  %v1928 = vunpack.c.l.b16 %v1860
  %v1929 = vunpack.c.l.b16 %v1861
  %v1930 = vunpack.c.l.b16 %v1862
  %v1931 = vunpack.c.l.b16 %v1863
  %v1932 = vunpack.c.l.b16 %v1864
  %v1933 = vunpack.c.l.b16 %v1865
  %v1934 = vunpack.c.l.b16 %v1866
  %v1935 = vunpack.c.l.b16 %v1867
  %v1936 = vunpack.c.l.b16 %v1868
  %v1937 = vunpack.c.l.b16 %v1869
  %v1938 = vunpack.c.l.b16 %v1870
  %v1939 = vunpack.c.l.b16 %v1871
  %v1940 = vunpack.c.l.b16 %v1872
  %v1941 = vunpack.c.l.b16 %v1873
  %v1942 = vunpack.c.l.b16 %v1874
  %v1943 = vunpack.c.l.b16 %v1875
  %v1944 = vunpack.c.l.b16 %v1876
  %v1945 = vunpack.c.l.b16 %v1877
  %v1946 = vunpack.c.l.b16 %v1878
  %v1947 = vunpack.c.l.b16 %v1879
  %v1948 = vunpack.c.l.b16 %v1880
  %v1949 = vunpack.c.l.b16 %v1881
  %v1950 = vunpack.c.l.b16 %v1882
  %v1951 = vunpack.c.l.b16 %v1883
  %v1952 = vunpack.c.l.b16 %v1884
  %v1953 = vunpack.c.l.b16 %v1885
  %v1954 = vunpack.c.l.b16 %v1886
  %v1955 = vunpack.c.l.b16 %v1887
  %v1956 = vpack.c.b16 %v1925, %v1924
  %v1957 = vpack.c.b16 %v1927, %v1926
  %v1958 = vpack.c.b16 %v1929, %v1928
  %v1959 = vpack.c.b16 %v1931, %v1930
  %v1960 = vpack.c.b16 %v1933, %v1932
  %v1961 = vpack.c.b16 %v1935, %v1934
  %v1962 = vpack.c.b16 %v1937, %v1936
  %v1963 = vpack.c.b16 %v1939, %v1938
  %v1964 = vpack.c.b16 %v1941, %v1940
  %v1965 = vpack.c.b16 %v1943, %v1942
  %v1966 = vpack.c.b16 %v1945, %v1944
  %v1967 = vpack.c.b16 %v1947, %v1946
  %v1968 = vpack.c.b16 %v1949, %v1948
  %v1969 = vpack.c.b16 %v1951, %v1950
  %v1970 = vpack.c.b16 %v1953, %v1952
  %v1971 = vpack.c.b16 %v1955, %v1954
  %1988 = vmatpush.bf16.msra.mxu0 %v1963
  %1989 = vmatpush.bf16.msra.mxu0 %v1962
  %1990 = vmatpush.bf16.msra.mxu0 %v1961
  %1991 = vmatpush.bf16.msra.mxu0 %v1960
  %1992 = vmatpush.bf16.msra.mxu0 %v1959
  %1993 = vmatpush.bf16.msra.mxu0 %v1958
  %1994 = vmatpush.bf16.msra.mxu0 %v1957
  %1995 = vmatpush.bf16.msra.mxu0 %v1956
  %1996 = vmatmul.bf16.gmra.mxu0 %v1854
  %v1997 = vpop.f32.mrf.mxu0
  %v1998 = vadd.f32 %v1890, %v1997
  %v1999 = vpop.f32.mrf.mxu0
  %2000 = vdwg.mxu0
  %2001 = vmatpush.bf16.msra.mxu0 %v1971
  %2002 = vmatpush.bf16.msra.mxu0 %v1970
  %2003 = vmatpush.bf16.msra.mxu0 %v1969
  %2004 = vmatpush.bf16.msra.mxu0 %v1968
  %2005 = vmatpush.bf16.msra.mxu0 %v1967
  %2006 = vmatpush.bf16.msra.mxu0 %v1966
  %2007 = vmatpush.bf16.msra.mxu0 %v1965
  %2008 = vmatpush.bf16.msra.mxu0 %v1964
  %2009 = vmatmul.bf16.gmra.mxu0 %v1855
  %v2010 = vpop.f32.mrf.mxu0
  %v2011 = vadd.f32 %v1998, %v2010
  %v2012 = vpop.f32.mrf.mxu0
  %2013 = vdwg.mxu0
  %v2014 = vtanh.pop %v2011
  %2015 = vst [vmem:[%s110] sm:$0xff] %v2014
  %s2016 = scalar_lea.vmem %s4, 56
  %2017 = vst [vmem:[%s2016] sm:$0xff] %v2014
  // Predicated region
  $region22: #{encoder_forward.1} parent=0 // pred_check
    %p2018 = pneg %p19
  $region23: #{encoder_forward.1} parent=0 // pred_check_branch
    %2020 = sbr.rel (%p2018) target = $region25
  $region24: #{encoder_forward.1} parent=0 // pred_region
    %v2021 = vld [vmem:[#allocation2] sm:$0xff]
    %v2022 = vld [vmem:[#allocation2 + $0x8] sm:$0xff]
    %2023 = vst [vmem:[%s5] sm:$0xff] %v2021
    %2024 = vst [vmem:[%s5 + $0x8] sm:$0xff] %v2022
  $region25: #{encoder_forward.1} parent=0 // pred_fallthru
    _
  // Predicated region
  $region26: #{encoder_forward.1} parent=0 // pred_check
    _
  $region27: #{encoder_forward.1} parent=0 // pred_check_branch
    %2026 = sbr.rel (0) target = $region29
  $region28: #{encoder_forward.1} parent=0 // pred_region
    _
  $region29: #{encoder_forward.1} parent=0 // pred_fallthru
    _
  // Predicated region
  $region30: #{encoder_forward.1} parent=0 // pred_check
    _
  $region31: #{encoder_forward.1} parent=0 // pred_check_branch
    %2028 = sbr.rel (0) target = $region33
  $region32: #{encoder_forward.1} parent=0 // pred_region
    _
  $region33: #{encoder_forward.1} parent=0 // pred_fallthru
    _
  // Predicated region
  $region34: #{encoder_forward.1} parent=0 // pred_check
    _
  $region35: #{encoder_forward.1} parent=0 // pred_check_branch
    %2030 = sbr.rel (0) target = $region37
  $region36: #{encoder_forward.1} parent=0 // pred_region
    _
  $region37: #{encoder_forward.1} parent=0 // pred_fallthru
    _
  // Predicated region
  $region38: #{encoder_forward.1} parent=0 // pred_check
    _
  $region39: #{encoder_forward.1} parent=0 // pred_check_branch
    %2032 = sbr.rel (0) target = $region41
  $region40: #{encoder_forward.1} parent=0 // pred_region
    _
  $region41: #{encoder_forward.1} parent=0 // pred_fallthru
    _

</llo_original>
